<compile_context>
chip_gen: v7x
topology: tpu7x:2x2x1
jax: 0.10.0
libtpu: 0.0.40
codegen_flags: <defaults>
</compile_context>

<pallas_src>
import functools
import math

import jax
import jax.numpy as jnp
import numpy as np
from jax.experimental import pallas as pl
from jax.experimental.pallas import tpu as pltpu


# ---------------------------------------------------------------------------
# Pallas kernel: encoder forward for one row tile (TM rows of B*K) per step.
# ---------------------------------------------------------------------------
def encoder_kernel(
    x_ref,
    wqkv_ref, bqkv_ref, wo_ref, bo_ref,
    w1_ref, b1_ref, w2_ref, b2_ref,
    ln1w_ref, ln1b_ref, ln2w_ref, ln2b_ref,
    out_ref,
    *, h, q, v, chunk_size, pack,
):
    x = x_ref[...].astype(jnp.float32)              # (TM, d_model)
    tm, d_model = x.shape
    n_chunk = tm // chunk_size
    qh = q * h

    def layer_norm(inp, w_ref, b_ref, eps=1e-5):
        mu = jnp.mean(inp, axis=-1, keepdims=True)
        var = jnp.mean((inp - mu) ** 2, axis=-1, keepdims=True)
        return (inp - mu) * jax.lax.rsqrt(var + eps) * w_ref[0] + b_ref[0]

    # --- fused Q|K|V projection (scale pre-folded into Q cols), bf16 MXU ----
    qkv = (
        jnp.dot(x.astype(jnp.bfloat16), wqkv_ref[...],
                preferred_element_type=jnp.float32)
        + bqkv_ref[0]
    )                                               # (TM, 2*q*h + v*h), f32

    # --- chunked multi-head attention, batched over chunks -----------------
    heads = []
    for i in range(h):                              # h is small and static
        q_i = qkv[:, i * q:(i + 1) * q].reshape(n_chunk, chunk_size, q)
        k_i = qkv[:, qh + i * q: qh + (i + 1) * q].reshape(
            n_chunk, chunk_size, q)
        v_i = qkv[:, 2 * qh + i * v: 2 * qh + (i + 1) * v].reshape(
            n_chunk, chunk_size, v)

        s = jnp.einsum("cik,cjk->cij", q_i, k_i,
                       preferred_element_type=jnp.float32)
        s = s - jnp.max(s, axis=-1, keepdims=True)
        p = jnp.exp(s)
        p = p / jnp.sum(p, axis=-1, keepdims=True)  # exact softmax normalize
        head = jnp.einsum("cij,cjd->cid", p, v_i,
                          preferred_element_type=jnp.float32)
        heads.append(head.reshape(tm, v))

    # concat(heads) @ Wo as one matmul (single MXU dispatch, K = h*v)
    concat = jnp.concatenate(heads, axis=-1)        # (TM, h*v), f32
    attn = (
        jnp.dot(concat.astype(jnp.bfloat16), wo_ref[...],
                preferred_element_type=jnp.float32)
        + bo_ref[0]
    )

    # residual + LayerNorm1 (dropout = identity in eval mode)
    y = layer_norm(attn + x, ln1w_ref, ln1b_ref)

    # --- position-wise feed forward (bf16 operands, f32 accumulation) -------
    hdn = jnp.maximum(
        jnp.dot(y.astype(jnp.bfloat16), w1_ref[...],
                preferred_element_type=jnp.float32)
        + b1_ref[0],
        0.0,
    )
    ffn = (
        jnp.dot(hdn.astype(jnp.bfloat16), w2_ref[...],
                preferred_element_type=jnp.float32)
        + b2_ref[0]
    )

    # residual + LayerNorm2
    z = layer_norm(ffn + y, ln2w_ref, ln2b_ref)

    if pack > 1:
        # Lane-dense store: pack `pack` contiguous row-groups side by side
        # along lanes so the output block is 128-lane dense (unmasked vst and
        # dense VMEM->HBM DMA).  Costs one lane-concat relayout.
        grp = tm // pack
        packed = jnp.concatenate(
            [z[j * grp:(j + 1) * grp] for j in range(pack)], axis=-1)
        out_ref[...] = packed.astype(out_ref.dtype)
    else:
        out_ref[...] = z.astype(out_ref.dtype)


# ---------------------------------------------------------------------------
# Wrapper: weight packing, row tiling, pallas_call
# ---------------------------------------------------------------------------
def _choose_row_tile(M, chunk_size, pack, target=512):
    """Row tile: multiple of lcm(chunk_size, 8*pack); grid >= 2 when possible."""
    def lcm(a, b):
        return a * b // math.gcd(a, b)

    step = lcm(chunk_size, 8 * pack)
    t = max(step, (min(M, target) // step) * step)
    # Prefer at least 2 grid steps so the "parallel" axis can be sharded
    # across v7x's 2 TensorCores (harmless on v5e/v6e).
    if t >= M and M > step:
        t = max(step, (M // (2 * step)) * step)
    return t


def encoder_forward(x, params, *, h, q, v, chunk_size, row_tile=None):
    B, K, d_model = x.shape
    assert K % chunk_size == 0, "K must be a multiple of chunk_size"
    M = B * K

    # lane-dense packing factor for the output (d_model=32 -> pack=4)
    pack = 128 // d_model if (d_model < 128 and 128 % d_model == 0) else 1

    if row_tile is None:
        row_tile = _choose_row_tile(M, chunk_size, pack)
    assert row_tile % chunk_size == 0
    assert row_tile % (8 * pack) == 0

    n_tiles = (M + row_tile - 1) // row_tile
    m_pad = n_tiles * row_tile                       # pad rows = whole chunks

    x2 = x.reshape(M, d_model).astype(jnp.float32)
    if m_pad != M:
        x2 = jnp.pad(x2, ((0, m_pad - M), (0, 0)))

    # Fuse Q|K|V weights; fold 1/sqrt(chunk_size) into the Q columns; cast
    # matmul weights to bf16 (accumulation stays f32 inside the kernel).
    scale = jnp.float32(1.0 / np.sqrt(chunk_size))
    f32 = lambda a: jnp.asarray(a, jnp.float32)
    bf16 = lambda a: jnp.asarray(a, jnp.bfloat16)
    wqkv = bf16(jnp.concatenate(
        [f32(params["wq"]) * scale, f32(params["wk"]), f32(params["wv"])],
        axis=1))
    bqkv = jnp.concatenate(
        [f32(params["bq"]) * scale, f32(params["bk"]), f32(params["bv"])],
        axis=1)

    param_list = [
        wqkv, bqkv,
        bf16(params["wo"]), f32(params["bo"]),
        bf16(params["w1"]), f32(params["b1"]),
        bf16(params["w2"]), f32(params["b2"]),
        f32(params["ln1w"]), f32(params["ln1b"]),
        f32(params["ln2w"]), f32(params["ln2b"]),
    ]

    kernel = functools.partial(
        encoder_kernel, h=h, q=q, v=v, chunk_size=chunk_size, pack=pack)

    d_ff = params["w1"].shape[1]
    flops = int(m_pad) * (
        2 * d_model * (2 * q * h + v * h)      # QKV projection
        + 2 * h * chunk_size * (q + v)         # scores + attn*V per row
        + 2 * (h * v) * d_model                # output projection
        + 4 * d_model * d_ff                   # feed-forward
    )
    transcendentals = int(m_pad) * (h * chunk_size + 2)
    bytes_accessed = (2 * int(m_pad) * d_model * 4
                      + sum(int(np.prod(p.shape)) * p.dtype.itemsize
                            for p in param_list))
    cost = pl.CostEstimate(flops=flops, transcendentals=transcendentals,
                           bytes_accessed=bytes_accessed)

    out_block = (row_tile // pack, pack * d_model)
    out2 = pl.pallas_call(
        kernel,
        out_shape=jax.ShapeDtypeStruct((m_pad // pack, pack * d_model),
                                       x.dtype),
        grid=(n_tiles,),
        in_specs=[pl.BlockSpec((row_tile, d_model), lambda r: (r, 0))]
        + [pl.BlockSpec(p.shape, lambda r: (0, 0)) for p in param_list],
        out_specs=pl.BlockSpec(out_block, lambda r: (r, 0)),
        compiler_params=pltpu.CompilerParams(
            dimension_semantics=("parallel",)),
        cost_estimate=cost,
    )(x2, *param_list)

    if pack > 1:
        grp = row_tile // pack
        out = (out2.reshape(n_tiles, grp, pack, d_model)
                   .transpose(0, 2, 1, 3)
                   .reshape(m_pad, d_model))
    else:
        out = out2
    return out[:M].reshape(B, K, d_model)


# ---------------------------------------------------------------------------
# Pure-JAX reference (mirrors the PyTorch math, f32) for a correctness check.
# ---------------------------------------------------------------------------
def encoder_ref(x, p, *, h, q, v, chunk_size):
    def linear(inp, w, b):
        return inp @ w + b[0]

    def layer_norm(inp, w, b, eps=1e-5):
        mu = jnp.mean(inp, axis=-1, keepdims=True)
        var = jnp.mean((inp - mu) ** 2, axis=-1, keepdims=True)
        return (inp - mu) / jnp.sqrt(var + eps) * w[0] + b[0]

    B, K, _ = x.shape
    n_chunk = K // chunk_size
    Q = linear(x, p["wq"], p["bq"])
    Km = linear(x, p["wk"], p["bk"])
    Vm = linear(x, p["wv"], p["bv"])
    scale = 1.0 / np.sqrt(chunk_size)

    head_outs = []
    for i in range(h):
        Qi, Ki, Vi = (Q[..., i * q:(i + 1) * q],
                      Km[..., i * q:(i + 1) * q],
                      Vm[..., i * v:(i + 1) * v])
        chunk_outs = []
        for c in range(n_chunk):
            sl = slice(c * chunk_size, (c + 1) * chunk_size)
            qc, kc, vc = Qi[:, sl], Ki[:, sl], Vi[:, sl]
            s = jnp.einsum("btd,bsd->bts", qc, kc) * scale
            pw = jax.nn.softmax(s, axis=-1)
            chunk_outs.append(jnp.einsum("bts,bsd->btd", pw, vc))
        head_outs.append(jnp.concatenate(chunk_outs, axis=1))
    attn_heads = jnp.concatenate(head_outs, axis=-1)
    attn = linear(attn_heads, p["wo"], p["bo"])
    y = layer_norm(attn + x, p["ln1w"], p["ln1b"])
    hdn = jax.nn.relu(linear(y, p["w1"], p["b1"]))
    ffn = linear(hdn, p["w2"], p["b2"])
    return layer_norm(ffn + y, p["ln2w"], p["ln2b"])


# ---------------------------------------------------------------------------
def make_params(key, d_model, q, v, h, d_ff):
    ks = jax.random.split(key, 6)

    def lin(k, fan_in, fan_out):
        w = jax.random.normal(k, (fan_in, fan_out), jnp.float32) * (
            1.0 / np.sqrt(fan_in)
        )
        b = jax.random.normal(jax.random.fold_in(k, 1), (1, fan_out),
                              jnp.float32) * 0.05
        return w, b

    wq, bq = lin(ks[0], d_model, q * h)
    wk, bk = lin(ks[1], d_model, q * h)
    wv, bv = lin(ks[2], d_model, v * h)
    wo, bo = lin(ks[3], v * h, d_model)
    w1, b1 = lin(ks[4], d_model, d_ff)
    w2, b2 = lin(ks[5], d_ff, d_model)
    return dict(
        wq=wq, bq=bq, wk=wk, bk=bk, wv=wv, bv=bv, wo=wo, bo=bo,
        w1=w1, b1=b1, w2=w2, b2=b2,
        ln1w=jnp.ones((1, d_model), jnp.float32),
        ln1b=jnp.zeros((1, d_model), jnp.float32),
        ln2w=jnp.ones((1, d_model), jnp.float32),
        ln2b=jnp.zeros((1, d_model), jnp.float32),
    )


if __name__ == "__main__":
    # Small shapes consistent with Encoder(d_model, q, v, h, chunk_mode='chunk')
    B, K, d_model = 2, 32, 32
    q, v, h = 8, 8, 4
    chunk_size = 8          # PyTorch default is 168; reduced for small K
    d_ff = 2048             # PositionwiseFeedForward default d_ff

    key = jax.random.PRNGKey(0)
    kx, kp = jax.random.split(key)
    x = jax.random.normal(kx, (B, K, d_model), jnp.float32)
    params = make_params(kp, d_model, q, v, h, d_ff)

    out = encoder_forward(x, params, h=h, q=q, v=v, chunk_size=chunk_size)
    out = jax.block_until_ready(out)

    ref = encoder_ref(x, params, h=h, q=q, v=v, chunk_size=chunk_size)
    ref = jax.block_until_ready(ref)

    assert out.shape == (B, K, d_model)
    out_np, ref_np = np.asarray(out), np.asarray(ref)
    abs_err = np.abs(out_np - ref_np)
    # Kernel uses bf16 MXU operands with f32 accumulation; the reference is
    # pure f32, so allow bf16-level deviation but require a small mean error.
    assert float(abs_err.mean()) < 2e-2, float(abs_err.mean())
    np.testing.assert_allclose(out_np, ref_np, rtol=1e-1, atol=1e-1)
    print("KERNEL_OK")
</pallas_src>

<mosaic_0001>
module attributes {stable_mosaic.version = 11 : i64} {
  func.func @encoder_kernel(%arg0: i32, %arg1: memref<32x32xf32, #tpu.memory_space<vmem>>, %arg2: memref<32x96xbf16, #tpu.memory_space<vmem>>, %arg3: memref<1x96xf32, #tpu.memory_space<vmem>>, %arg4: memref<32x32xbf16, #tpu.memory_space<vmem>>, %arg5: memref<1x32xf32, #tpu.memory_space<vmem>>, %arg6: memref<32x2048xbf16, #tpu.memory_space<vmem>>, %arg7: memref<1x2048xf32, #tpu.memory_space<vmem>>, %arg8: memref<2048x32xbf16, #tpu.memory_space<vmem>>, %arg9: memref<1x32xf32, #tpu.memory_space<vmem>>, %arg10: memref<1x32xf32, #tpu.memory_space<vmem>>, %arg11: memref<1x32xf32, #tpu.memory_space<vmem>>, %arg12: memref<1x32xf32, #tpu.memory_space<vmem>>, %arg13: memref<1x32xf32, #tpu.memory_space<vmem>>, %arg14: memref<8x128xf32, #tpu.memory_space<vmem>>) attributes {dimension_semantics = [#tpu.dimension_semantics<parallel>], iteration_bounds = array<i64: 2>, scalar_prefetch = 0 : i64, scratch_operands = 0 : i64, tpu.core_type = #tpu.core_type<tc>, window_params = [{transform_indices = @transform_0, window_bounds = array<i64: 32, 32>}, {pipeline_mode = #tpu.pipeline_mode<synchronous>, transform_indices = @transform_1, window_bounds = array<i64: 32, 96>}, {pipeline_mode = #tpu.pipeline_mode<synchronous>, transform_indices = @transform_2, window_bounds = array<i64: 1, 96>}, {pipeline_mode = #tpu.pipeline_mode<synchronous>, transform_indices = @transform_3, window_bounds = array<i64: 32, 32>}, {pipeline_mode = #tpu.pipeline_mode<synchronous>, transform_indices = @transform_4, window_bounds = array<i64: 1, 32>}, {pipeline_mode = #tpu.pipeline_mode<synchronous>, transform_indices = @transform_5, window_bounds = array<i64: 32, 2048>}, {pipeline_mode = #tpu.pipeline_mode<synchronous>, transform_indices = @transform_6, window_bounds = array<i64: 1, 2048>}, {pipeline_mode = #tpu.pipeline_mode<synchronous>, transform_indices = @transform_7, window_bounds = array<i64: 2048, 32>}, {pipeline_mode = #tpu.pipeline_mode<synchronous>, transform_indices = @transform_8, window_bounds = array<i64: 1, 32>}, {pipeline_mode = #tpu.pipeline_mode<synchronous>, transform_indices = @transform_9, window_bounds = array<i64: 1, 32>}, {pipeline_mode = #tpu.pipeline_mode<synchronous>, transform_indices = @transform_10, window_bounds = array<i64: 1, 32>}, {pipeline_mode = #tpu.pipeline_mode<synchronous>, transform_indices = @transform_11, window_bounds = array<i64: 1, 32>}, {pipeline_mode = #tpu.pipeline_mode<synchronous>, transform_indices = @transform_12, window_bounds = array<i64: 1, 32>}, {transform_indices = @transform_13, window_bounds = array<i64: 8, 128>}]} {
    %c0 = arith.constant 0 : index
    %c0_0 = arith.constant 0 : index
    %0 = vector.load %arg1[%c0, %c0_0] : memref<32x32xf32, #tpu.memory_space<vmem>>, vector<32x32xf32>
    %1 = arith.truncf %0 : vector<32x32xf32> to vector<32x32xbf16>
    %c0_1 = arith.constant 0 : index
    %c0_2 = arith.constant 0 : index
    %2 = vector.load %arg2[%c0_1, %c0_2] : memref<32x96xbf16, #tpu.memory_space<vmem>>, vector<32x96xbf16>
    %cst = arith.constant dense<0.000000e+00> : vector<32x96xf32>
    %3 = tpu.matmul %1, %2, %cst {dimension_numbers = #tpu.dot_dimension_numbers<[1], [0], [0], [1], [0, 0, 1, 1], [], []>} : vector<32x32xbf16>, vector<32x96xbf16>, vector<32x96xf32> -> vector<32x96xf32>
    %c0_3 = arith.constant 0 : index
    %c0_4 = arith.constant 0 : index
    %4 = vector.load %arg3[%c0_3, %c0_4] : memref<1x96xf32, #tpu.memory_space<vmem>>, vector<1x96xf32>
    %5 = vector.shape_cast %4 : vector<1x96xf32> to vector<96xf32>
    %6 = vector.shape_cast %5 : vector<96xf32> to vector<1x96xf32>
    %7 = vector.broadcast %6 : vector<1x96xf32> to vector<32x96xf32>
    %8 = arith.addf %3, %7 : vector<32x96xf32>
    %9 = vector.extract_strided_slice %8 {offsets = [0, 0], sizes = [32, 8], strides = [1, 1]} : vector<32x96xf32> to vector<32x8xf32>
    %10 = vector.shape_cast %9 : vector<32x8xf32> to vector<4x8x8xf32>
    %11 = vector.extract_strided_slice %8 {offsets = [0, 32], sizes = [32, 8], strides = [1, 1]} : vector<32x96xf32> to vector<32x8xf32>
    %12 = vector.shape_cast %11 : vector<32x8xf32> to vector<4x8x8xf32>
    %13 = vector.extract_strided_slice %8 {offsets = [0, 64], sizes = [32, 8], strides = [1, 1]} : vector<32x96xf32> to vector<32x8xf32>
    %14 = vector.shape_cast %13 : vector<32x8xf32> to vector<4x8x8xf32>
    "tpu.trace_start"() <{level = 10 : i32, message = "cik,cjk->cij"}> : () -> ()
    %cst_5 = arith.constant dense<0.000000e+00> : vector<4x8x8xf32>
    %15 = tpu.matmul %10, %12, %cst_5 {dimension_numbers = #tpu.dot_dimension_numbers<[2], [2], [1], [1], [0, 0, 0, 1, 1, 1], [0], [0]>} : vector<4x8x8xf32>, vector<4x8x8xf32>, vector<4x8x8xf32> -> vector<4x8x8xf32>
    "tpu.trace_stop"() : () -> ()
    %cst_6 = arith.constant dense<0xFF800000> : vector<4x8xf32>
    %16 = vector.multi_reduction <maximumf>, %15, %cst_6 [2] : vector<4x8x8xf32> to vector<4x8xf32>
    %17 = vector.shape_cast %16 : vector<4x8xf32> to vector<4x8x1xf32>
    %18 = vector.broadcast %17 : vector<4x8x1xf32> to vector<4x8x8xf32>
    %19 = arith.subf %15, %18 : vector<4x8x8xf32>
    %20 = math.exp %19 : vector<4x8x8xf32>
    %cst_7 = arith.constant dense<0.000000e+00> : vector<4x8xf32>
    %21 = vector.multi_reduction <add>, %20, %cst_7 [2] : vector<4x8x8xf32> to vector<4x8xf32>
    %22 = vector.shape_cast %21 : vector<4x8xf32> to vector<4x8x1xf32>
    %23 = vector.broadcast %22 : vector<4x8x1xf32> to vector<4x8x8xf32>
    %24 = arith.divf %20, %23 : vector<4x8x8xf32>
    "tpu.trace_start"() <{level = 10 : i32, message = "cij,cjd->cid"}> : () -> ()
    %cst_8 = arith.constant dense<0.000000e+00> : vector<4x8x8xf32>
    %25 = tpu.matmul %24, %14, %cst_8 {dimension_numbers = #tpu.dot_dimension_numbers<[2], [1], [1], [2], [0, 0, 0, 1, 1, 2], [0], [0]>} : vector<4x8x8xf32>, vector<4x8x8xf32>, vector<4x8x8xf32> -> vector<4x8x8xf32>
    "tpu.trace_stop"() : () -> ()
    %26 = vector.shape_cast %25 : vector<4x8x8xf32> to vector<32x8xf32>
    %27 = vector.extract_strided_slice %8 {offsets = [0, 8], sizes = [32, 8], strides = [1, 1]} : vector<32x96xf32> to vector<32x8xf32>
    %28 = vector.shape_cast %27 : vector<32x8xf32> to vector<4x8x8xf32>
    %29 = vector.extract_strided_slice %8 {offsets = [0, 40], sizes = [32, 8], strides = [1, 1]} : vector<32x96xf32> to vector<32x8xf32>
    %30 = vector.shape_cast %29 : vector<32x8xf32> to vector<4x8x8xf32>
    %31 = vector.extract_strided_slice %8 {offsets = [0, 72], sizes = [32, 8], strides = [1, 1]} : vector<32x96xf32> to vector<32x8xf32>
    %32 = vector.shape_cast %31 : vector<32x8xf32> to vector<4x8x8xf32>
    "tpu.trace_start"() <{level = 10 : i32, message = "cik,cjk->cij"}> : () -> ()
    %cst_9 = arith.constant dense<0.000000e+00> : vector<4x8x8xf32>
    %33 = tpu.matmul %28, %30, %cst_9 {dimension_numbers = #tpu.dot_dimension_numbers<[2], [2], [1], [1], [0, 0, 0, 1, 1, 1], [0], [0]>} : vector<4x8x8xf32>, vector<4x8x8xf32>, vector<4x8x8xf32> -> vector<4x8x8xf32>
    "tpu.trace_stop"() : () -> ()
    %cst_10 = arith.constant dense<0xFF800000> : vector<4x8xf32>
    %34 = vector.multi_reduction <maximumf>, %33, %cst_10 [2] : vector<4x8x8xf32> to vector<4x8xf32>
    %35 = vector.shape_cast %34 : vector<4x8xf32> to vector<4x8x1xf32>
    %36 = vector.broadcast %35 : vector<4x8x1xf32> to vector<4x8x8xf32>
    %37 = arith.subf %33, %36 : vector<4x8x8xf32>
    %38 = math.exp %37 : vector<4x8x8xf32>
    %cst_11 = arith.constant dense<0.000000e+00> : vector<4x8xf32>
    %39 = vector.multi_reduction <add>, %38, %cst_11 [2] : vector<4x8x8xf32> to vector<4x8xf32>
    %40 = vector.shape_cast %39 : vector<4x8xf32> to vector<4x8x1xf32>
    %41 = vector.broadcast %40 : vector<4x8x1xf32> to vector<4x8x8xf32>
    %42 = arith.divf %38, %41 : vector<4x8x8xf32>
    "tpu.trace_start"() <{level = 10 : i32, message = "cij,cjd->cid"}> : () -> ()
    %cst_12 = arith.constant dense<0.000000e+00> : vector<4x8x8xf32>
    %43 = tpu.matmul %42, %32, %cst_12 {dimension_numbers = #tpu.dot_dimension_numbers<[2], [1], [1], [2], [0, 0, 0, 1, 1, 2], [0], [0]>} : vector<4x8x8xf32>, vector<4x8x8xf32>, vector<4x8x8xf32> -> vector<4x8x8xf32>
    "tpu.trace_stop"() : () -> ()
    %44 = vector.shape_cast %43 : vector<4x8x8xf32> to vector<32x8xf32>
    %45 = vector.extract_strided_slice %8 {offsets = [0, 16], sizes = [32, 8], strides = [1, 1]} : vector<32x96xf32> to vector<32x8xf32>
    %46 = vector.shape_cast %45 : vector<32x8xf32> to vector<4x8x8xf32>
    %47 = vector.extract_strided_slice %8 {offsets = [0, 48], sizes = [32, 8], strides = [1, 1]} : vector<32x96xf32> to vector<32x8xf32>
    %48 = vector.shape_cast %47 : vector<32x8xf32> to vector<4x8x8xf32>
    %49 = vector.extract_strided_slice %8 {offsets = [0, 80], sizes = [32, 8], strides = [1, 1]} : vector<32x96xf32> to vector<32x8xf32>
    %50 = vector.shape_cast %49 : vector<32x8xf32> to vector<4x8x8xf32>
    "tpu.trace_start"() <{level = 10 : i32, message = "cik,cjk->cij"}> : () -> ()
    %cst_13 = arith.constant dense<0.000000e+00> : vector<4x8x8xf32>
    %51 = tpu.matmul %46, %48, %cst_13 {dimension_numbers = #tpu.dot_dimension_numbers<[2], [2], [1], [1], [0, 0, 0, 1, 1, 1], [0], [0]>} : vector<4x8x8xf32>, vector<4x8x8xf32>, vector<4x8x8xf32> -> vector<4x8x8xf32>
    "tpu.trace_stop"() : () -> ()
    %cst_14 = arith.constant dense<0xFF800000> : vector<4x8xf32>
    %52 = vector.multi_reduction <maximumf>, %51, %cst_14 [2] : vector<4x8x8xf32> to vector<4x8xf32>
    %53 = vector.shape_cast %52 : vector<4x8xf32> to vector<4x8x1xf32>
    %54 = vector.broadcast %53 : vector<4x8x1xf32> to vector<4x8x8xf32>
    %55 = arith.subf %51, %54 : vector<4x8x8xf32>
    %56 = math.exp %55 : vector<4x8x8xf32>
    %cst_15 = arith.constant dense<0.000000e+00> : vector<4x8xf32>
    %57 = vector.multi_reduction <add>, %56, %cst_15 [2] : vector<4x8x8xf32> to vector<4x8xf32>
    %58 = vector.shape_cast %57 : vector<4x8xf32> to vector<4x8x1xf32>
    %59 = vector.broadcast %58 : vector<4x8x1xf32> to vector<4x8x8xf32>
    %60 = arith.divf %56, %59 : vector<4x8x8xf32>
    "tpu.trace_start"() <{level = 10 : i32, message = "cij,cjd->cid"}> : () -> ()
    %cst_16 = arith.constant dense<0.000000e+00> : vector<4x8x8xf32>
    %61 = tpu.matmul %60, %50, %cst_16 {dimension_numbers = #tpu.dot_dimension_numbers<[2], [1], [1], [2], [0, 0, 0, 1, 1, 2], [0], [0]>} : vector<4x8x8xf32>, vector<4x8x8xf32>, vector<4x8x8xf32> -> vector<4x8x8xf32>
    "tpu.trace_stop"() : () -> ()
    %62 = vector.shape_cast %61 : vector<4x8x8xf32> to vector<32x8xf32>
    %63 = vector.extract_strided_slice %8 {offsets = [0, 24], sizes = [32, 8], strides = [1, 1]} : vector<32x96xf32> to vector<32x8xf32>
    %64 = vector.shape_cast %63 : vector<32x8xf32> to vector<4x8x8xf32>
    %65 = vector.extract_strided_slice %8 {offsets = [0, 56], sizes = [32, 8], strides = [1, 1]} : vector<32x96xf32> to vector<32x8xf32>
    %66 = vector.shape_cast %65 : vector<32x8xf32> to vector<4x8x8xf32>
    %67 = vector.extract_strided_slice %8 {offsets = [0, 88], sizes = [32, 8], strides = [1, 1]} : vector<32x96xf32> to vector<32x8xf32>
    %68 = vector.shape_cast %67 : vector<32x8xf32> to vector<4x8x8xf32>
    "tpu.trace_start"() <{level = 10 : i32, message = "cik,cjk->cij"}> : () -> ()
    %cst_17 = arith.constant dense<0.000000e+00> : vector<4x8x8xf32>
    %69 = tpu.matmul %64, %66, %cst_17 {dimension_numbers = #tpu.dot_dimension_numbers<[2], [2], [1], [1], [0, 0, 0, 1, 1, 1], [0], [0]>} : vector<4x8x8xf32>, vector<4x8x8xf32>, vector<4x8x8xf32> -> vector<4x8x8xf32>
    "tpu.trace_stop"() : () -> ()
    %cst_18 = arith.constant dense<0xFF800000> : vector<4x8xf32>
    %70 = vector.multi_reduction <maximumf>, %69, %cst_18 [2] : vector<4x8x8xf32> to vector<4x8xf32>
    %71 = vector.shape_cast %70 : vector<4x8xf32> to vector<4x8x1xf32>
    %72 = vector.broadcast %71 : vector<4x8x1xf32> to vector<4x8x8xf32>
    %73 = arith.subf %69, %72 : vector<4x8x8xf32>
    %74 = math.exp %73 : vector<4x8x8xf32>
    %cst_19 = arith.constant dense<0.000000e+00> : vector<4x8xf32>
    %75 = vector.multi_reduction <add>, %74, %cst_19 [2] : vector<4x8x8xf32> to vector<4x8xf32>
    %76 = vector.shape_cast %75 : vector<4x8xf32> to vector<4x8x1xf32>
    %77 = vector.broadcast %76 : vector<4x8x1xf32> to vector<4x8x8xf32>
    %78 = arith.divf %74, %77 : vector<4x8x8xf32>
    "tpu.trace_start"() <{level = 10 : i32, message = "cij,cjd->cid"}> : () -> ()
    %cst_20 = arith.constant dense<0.000000e+00> : vector<4x8x8xf32>
    %79 = tpu.matmul %78, %68, %cst_20 {dimension_numbers = #tpu.dot_dimension_numbers<[2], [1], [1], [2], [0, 0, 0, 1, 1, 2], [0], [0]>} : vector<4x8x8xf32>, vector<4x8x8xf32>, vector<4x8x8xf32> -> vector<4x8x8xf32>
    "tpu.trace_stop"() : () -> ()
    %80 = vector.shape_cast %79 : vector<4x8x8xf32> to vector<32x8xf32>
    %81 = tpu.concatenate %26, %44, %62, %80 in 1 : vector<32x8xf32>, vector<32x8xf32>, vector<32x8xf32>, vector<32x8xf32> -> vector<32x32xf32>
    %82 = arith.truncf %81 : vector<32x32xf32> to vector<32x32xbf16>
    %c0_21 = arith.constant 0 : index
    %c0_22 = arith.constant 0 : index
    %83 = vector.load %arg4[%c0_21, %c0_22] : memref<32x32xbf16, #tpu.memory_space<vmem>>, vector<32x32xbf16>
    %cst_23 = arith.constant dense<0.000000e+00> : vector<32x32xf32>
    %84 = tpu.matmul %82, %83, %cst_23 {dimension_numbers = #tpu.dot_dimension_numbers<[1], [0], [0], [1], [0, 0, 1, 1], [], []>} : vector<32x32xbf16>, vector<32x32xbf16>, vector<32x32xf32> -> vector<32x32xf32>
    %c0_24 = arith.constant 0 : index
    %c0_25 = arith.constant 0 : index
    %85 = vector.load %arg5[%c0_24, %c0_25] : memref<1x32xf32, #tpu.memory_space<vmem>>, vector<1x32xf32>
    %86 = vector.shape_cast %85 : vector<1x32xf32> to vector<32xf32>
    %87 = vector.shape_cast %86 : vector<32xf32> to vector<1x32xf32>
    %88 = vector.broadcast %87 : vector<1x32xf32> to vector<32x32xf32>
    %89 = arith.addf %84, %88 : vector<32x32xf32>
    %90 = arith.addf %89, %0 : vector<32x32xf32>
    %cst_26 = arith.constant dense<0.000000e+00> : vector<32xf32>
    %91 = vector.multi_reduction <add>, %90, %cst_26 [1] : vector<32x32xf32> to vector<32xf32>
    %92 = vector.shape_cast %91 : vector<32xf32> to vector<32x1xf32>
    %cst_27 = arith.constant 3.200000e+01 : f32
    %93 = vector.broadcast %cst_27 : f32 to vector<32x1xf32>
    %94 = arith.divf %92, %93 : vector<32x1xf32>
    %95 = vector.broadcast %94 : vector<32x1xf32> to vector<32x32xf32>
    %96 = arith.subf %90, %95 : vector<32x32xf32>
    %97 = arith.mulf %96, %96 : vector<32x32xf32>
    %cst_28 = arith.constant dense<0.000000e+00> : vector<32xf32>
    %98 = vector.multi_reduction <add>, %97, %cst_28 [1] : vector<32x32xf32> to vector<32xf32>
    %99 = vector.shape_cast %98 : vector<32xf32> to vector<32x1xf32>
    %cst_29 = arith.constant 3.200000e+01 : f32
    %100 = vector.broadcast %cst_29 : f32 to vector<32x1xf32>
    %101 = arith.divf %99, %100 : vector<32x1xf32>
    %102 = vector.broadcast %94 : vector<32x1xf32> to vector<32x32xf32>
    %103 = arith.subf %90, %102 : vector<32x32xf32>
    %cst_30 = arith.constant 9.99999974E-6 : f32
    %104 = vector.broadcast %cst_30 : f32 to vector<32x1xf32>
    %105 = arith.addf %101, %104 : vector<32x1xf32>
    %106 = math.rsqrt %105 : vector<32x1xf32>
    %107 = vector.broadcast %106 : vector<32x1xf32> to vector<32x32xf32>
    %108 = arith.mulf %103, %107 : vector<32x32xf32>
    %c0_31 = arith.constant 0 : index
    %c0_32 = arith.constant 0 : index
    %109 = vector.load %arg10[%c0_31, %c0_32] : memref<1x32xf32, #tpu.memory_space<vmem>>, vector<1x32xf32>
    %110 = vector.shape_cast %109 : vector<1x32xf32> to vector<32xf32>
    %111 = vector.shape_cast %110 : vector<32xf32> to vector<1x32xf32>
    %112 = vector.broadcast %111 : vector<1x32xf32> to vector<32x32xf32>
    %113 = arith.mulf %108, %112 : vector<32x32xf32>
    %c0_33 = arith.constant 0 : index
    %c0_34 = arith.constant 0 : index
    %114 = vector.load %arg11[%c0_33, %c0_34] : memref<1x32xf32, #tpu.memory_space<vmem>>, vector<1x32xf32>
    %115 = vector.shape_cast %114 : vector<1x32xf32> to vector<32xf32>
    %116 = vector.shape_cast %115 : vector<32xf32> to vector<1x32xf32>
    %117 = vector.broadcast %116 : vector<1x32xf32> to vector<32x32xf32>
    %118 = arith.addf %113, %117 : vector<32x32xf32>
    %119 = arith.truncf %118 : vector<32x32xf32> to vector<32x32xbf16>
    %c0_35 = arith.constant 0 : index
    %c0_36 = arith.constant 0 : index
    %120 = vector.load %arg6[%c0_35, %c0_36] : memref<32x2048xbf16, #tpu.memory_space<vmem>>, vector<32x2048xbf16>
    %cst_37 = arith.constant dense<0.000000e+00> : vector<32x2048xf32>
    %121 = tpu.matmul %119, %120, %cst_37 {dimension_numbers = #tpu.dot_dimension_numbers<[1], [0], [0], [1], [0, 0, 1, 1], [], []>} : vector<32x32xbf16>, vector<32x2048xbf16>, vector<32x2048xf32> -> vector<32x2048xf32>
    %c0_38 = arith.constant 0 : index
    %c0_39 = arith.constant 0 : index
    %122 = vector.load %arg7[%c0_38, %c0_39] : memref<1x2048xf32, #tpu.memory_space<vmem>>, vector<1x2048xf32>
    %123 = vector.shape_cast %122 : vector<1x2048xf32> to vector<2048xf32>
    %124 = vector.shape_cast %123 : vector<2048xf32> to vector<1x2048xf32>
    %125 = vector.broadcast %124 : vector<1x2048xf32> to vector<32x2048xf32>
    %126 = arith.addf %121, %125 : vector<32x2048xf32>
    %cst_40 = arith.constant 0.000000e+00 : f32
    %127 = vector.broadcast %cst_40 : f32 to vector<32x2048xf32>
    %128 = arith.maximumf %126, %127 : vector<32x2048xf32>
    %129 = arith.truncf %128 : vector<32x2048xf32> to vector<32x2048xbf16>
    %c0_41 = arith.constant 0 : index
    %c0_42 = arith.constant 0 : index
    %130 = vector.load %arg8[%c0_41, %c0_42] : memref<2048x32xbf16, #tpu.memory_space<vmem>>, vector<2048x32xbf16>
    %cst_43 = arith.constant dense<0.000000e+00> : vector<32x32xf32>
    %131 = tpu.matmul %129, %130, %cst_43 {dimension_numbers = #tpu.dot_dimension_numbers<[1], [0], [0], [1], [0, 0, 1, 1], [], []>} : vector<32x2048xbf16>, vector<2048x32xbf16>, vector<32x32xf32> -> vector<32x32xf32>
    %c0_44 = arith.constant 0 : index
    %c0_45 = arith.constant 0 : index
    %132 = vector.load %arg9[%c0_44, %c0_45] : memref<1x32xf32, #tpu.memory_space<vmem>>, vector<1x32xf32>
    %133 = vector.shape_cast %132 : vector<1x32xf32> to vector<32xf32>
    %134 = vector.shape_cast %133 : vector<32xf32> to vector<1x32xf32>
    %135 = vector.broadcast %134 : vector<1x32xf32> to vector<32x32xf32>
    %136 = arith.addf %131, %135 : vector<32x32xf32>
    %137 = arith.addf %136, %118 : vector<32x32xf32>
    %cst_46 = arith.constant dense<0.000000e+00> : vector<32xf32>
    %138 = vector.multi_reduction <add>, %137, %cst_46 [1] : vector<32x32xf32> to vector<32xf32>
    %139 = vector.shape_cast %138 : vector<32xf32> to vector<32x1xf32>
    %cst_47 = arith.constant 3.200000e+01 : f32
    %140 = vector.broadcast %cst_47 : f32 to vector<32x1xf32>
    %141 = arith.divf %139, %140 : vector<32x1xf32>
    %142 = vector.broadcast %141 : vector<32x1xf32> to vector<32x32xf32>
    %143 = arith.subf %137, %142 : vector<32x32xf32>
    %144 = arith.mulf %143, %143 : vector<32x32xf32>
    %cst_48 = arith.constant dense<0.000000e+00> : vector<32xf32>
    %145 = vector.multi_reduction <add>, %144, %cst_48 [1] : vector<32x32xf32> to vector<32xf32>
    %146 = vector.shape_cast %145 : vector<32xf32> to vector<32x1xf32>
    %cst_49 = arith.constant 3.200000e+01 : f32
    %147 = vector.broadcast %cst_49 : f32 to vector<32x1xf32>
    %148 = arith.divf %146, %147 : vector<32x1xf32>
    %149 = vector.broadcast %141 : vector<32x1xf32> to vector<32x32xf32>
    %150 = arith.subf %137, %149 : vector<32x32xf32>
    %cst_50 = arith.constant 9.99999974E-6 : f32
    %151 = vector.broadcast %cst_50 : f32 to vector<32x1xf32>
    %152 = arith.addf %148, %151 : vector<32x1xf32>
    %153 = math.rsqrt %152 : vector<32x1xf32>
    %154 = vector.broadcast %153 : vector<32x1xf32> to vector<32x32xf32>
    %155 = arith.mulf %150, %154 : vector<32x32xf32>
    %c0_51 = arith.constant 0 : index
    %c0_52 = arith.constant 0 : index
    %156 = vector.load %arg12[%c0_51, %c0_52] : memref<1x32xf32, #tpu.memory_space<vmem>>, vector<1x32xf32>
    %157 = vector.shape_cast %156 : vector<1x32xf32> to vector<32xf32>
    %158 = vector.shape_cast %157 : vector<32xf32> to vector<1x32xf32>
    %159 = vector.broadcast %158 : vector<1x32xf32> to vector<32x32xf32>
    %160 = arith.mulf %155, %159 : vector<32x32xf32>
    %c0_53 = arith.constant 0 : index
    %c0_54 = arith.constant 0 : index
    %161 = vector.load %arg13[%c0_53, %c0_54] : memref<1x32xf32, #tpu.memory_space<vmem>>, vector<1x32xf32>
    %162 = vector.shape_cast %161 : vector<1x32xf32> to vector<32xf32>
    %163 = vector.shape_cast %162 : vector<32xf32> to vector<1x32xf32>
    %164 = vector.broadcast %163 : vector<1x32xf32> to vector<32x32xf32>
    %165 = arith.addf %160, %164 : vector<32x32xf32>
    %166 = vector.extract_strided_slice %165 {offsets = [0, 0], sizes = [8, 32], strides = [1, 1]} : vector<32x32xf32> to vector<8x32xf32>
    %167 = vector.extract_strided_slice %165 {offsets = [8, 0], sizes = [8, 32], strides = [1, 1]} : vector<32x32xf32> to vector<8x32xf32>
    %168 = vector.extract_strided_slice %165 {offsets = [16, 0], sizes = [8, 32], strides = [1, 1]} : vector<32x32xf32> to vector<8x32xf32>
    %169 = vector.extract_strided_slice %165 {offsets = [24, 0], sizes = [8, 32], strides = [1, 1]} : vector<32x32xf32> to vector<8x32xf32>
    %170 = tpu.concatenate %166, %167, %168, %169 in 1 : vector<8x32xf32>, vector<8x32xf32>, vector<8x32xf32>, vector<8x32xf32> -> vector<8x128xf32>
    %c0_55 = arith.constant 0 : index
    %c0_56 = arith.constant 0 : index
    %171 = vector.load %arg14[%c0_55, %c0_56] : memref<8x128xf32, #tpu.memory_space<vmem>>, vector<8x128xf32>
    tpu.vector_store %arg14[%c0_55, %c0_56], %170 {strides = array<i32>} : memref<8x128xf32, #tpu.memory_space<vmem>>, vector<8x128xf32>,
    return
  }
  func.func @transform_0(%arg0: i32) -> (i32, i32) {
    %c0_i32 = arith.constant 0 : i32
    %c0_i32_0 = arith.constant 0 : i32
    return %arg0, %c0_i32 : i32, i32
  }
  func.func @transform_1(%arg0: i32) -> (i32, i32) {
    %c0_i32 = arith.constant 0 : i32
    %c0_i32_0 = arith.constant 0 : i32
    %c0_i32_1 = arith.constant 0 : i32
    return %c0_i32, %c0_i32_0 : i32, i32
  }
  func.func @transform_2(%arg0: i32) -> (i32, i32) {
    %c0_i32 = arith.constant 0 : i32
    %c0_i32_0 = arith.constant 0 : i32
    %c0_i32_1 = arith.constant 0 : i32
    return %c0_i32, %c0_i32_0 : i32, i32
  }
  func.func @transform_3(%arg0: i32) -> (i32, i32) {
    %c0_i32 = arith.constant 0 : i32
    %c0_i32_0 = arith.constant 0 : i32
    %c0_i32_1 = arith.constant 0 : i32
    return %c0_i32, %c0_i32_0 : i32, i32
  }
  func.func @transform_4(%arg0: i32) -> (i32, i32) {
    %c0_i32 = arith.constant 0 : i32
    %c0_i32_0 = arith.constant 0 : i32
    %c0_i32_1 = arith.constant 0 : i32
    return %c0_i32, %c0_i32_0 : i32, i32
  }
  func.func @transform_5(%arg0: i32) -> (i32, i32) {
    %c0_i32 = arith.constant 0 : i32
    %c0_i32_0 = arith.constant 0 : i32
    %c0_i32_1 = arith.constant 0 : i32
    return %c0_i32, %c0_i32_0 : i32, i32
  }
  func.func @transform_6(%arg0: i32) -> (i32, i32) {
    %c0_i32 = arith.constant 0 : i32
    %c0_i32_0 = arith.constant 0 : i32
    %c0_i32_1 = arith.constant 0 : i32
    return %c0_i32, %c0_i32_0 : i32, i32
  }
  func.func @transform_7(%arg0: i32) -> (i32, i32) {
    %c0_i32 = arith.constant 0 : i32
    %c0_i32_0 = arith.constant 0 : i32
    %c0_i32_1 = arith.constant 0 : i32
    return %c0_i32, %c0_i32_0 : i32, i32
  }
  func.func @transform_8(%arg0: i32) -> (i32, i32) {
    %c0_i32 = arith.constant 0 : i32
    %c0_i32_0 = arith.constant 0 : i32
    %c0_i32_1 = arith.constant 0 : i32
    return %c0_i32, %c0_i32_0 : i32, i32
  }
  func.func @transform_9(%arg0: i32) -> (i32, i32) {
    %c0_i32 = arith.constant 0 : i32
    %c0_i32_0 = arith.constant 0 : i32
    %c0_i32_1 = arith.constant 0 : i32
    return %c0_i32, %c0_i32_0 : i32, i32
  }
  func.func @transform_10(%arg0: i32) -> (i32, i32) {
    %c0_i32 = arith.constant 0 : i32
    %c0_i32_0 = arith.constant 0 : i32
    %c0_i32_1 = arith.constant 0 : i32
    return %c0_i32, %c0_i32_0 : i32, i32
  }
  func.func @transform_11(%arg0: i32) -> (i32, i32) {
    %c0_i32 = arith.constant 0 : i32
    %c0_i32_0 = arith.constant 0 : i32
    %c0_i32_1 = arith.constant 0 : i32
    return %c0_i32, %c0_i32_0 : i32, i32
  }
  func.func @transform_12(%arg0: i32) -> (i32, i32) {
    %c0_i32 = arith.constant 0 : i32
    %c0_i32_0 = arith.constant 0 : i32
    %c0_i32_1 = arith.constant 0 : i32
    return %c0_i32, %c0_i32_0 : i32, i32
  }
  func.func @transform_13(%arg0: i32) -> (i32, i32) {
    %c0_i32 = arith.constant 0 : i32
    %c0_i32_0 = arith.constant 0 : i32
    return %arg0, %c0_i32 : i32, i32
  }
}

</mosaic_0001>

<llo_original>
// kernel: tpu_custom_call.1
$region0: #{tpu_custom_call.1}
  #allocation0 [shape = 'u32[]', space=smem, size = 0x4, offset = 0x4, fixed_abs, tag = 'smem constant byte address 0x4 - core index']
  #allocation1 [shape = 'u32[144,128]{1,0:T(1,128)}', space=vmem, size = 0x12000, scoped, tag = 'internal scratch']
  %s0 = inlined_call_operand.vmem [shape: f32[64,32], index: 0, kind: input, shape index: {}]
  %s1 = inlined_call_operand.vmem [shape: bf16[32,96], index: 1, kind: input, shape index: {}]
  %s2 = inlined_call_operand.vmem [shape: f32[1,96], index: 2, kind: input, shape index: {}]
  %s3 = inlined_call_operand.vmem [shape: bf16[32,32], index: 3, kind: input, shape index: {}]
  %s4 = inlined_call_operand.vmem [shape: f32[1,32], index: 4, kind: input, shape index: {}]
  %s5 = inlined_call_operand.vmem [shape: bf16[32,2048], index: 5, kind: input, shape index: {}]
  %s6 = inlined_call_operand.vmem [shape: f32[1,2048], index: 6, kind: input, shape index: {}]
  %s7 = inlined_call_operand.vmem [shape: bf16[2048,32], index: 7, kind: input, shape index: {}]
  %s8 = inlined_call_operand.vmem [shape: f32[1,32], index: 8, kind: input, shape index: {}]
  %s9 = inlined_call_operand.vmem [shape: f32[1,32], index: 9, kind: input, shape index: {}]
  %s10 = inlined_call_operand.vmem [shape: f32[1,32], index: 10, kind: input, shape index: {}]
  %s11 = inlined_call_operand.vmem [shape: f32[1,32], index: 11, kind: input, shape index: {}]
  %s12 = inlined_call_operand.vmem [shape: f32[1,32], index: 12, kind: input, shape index: {}]
  %s13 = inlined_call_operand.hbm [shape: f32[16,128], index: 13, kind: output, shape index: {}]
  %s14 = sld [smem:[#allocation0]]
  $region85: #{tpu_custom_call.1} parent=0
    _
  %s16 = ssub.s32 1, %s14
  %s17 = scalar_select 0, %s16, %s14
  $region1: #{tpu_custom_call.1} parent=0
    #allocation2 [shape = 'u8[8192]{0}', space=vmem, size = 0x2000, scoped, tag = 'output window, operand 0']
    #allocation3 [shape = 's32[2]{0}', space=sflag, size = 0x8, scoped, tag = 'scoped memory for tpu_custom_call.1']
    %18 = vsyncpa [#allocation3], 0
    %s19 = scalar_lea.sflag [#allocation3], 1
    %20 = vsyncpa %s19, 0
    loop: start=0, step=1, limit=4
    $region2: #{tpu_custom_call.1} parent=1 // loop_pre_header
      _
    $region3: #{tpu_custom_call.1} parent=1 // loop_header
      %s22 = sphi 0, %s26
      %p23 = scmp.ge.s32.totalorder %s22, 4
      %s32 = sphi 0, %s34
      %s35 = sphi 0, %s32
      %s36 = sphi 0, %s35
      %s52 = sphi 0, %s36
      %s56 = sphi 0, %s56
      %s58 = sphi 0, %s56
      %s59 = sphi 0, %s58
      %s73 = sphi 0, %s59
      %s77 = sphi 0, %s77
      %s79 = sphi 0, %s77
      %s80 = sphi 0, %s79
      %s94 = sphi 0, %s80
      %s98 = sphi 0, %s98
      %s100 = sphi 0, %s98
      %s101 = sphi 0, %s100
      %s115 = sphi 0, %s101
      %s119 = sphi 0, %s119
      %s121 = sphi 0, %s119
      %s122 = sphi 0, %s121
      %s136 = sphi 0, %s122
      %s140 = sphi 0, %s140
      %s142 = sphi 0, %s140
      %s143 = sphi 0, %s142
      %s157 = sphi 0, %s143
      %s161 = sphi 0, %s161
      %s163 = sphi 0, %s161
      %s164 = sphi 0, %s163
      %s178 = sphi 0, %s164
      %s182 = sphi 0, %s182
      %s184 = sphi 0, %s182
      %s185 = sphi 0, %s184
      %s199 = sphi 0, %s185
      %s203 = sphi 0, %s203
      %s205 = sphi 0, %s203
      %s206 = sphi 0, %s205
      %s220 = sphi 0, %s206
      %s224 = sphi 0, %s224
      %s226 = sphi 0, %s224
      %s227 = sphi 0, %s226
      %s241 = sphi 0, %s227
      %s245 = sphi 0, %s245
      %s247 = sphi 0, %s245
      %s248 = sphi 0, %s247
      %s262 = sphi 0, %s248
      %s266 = sphi 0, %s266
      %s268 = sphi 0, %s266
      %s269 = sphi 0, %s268
      %s283 = sphi 0, %s269
      %s287 = sphi 0, %s287
      %s289 = sphi 0, %s287
      %s290 = sphi 0, %s289
      %s304 = sphi 0, %s290
      %s310 = sphi 0, %s312
      %s313 = sphi 0, %s310
      %s314 = sphi 0, %s313
      %s330 = sphi 0, %s314
    $region4: #{tpu_custom_call.1} parent=1 // loop_header_branch
      %25 = sbr.rel (%p23) target = $region8
    $region5: #{tpu_custom_call.1} parent=1 // loop_body
      %s27 = ssub.s32 %s22, 1
      %s28 = ssub.s32 %s22, 2
      %s29 = sadd.s32 %s22, 1
      %s30 = ssub.s32 %s22, %s29
      %p31 = scmp.eq.s32.totalorder %s30, 0
      %s33 = sadd.s32 %s32, 1
      %s34 = scalar_select %p31, %s32, %s33
      %p37 = pneg %p31
      %p38 = scmp.eq.s32.totalorder %s22, 1
      %p39 = por %p37, %p38
      %p40 = scmp.ne.s32.totalorder %s32, %s35
      %p41 = scmp.eq.s32.totalorder %s22, 0
      %p42 = por %p40, %p41
      %p43 = scmp.ne.s32.totalorder %s32, %s35
      %p44 = scmp.eq.s32.totalorder %s27, 1
      %p45 = por %p43, %p44
      %p46 = scmp.ne.s32.totalorder %s35, %s36
      %p47 = scmp.eq.s32.totalorder %s27, 0
      %p48 = por %p46, %p47
      %p49 = scmp.ne.s32.totalorder %s35, %s36
      %p50 = scmp.eq.s32.totalorder %s28, 1
      %p51 = por %p49, %p50
      %p53 = scmp.ne.s32.totalorder %s36, %s52
      %p54 = scmp.eq.s32.totalorder %s28, 0
      %p55 = por %p53, %p54
      %s57 = sadd.s32 %s56, 1
      %p60 = scmp.eq.s32.totalorder %s22, 1
      %p61 = scmp.ne.s32.totalorder %s56, %s58
      %p62 = scmp.eq.s32.totalorder %s22, 0
      %p63 = por %p61, %p62
      %p64 = scmp.ne.s32.totalorder %s56, %s58
      %p65 = scmp.eq.s32.totalorder %s27, 1
      %p66 = por %p64, %p65
      %p67 = scmp.ne.s32.totalorder %s58, %s59
      %p68 = scmp.eq.s32.totalorder %s27, 0
      %p69 = por %p67, %p68
      %p70 = scmp.ne.s32.totalorder %s58, %s59
      %p71 = scmp.eq.s32.totalorder %s28, 1
      %p72 = por %p70, %p71
      %p74 = scmp.ne.s32.totalorder %s59, %s73
      %p75 = scmp.eq.s32.totalorder %s28, 0
      %p76 = por %p74, %p75
      %s78 = sadd.s32 %s77, 1
      %p81 = scmp.eq.s32.totalorder %s22, 1
      %p82 = scmp.ne.s32.totalorder %s77, %s79
      %p83 = scmp.eq.s32.totalorder %s22, 0
      %p84 = por %p82, %p83
      %p85 = scmp.ne.s32.totalorder %s77, %s79
      %p86 = scmp.eq.s32.totalorder %s27, 1
      %p87 = por %p85, %p86
      %p88 = scmp.ne.s32.totalorder %s79, %s80
      %p89 = scmp.eq.s32.totalorder %s27, 0
      %p90 = por %p88, %p89
      %p91 = scmp.ne.s32.totalorder %s79, %s80
      %p92 = scmp.eq.s32.totalorder %s28, 1
      %p93 = por %p91, %p92
      %p95 = scmp.ne.s32.totalorder %s80, %s94
      %p96 = scmp.eq.s32.totalorder %s28, 0
      %p97 = por %p95, %p96
      %s99 = sadd.s32 %s98, 1
      %p102 = scmp.eq.s32.totalorder %s22, 1
      %p103 = scmp.ne.s32.totalorder %s98, %s100
      %p104 = scmp.eq.s32.totalorder %s22, 0
      %p105 = por %p103, %p104
      %p106 = scmp.ne.s32.totalorder %s98, %s100
      %p107 = scmp.eq.s32.totalorder %s27, 1
      %p108 = por %p106, %p107
      %p109 = scmp.ne.s32.totalorder %s100, %s101
      %p110 = scmp.eq.s32.totalorder %s27, 0
      %p111 = por %p109, %p110
      %p112 = scmp.ne.s32.totalorder %s100, %s101
      %p113 = scmp.eq.s32.totalorder %s28, 1
      %p114 = por %p112, %p113
      %p116 = scmp.ne.s32.totalorder %s101, %s115
      %p117 = scmp.eq.s32.totalorder %s28, 0
      %p118 = por %p116, %p117
      %s120 = sadd.s32 %s119, 1
      %p123 = scmp.eq.s32.totalorder %s22, 1
      %p124 = scmp.ne.s32.totalorder %s119, %s121
      %p125 = scmp.eq.s32.totalorder %s22, 0
      %p126 = por %p124, %p125
      %p127 = scmp.ne.s32.totalorder %s119, %s121
      %p128 = scmp.eq.s32.totalorder %s27, 1
      %p129 = por %p127, %p128
      %p130 = scmp.ne.s32.totalorder %s121, %s122
      %p131 = scmp.eq.s32.totalorder %s27, 0
      %p132 = por %p130, %p131
      %p133 = scmp.ne.s32.totalorder %s121, %s122
      %p134 = scmp.eq.s32.totalorder %s28, 1
      %p135 = por %p133, %p134
      %p137 = scmp.ne.s32.totalorder %s122, %s136
      %p138 = scmp.eq.s32.totalorder %s28, 0
      %p139 = por %p137, %p138
      %s141 = sadd.s32 %s140, 1
      %p144 = scmp.eq.s32.totalorder %s22, 1
      %p145 = scmp.ne.s32.totalorder %s140, %s142
      %p146 = scmp.eq.s32.totalorder %s22, 0
      %p147 = por %p145, %p146
      %p148 = scmp.ne.s32.totalorder %s140, %s142
      %p149 = scmp.eq.s32.totalorder %s27, 1
      %p150 = por %p148, %p149
      %p151 = scmp.ne.s32.totalorder %s142, %s143
      %p152 = scmp.eq.s32.totalorder %s27, 0
      %p153 = por %p151, %p152
      %p154 = scmp.ne.s32.totalorder %s142, %s143
      %p155 = scmp.eq.s32.totalorder %s28, 1
      %p156 = por %p154, %p155
      %p158 = scmp.ne.s32.totalorder %s143, %s157
      %p159 = scmp.eq.s32.totalorder %s28, 0
      %p160 = por %p158, %p159
      %s162 = sadd.s32 %s161, 1
      %p165 = scmp.eq.s32.totalorder %s22, 1
      %p166 = scmp.ne.s32.totalorder %s161, %s163
      %p167 = scmp.eq.s32.totalorder %s22, 0
      %p168 = por %p166, %p167
      %p169 = scmp.ne.s32.totalorder %s161, %s163
      %p170 = scmp.eq.s32.totalorder %s27, 1
      %p171 = por %p169, %p170
      %p172 = scmp.ne.s32.totalorder %s163, %s164
      %p173 = scmp.eq.s32.totalorder %s27, 0
      %p174 = por %p172, %p173
      %p175 = scmp.ne.s32.totalorder %s163, %s164
      %p176 = scmp.eq.s32.totalorder %s28, 1
      %p177 = por %p175, %p176
      %p179 = scmp.ne.s32.totalorder %s164, %s178
      %p180 = scmp.eq.s32.totalorder %s28, 0
      %p181 = por %p179, %p180
      %s183 = sadd.s32 %s182, 1
      %p186 = scmp.eq.s32.totalorder %s22, 1
      %p187 = scmp.ne.s32.totalorder %s182, %s184
      %p188 = scmp.eq.s32.totalorder %s22, 0
      %p189 = por %p187, %p188
      %p190 = scmp.ne.s32.totalorder %s182, %s184
      %p191 = scmp.eq.s32.totalorder %s27, 1
      %p192 = por %p190, %p191
      %p193 = scmp.ne.s32.totalorder %s184, %s185
      %p194 = scmp.eq.s32.totalorder %s27, 0
      %p195 = por %p193, %p194
      %p196 = scmp.ne.s32.totalorder %s184, %s185
      %p197 = scmp.eq.s32.totalorder %s28, 1
      %p198 = por %p196, %p197
      %p200 = scmp.ne.s32.totalorder %s185, %s199
      %p201 = scmp.eq.s32.totalorder %s28, 0
      %p202 = por %p200, %p201
      %s204 = sadd.s32 %s203, 1
      %p207 = scmp.eq.s32.totalorder %s22, 1
      %p208 = scmp.ne.s32.totalorder %s203, %s205
      %p209 = scmp.eq.s32.totalorder %s22, 0
      %p210 = por %p208, %p209
      %p211 = scmp.ne.s32.totalorder %s203, %s205
      %p212 = scmp.eq.s32.totalorder %s27, 1
      %p213 = por %p211, %p212
      %p214 = scmp.ne.s32.totalorder %s205, %s206
      %p215 = scmp.eq.s32.totalorder %s27, 0
      %p216 = por %p214, %p215
      %p217 = scmp.ne.s32.totalorder %s205, %s206
      %p218 = scmp.eq.s32.totalorder %s28, 1
      %p219 = por %p217, %p218
      %p221 = scmp.ne.s32.totalorder %s206, %s220
      %p222 = scmp.eq.s32.totalorder %s28, 0
      %p223 = por %p221, %p222
      %s225 = sadd.s32 %s224, 1
      %p228 = scmp.eq.s32.totalorder %s22, 1
      %p229 = scmp.ne.s32.totalorder %s224, %s226
      %p230 = scmp.eq.s32.totalorder %s22, 0
      %p231 = por %p229, %p230
      %p232 = scmp.ne.s32.totalorder %s224, %s226
      %p233 = scmp.eq.s32.totalorder %s27, 1
      %p234 = por %p232, %p233
      %p235 = scmp.ne.s32.totalorder %s226, %s227
      %p236 = scmp.eq.s32.totalorder %s27, 0
      %p237 = por %p235, %p236
      %p238 = scmp.ne.s32.totalorder %s226, %s227
      %p239 = scmp.eq.s32.totalorder %s28, 1
      %p240 = por %p238, %p239
      %p242 = scmp.ne.s32.totalorder %s227, %s241
      %p243 = scmp.eq.s32.totalorder %s28, 0
      %p244 = por %p242, %p243
      %s246 = sadd.s32 %s245, 1
      %p249 = scmp.eq.s32.totalorder %s22, 1
      %p250 = scmp.ne.s32.totalorder %s245, %s247
      %p251 = scmp.eq.s32.totalorder %s22, 0
      %p252 = por %p250, %p251
      %p253 = scmp.ne.s32.totalorder %s245, %s247
      %p254 = scmp.eq.s32.totalorder %s27, 1
      %p255 = por %p253, %p254
      %p256 = scmp.ne.s32.totalorder %s247, %s248
      %p257 = scmp.eq.s32.totalorder %s27, 0
      %p258 = por %p256, %p257
      %p259 = scmp.ne.s32.totalorder %s247, %s248
      %p260 = scmp.eq.s32.totalorder %s28, 1
      %p261 = por %p259, %p260
      %p263 = scmp.ne.s32.totalorder %s248, %s262
      %p264 = scmp.eq.s32.totalorder %s28, 0
      %p265 = por %p263, %p264
      %s267 = sadd.s32 %s266, 1
      %p270 = scmp.eq.s32.totalorder %s22, 1
      %p271 = scmp.ne.s32.totalorder %s266, %s268
      %p272 = scmp.eq.s32.totalorder %s22, 0
      %p273 = por %p271, %p272
      %p274 = scmp.ne.s32.totalorder %s266, %s268
      %p275 = scmp.eq.s32.totalorder %s27, 1
      %p276 = por %p274, %p275
      %p277 = scmp.ne.s32.totalorder %s268, %s269
      %p278 = scmp.eq.s32.totalorder %s27, 0
      %p279 = por %p277, %p278
      %p280 = scmp.ne.s32.totalorder %s268, %s269
      %p281 = scmp.eq.s32.totalorder %s28, 1
      %p282 = por %p280, %p281
      %p284 = scmp.ne.s32.totalorder %s269, %s283
      %p285 = scmp.eq.s32.totalorder %s28, 0
      %p286 = por %p284, %p285
      %s288 = sadd.s32 %s287, 1
      %p291 = scmp.eq.s32.totalorder %s22, 1
      %p292 = scmp.ne.s32.totalorder %s287, %s289
      %p293 = scmp.eq.s32.totalorder %s22, 0
      %p294 = por %p292, %p293
      %p295 = scmp.ne.s32.totalorder %s287, %s289
      %p296 = scmp.eq.s32.totalorder %s27, 1
      %p297 = por %p295, %p296
      %p298 = scmp.ne.s32.totalorder %s289, %s290
      %p299 = scmp.eq.s32.totalorder %s27, 0
      %p300 = por %p298, %p299
      %p301 = scmp.ne.s32.totalorder %s289, %s290
      %p302 = scmp.eq.s32.totalorder %s28, 1
      %p303 = por %p301, %p302
      %p305 = scmp.ne.s32.totalorder %s290, %s304
      %p306 = scmp.eq.s32.totalorder %s28, 0
      %p307 = por %p305, %p306
      %s308 = ssub.s32 %s22, %s29
      %p309 = scmp.eq.s32.totalorder %s308, 0
      %s311 = sadd.s32 %s310, 1
      %s312 = scalar_select %p309, %s310, %s311
      %p315 = pneg %p309
      %p316 = scmp.eq.s32.totalorder %s22, 1
      %p317 = por %p315, %p316
      %p318 = scmp.ne.s32.totalorder %s310, %s313
      %p319 = scmp.eq.s32.totalorder %s22, 0
      %p320 = por %p318, %p319
      %p321 = scmp.ne.s32.totalorder %s310, %s313
      %p322 = scmp.eq.s32.totalorder %s27, 1
      %p323 = por %p321, %p322
      %p324 = scmp.ne.s32.totalorder %s313, %s314
      %p325 = scmp.eq.s32.totalorder %s27, 0
      %p326 = por %p324, %p325
      %p327 = scmp.ne.s32.totalorder %s313, %s314
      %p328 = scmp.eq.s32.totalorder %s28, 1
      %p329 = por %p327, %p328
      %p331 = scmp.ne.s32.totalorder %s314, %s330
      %p332 = scmp.eq.s32.totalorder %s28, 0
      %p333 = por %p331, %p332
      %p334 = scmp.le.s32.totalorder 1, %s22
      %p335 = scmp.lt.s32.totalorder %s22, 3
      %p336 = pnand %p334, %p335
      %p337 = pneg %p336
      // Predicated region
      $region9: #{tpu_custom_call.1} parent=5 // pred_check
        _
      $region10: #{tpu_custom_call.1} parent=5 // pred_check_branch
        %339 = sbr.rel (%p336) target = $region12
      $region11: #{tpu_custom_call.1} parent=5 // pred_region
        %s340 = ssub.s32 %s22, 1
        // Predicated region
        $region13: #{tpu_custom_call.1} parent=11 // pred_check
          %p341 = pneg %p69
        $region14: #{tpu_custom_call.1} parent=11 // pred_check_branch
          %343 = sbr.rel (%p341) target = $region16
        $region15: #{tpu_custom_call.1} parent=11 // pred_region
          _
        $region16: #{tpu_custom_call.1} parent=11 // pred_fallthru
          _
        // Predicated region
        $region17: #{tpu_custom_call.1} parent=11 // pred_check
          %p344 = pneg %p90
        $region18: #{tpu_custom_call.1} parent=11 // pred_check_branch
          %346 = sbr.rel (%p344) target = $region20
        $region19: #{tpu_custom_call.1} parent=11 // pred_region
          _
        $region20: #{tpu_custom_call.1} parent=11 // pred_fallthru
          _
        // Predicated region
        $region21: #{tpu_custom_call.1} parent=11 // pred_check
          %p347 = pneg %p111
        $region22: #{tpu_custom_call.1} parent=11 // pred_check_branch
          %349 = sbr.rel (%p347) target = $region24
        $region23: #{tpu_custom_call.1} parent=11 // pred_region
          _
        $region24: #{tpu_custom_call.1} parent=11 // pred_fallthru
          _
        // Predicated region
        $region25: #{tpu_custom_call.1} parent=11 // pred_check
          %p350 = pneg %p132
        $region26: #{tpu_custom_call.1} parent=11 // pred_check_branch
          %352 = sbr.rel (%p350) target = $region28
        $region27: #{tpu_custom_call.1} parent=11 // pred_region
          _
        $region28: #{tpu_custom_call.1} parent=11 // pred_fallthru
          _
        // Predicated region
        $region29: #{tpu_custom_call.1} parent=11 // pred_check
          %p353 = pneg %p153
        $region30: #{tpu_custom_call.1} parent=11 // pred_check_branch
          %355 = sbr.rel (%p353) target = $region32
        $region31: #{tpu_custom_call.1} parent=11 // pred_region
          _
        $region32: #{tpu_custom_call.1} parent=11 // pred_fallthru
          _
        // Predicated region
        $region33: #{tpu_custom_call.1} parent=11 // pred_check
          %p356 = pneg %p174
        $region34: #{tpu_custom_call.1} parent=11 // pred_check_branch
          %358 = sbr.rel (%p356) target = $region36
        $region35: #{tpu_custom_call.1} parent=11 // pred_region
          _
        $region36: #{tpu_custom_call.1} parent=11 // pred_fallthru
          _
        // Predicated region
        $region37: #{tpu_custom_call.1} parent=11 // pred_check
          %p359 = pneg %p195
        $region38: #{tpu_custom_call.1} parent=11 // pred_check_branch
          %361 = sbr.rel (%p359) target = $region40
        $region39: #{tpu_custom_call.1} parent=11 // pred_region
          _
        $region40: #{tpu_custom_call.1} parent=11 // pred_fallthru
          _
        // Predicated region
        $region41: #{tpu_custom_call.1} parent=11 // pred_check
          %p362 = pneg %p216
        $region42: #{tpu_custom_call.1} parent=11 // pred_check_branch
          %364 = sbr.rel (%p362) target = $region44
        $region43: #{tpu_custom_call.1} parent=11 // pred_region
          _
        $region44: #{tpu_custom_call.1} parent=11 // pred_fallthru
          _
        // Predicated region
        $region45: #{tpu_custom_call.1} parent=11 // pred_check
          %p365 = pneg %p237
        $region46: #{tpu_custom_call.1} parent=11 // pred_check_branch
          %367 = sbr.rel (%p365) target = $region48
        $region47: #{tpu_custom_call.1} parent=11 // pred_region
          _
        $region48: #{tpu_custom_call.1} parent=11 // pred_fallthru
          _
        // Predicated region
        $region49: #{tpu_custom_call.1} parent=11 // pred_check
          %p368 = pneg %p258
        $region50: #{tpu_custom_call.1} parent=11 // pred_check_branch
          %370 = sbr.rel (%p368) target = $region52
        $region51: #{tpu_custom_call.1} parent=11 // pred_region
          _
        $region52: #{tpu_custom_call.1} parent=11 // pred_fallthru
          _
        // Predicated region
        $region53: #{tpu_custom_call.1} parent=11 // pred_check
          %p371 = pneg %p279
        $region54: #{tpu_custom_call.1} parent=11 // pred_check_branch
          %373 = sbr.rel (%p371) target = $region56
        $region55: #{tpu_custom_call.1} parent=11 // pred_region
          _
        $region56: #{tpu_custom_call.1} parent=11 // pred_fallthru
          _
        // Predicated region
        $region57: #{tpu_custom_call.1} parent=11 // pred_check
          %p374 = pneg %p300
        $region58: #{tpu_custom_call.1} parent=11 // pred_check_branch
          %376 = sbr.rel (%p374) target = $region60
        $region59: #{tpu_custom_call.1} parent=11 // pred_region
          _
        $region60: #{tpu_custom_call.1} parent=11 // pred_fallthru
          _
      $region12: #{tpu_custom_call.1} parent=5 // pred_fallthru
        _
      %p377 = scmp.lt.s32.totalorder %s22, 2
      // Predicated region
      $region61: #{tpu_custom_call.1} parent=5 // pred_check
        %p378 = pneg %p377
      $region62: #{tpu_custom_call.1} parent=5 // pred_check_branch
        %380 = sbr.rel (%p378) target = $region64
      $region63: #{tpu_custom_call.1} parent=5 // pred_region
        // Predicated region
        $region65: #{tpu_custom_call.1} parent=63 // pred_check
          %p381 = pneg %p42
        $region66: #{tpu_custom_call.1} parent=63 // pred_check_branch
          %383 = sbr.rel (%p381) target = $region68
        $region67: #{tpu_custom_call.1} parent=63 // pred_region
          %s384 = smul.u32 4, %s22
          %p385 = scmp.lt.s32.totalorder %s384, 7
          %s386 = scalar_select %p385, %s384, 7
          %s387 = smul.addr %s386, 8
          %s388 = scalar_lea.vmem %s0, %s387
          %s389 = smul.u32 4, %s22
        $region68: #{tpu_custom_call.1} parent=63 // pred_fallthru
          _
      $region64: #{tpu_custom_call.1} parent=5 // pred_fallthru
        _
      %p390 = scmp.le.s32.totalorder 1, %s22
      %p391 = scmp.lt.s32.totalorder %s22, 3
      %p392 = pnand %p390, %p391
      %p393 = pneg %p392
      // Predicated region
      $region69: #{tpu_custom_call.1} parent=5 // pred_check
        _
      $region70: #{tpu_custom_call.1} parent=5 // pred_check_branch
        %395 = sbr.rel (%p392) target = $region72
      $region71: #{tpu_custom_call.1} parent=5 // pred_region
        %s396 = ssub.s32 %s22, 1
        %s397 = smul.u32 4, %s27
        %p398 = scmp.lt.s32.totalorder %s397, 7
        %s399 = scalar_select %p398, %s397, 7
        %s400 = smul.addr %s399, 8
        %s401 = scalar_lea.vmem %s0, %s400
        %p402 = pneg %p48
        %p403 = pneg %p45
        %p404 = pneg %p69
        %p405 = pneg %p66
        %p406 = pneg %p90
        %p407 = pneg %p87
        %p408 = pneg %p111
        %p409 = pneg %p108
        %p410 = pneg %p132
        %p411 = pneg %p129
        %p412 = pneg %p153
        %p413 = pneg %p150
        %p414 = pneg %p174
        %p415 = pneg %p171
        %p416 = pneg %p195
        %p417 = pneg %p192
        %p418 = pneg %p216
        %p419 = pneg %p213
        %p420 = pneg %p237
        %p421 = pneg %p234
        %p422 = pneg %p258
        %p423 = pneg %p255
        %p424 = pneg %p279
        %p425 = pneg %p276
        %p426 = pneg %p300
        %p427 = pneg %p297
        %p428 = pneg %p326
        %p429 = pneg %p323
        %s430 = sand.u32 %s313, 1
        %s431 = scalar_lea.sflag [#allocation3], %s430
        %s432 = sand.u32 %s313, 1
        %s433 = smul.addr %s432, 8
        %s434 = scalar_lea.vmem [#allocation2], %s433
        %s435 = smul.u32 4, %s27
        %p436 = scmp.lt.s32.totalorder %s435, 7
        %s437 = scalar_select %p436, %s435, 7
        %s438 = smul.addr %s437, 8
        %s439 = scalar_lea.vmem %s0, %s438
        %s440 = smul.u32 4, %s27
        %v442 = vld [vmem:[%s439] sm:$0xff]
        %v443 = vld [vmem:[%s439 + $0x8] sm:$0xff]
        %v444 = vld [vmem:[%s439 + $0x10] sm:$0xff]
        %v445 = vld [vmem:[%s439 + $0x18] sm:$0xff]
        %v446 = vpack.c.bf16 %v443, %v442
        %v447 = vpack.c.bf16 %v445, %v444
        %v448 = vld [vmem:[%s1] sm:$0xf]
        %v449 = vld [vmem:[%s1 + $0x4] sm:$0xf]
        %v450 = vld [vmem:[%s1 + $0x8] sm:$0xf]
        %v451 = vld [vmem:[%s1 + $0xc] sm:$0xf]
        %v452 = vld [vmem:[%s2] sm:$0x1]
        %v454 = vlaneseq
        %v455 = vshrl.u32 %v454, 7
        %v456 = vsub.s32 0, %v455
        %v457 = vrot.slane %v452, %v456
        %v463 = vunpack.c.l.b16 %v448
        %v464 = vunpack.c.l.b16 %v449
        %v465 = vunpack.c.l.b16 %v450
        %v466 = vunpack.c.l.b16 %v451
        %v467 = vpack.c.b16 %v464, %v463
        %v468 = vpack.c.b16 %v466, %v465
        %vm471 = vcmask 261120
        %v473 = vsel %vm471, %v446, 0
        %v476 = vsel %vm471, %v447, 0
        %478 = vmatprep.subr.bf16.mxu0 0
        %479 = vmatpush1.bf16.msra.mxu0 %v467
        %480 = vmatprep.subr.bf16.mxu0 0
        %481 = vmatpush1.bf16.msra.mxu0 %v468
        %482 = vmatprep.subr.bf16.mxu0 0
        %483 = vmatpush1.bf16.msra.mxu0 0
        %484 = vmatprep.subr.bf16.mxu0 0
        %485 = vmatpush1.bf16.msra.mxu0 0
        %486 = vmatprep.subr.bf16.mxu0 0
        %487 = vmatpush1.bf16.msra.mxu0 0
        %488 = vmatprep.subr.bf16.mxu0 0
        %489 = vmatpush1.bf16.msra.mxu0 0
        %490 = vmatprep.subr.bf16.mxu0 0
        %491 = vmatpush1.bf16.msra.mxu0 0
        %492 = vmatprep.subr.bf16.mxu0 0
        %493 = vmatpush1.bf16.msra.mxu0 0
        %494 = vmatprep.subr.bf16.mxu0 0
        %495 = vmatpush1.bf16.msra.mxu0 0
        %496 = vmatprep.subr.bf16.mxu0 0
        %497 = vmatpush1.bf16.msra.mxu0 0
        %498 = vmatprep.subr.bf16.mxu0 0
        %499 = vmatpush1.bf16.msra.mxu0 0
        %500 = vmatprep.subr.bf16.mxu0 0
        %501 = vmatpush1.bf16.msra.mxu0 0
        %502 = vmatprep.subr.bf16.mxu0 0
        %503 = vmatpush1.bf16.msra.mxu0 0
        %504 = vmatprep.subr.bf16.mxu0 0
        %505 = vmatpush1.bf16.msra.mxu0 0
        %506 = vmatprep.subr.bf16.mxu0 0
        %507 = vmatpush1.bf16.msra.mxu0 0
        %508 = vmatprep.subr.bf16.mxu0 0
        %509 = vmatpush1.bf16.msra.mxu0 0
        %510 = vmatprep.mubr.bf16.mxu0 0
        %511 = vmatmul.mubr.bf16.gmra.mrb[0].mxu0 %v473
        %v512 = vpop.f32.mrb[0].mxu0
        %v513 = vadd.f32 %v457, %v512
        %v514 = vpop.f32.mrb[0].mxu0
        %v515 = vpop.f32.mrb[0].mxu0
        %v516 = vadd.f32 %v457, %v515
        %v517 = vpop.f32.mrb[0].mxu0
        %518 = vmatprep.mubr.bf16.mxu0 0
        %519 = vmatmul.mubr.bf16.gmra.mrb[0].mxu0 %v476
        %v520 = vpop.f32.mrb[0].mxu0
        %v521 = vadd.f32 %v457, %v520
        %v522 = vpop.f32.mrb[0].mxu0
        %v523 = vpop.f32.mrb[0].mxu0
        %v524 = vadd.f32 %v457, %v523
        %v525 = vpop.f32.mrb[0].mxu0
        %526 = vdwg.mxu0
        %528 = vrot.lane.b32.xlu0 %v513, 96
        %v529 = vpop.permute.xlu0 %528
        %vm530 = vcmask 64512
        %v531 = vsel %vm530, %v513, 0
        %v533 = vsel %vm530, %v529, 0
        %535 = vmatprep.subr.mxu0 0.0
        %536 = vmatpush1.xpose.msra.mxu0 %v533
        %537 = vmatprep.subr.mxu0 0.0
        %538 = vmatpush1.xpose.msra.mxu0 0.0
        %539 = vmatprep.subr.mxu0 0.0
        %540 = vmatpush1.xpose.msra.mxu0 0.0
        %541 = vmatprep.subr.mxu0 0.0
        %542 = vmatpush1.xpose.msra.mxu0 0.0
        %543 = vmatprep.subr.mxu0 0.0
        %544 = vmatpush1.xpose.msra.mxu0 0.0
        %545 = vmatprep.subr.mxu0 0.0
        %546 = vmatpush1.xpose.msra.mxu0 0.0
        %547 = vmatprep.subr.mxu0 0.0
        %548 = vmatpush1.xpose.msra.mxu0 0.0
        %549 = vmatprep.subr.mxu0 0.0
        %550 = vmatpush1.xpose.msra.mxu0 0.0
        %551 = vmatprep.subr.mxu0 0.0
        %552 = vmatpush1.xpose.msra.mxu0 0.0
        %553 = vmatprep.subr.mxu0 0.0
        %554 = vmatpush1.xpose.msra.mxu0 0.0
        %555 = vmatprep.subr.mxu0 0.0
        %556 = vmatpush1.xpose.msra.mxu0 0.0
        %557 = vmatprep.subr.mxu0 0.0
        %558 = vmatpush1.xpose.msra.mxu0 0.0
        %559 = vmatprep.subr.mxu0 0.0
        %560 = vmatpush1.xpose.msra.mxu0 0.0
        %561 = vmatprep.subr.mxu0 0.0
        %562 = vmatpush1.xpose.msra.mxu0 0.0
        %563 = vmatprep.subr.mxu0 0.0
        %564 = vmatpush1.xpose.msra.mxu0 0.0
        %565 = vmatprep.subr.mxu0 0.0
        %566 = vmatpush1.xpose.msra.mxu0 0.0
        %567 = vmatprep.subr.mxu0 0.0
        %568 = vmatpush1.xpose.msra.mxu0 0.0
        %569 = vmatprep.subr.mxu0 0.0
        %570 = vmatpush1.xpose.msra.mxu0 0.0
        %571 = vmatprep.subr.mxu0 0.0
        %572 = vmatpush1.xpose.msra.mxu0 0.0
        %573 = vmatprep.subr.mxu0 0.0
        %574 = vmatpush1.xpose.msra.mxu0 0.0
        %575 = vmatprep.subr.mxu0 0.0
        %576 = vmatpush1.xpose.msra.mxu0 0.0
        %577 = vmatprep.subr.mxu0 0.0
        %578 = vmatpush1.xpose.msra.mxu0 0.0
        %579 = vmatprep.subr.mxu0 0.0
        %580 = vmatpush1.xpose.msra.mxu0 0.0
        %581 = vmatprep.subr.mxu0 0.0
        %582 = vmatpush1.xpose.msra.mxu0 0.0
        %583 = vmatprep.subr.mxu0 0.0
        %584 = vmatpush1.xpose.msra.mxu0 0.0
        %585 = vmatprep.subr.mxu0 0.0
        %586 = vmatpush1.xpose.msra.mxu0 0.0
        %587 = vmatprep.subr.mxu0 0.0
        %588 = vmatpush1.xpose.msra.mxu0 0.0
        %589 = vmatprep.subr.mxu0 0.0
        %590 = vmatpush1.xpose.msra.mxu0 0.0
        %591 = vmatprep.subr.mxu0 0.0
        %592 = vmatpush1.xpose.msra.mxu0 0.0
        %593 = vmatprep.subr.mxu0 0.0
        %594 = vmatpush1.xpose.msra.mxu0 0.0
        %595 = vmatprep.subr.mxu0 0.0
        %596 = vmatpush1.xpose.msra.mxu0 0.0
        %597 = vmatprep.subr.mxu0 0.0
        %598 = vmatpush1.xpose.msra.mxu0 0.0
        %599 = vmatprep.mubr.f32.mxu0 0.0
        %600 = vmatmul.mubr.f32.gmra.mrb[0].mxu0 %v531
        %v601 = vpop.f32.mrb[0].mxu0
        %v602 = vadd.f32 0.0, %v601
        %v603 = vpop.f32.mrb[0].mxu0
        %604 = vdwg.mxu0
        %606 = vrot.lane.b32.xlu0 %v516, 96
        %v607 = vpop.permute.xlu0 %606
        %v608 = vsel %vm530, %v516, 0
        %v610 = vsel %vm530, %v607, 0
        %612 = vmatprep.subr.mxu0 0.0
        %613 = vmatpush1.xpose.msra.mxu0 %v610
        %614 = vmatprep.subr.mxu0 0.0
        %615 = vmatpush1.xpose.msra.mxu0 0.0
        %616 = vmatprep.subr.mxu0 0.0
        %617 = vmatpush1.xpose.msra.mxu0 0.0
        %618 = vmatprep.subr.mxu0 0.0
        %619 = vmatpush1.xpose.msra.mxu0 0.0
        %620 = vmatprep.subr.mxu0 0.0
        %621 = vmatpush1.xpose.msra.mxu0 0.0
        %622 = vmatprep.subr.mxu0 0.0
        %623 = vmatpush1.xpose.msra.mxu0 0.0
        %624 = vmatprep.subr.mxu0 0.0
        %625 = vmatpush1.xpose.msra.mxu0 0.0
        %626 = vmatprep.subr.mxu0 0.0
        %627 = vmatpush1.xpose.msra.mxu0 0.0
        %628 = vmatprep.subr.mxu0 0.0
        %629 = vmatpush1.xpose.msra.mxu0 0.0
        %630 = vmatprep.subr.mxu0 0.0
        %631 = vmatpush1.xpose.msra.mxu0 0.0
        %632 = vmatprep.subr.mxu0 0.0
        %633 = vmatpush1.xpose.msra.mxu0 0.0
        %634 = vmatprep.subr.mxu0 0.0
        %635 = vmatpush1.xpose.msra.mxu0 0.0
        %636 = vmatprep.subr.mxu0 0.0
        %637 = vmatpush1.xpose.msra.mxu0 0.0
        %638 = vmatprep.subr.mxu0 0.0
        %639 = vmatpush1.xpose.msra.mxu0 0.0
        %640 = vmatprep.subr.mxu0 0.0
        %641 = vmatpush1.xpose.msra.mxu0 0.0
        %642 = vmatprep.subr.mxu0 0.0
        %643 = vmatpush1.xpose.msra.mxu0 0.0
        %644 = vmatprep.subr.mxu0 0.0
        %645 = vmatpush1.xpose.msra.mxu0 0.0
        %646 = vmatprep.subr.mxu0 0.0
        %647 = vmatpush1.xpose.msra.mxu0 0.0
        %648 = vmatprep.subr.mxu0 0.0
        %649 = vmatpush1.xpose.msra.mxu0 0.0
        %650 = vmatprep.subr.mxu0 0.0
        %651 = vmatpush1.xpose.msra.mxu0 0.0
        %652 = vmatprep.subr.mxu0 0.0
        %653 = vmatpush1.xpose.msra.mxu0 0.0
        %654 = vmatprep.subr.mxu0 0.0
        %655 = vmatpush1.xpose.msra.mxu0 0.0
        %656 = vmatprep.subr.mxu0 0.0
        %657 = vmatpush1.xpose.msra.mxu0 0.0
        %658 = vmatprep.subr.mxu0 0.0
        %659 = vmatpush1.xpose.msra.mxu0 0.0
        %660 = vmatprep.subr.mxu0 0.0
        %661 = vmatpush1.xpose.msra.mxu0 0.0
        %662 = vmatprep.subr.mxu0 0.0
        %663 = vmatpush1.xpose.msra.mxu0 0.0
        %664 = vmatprep.subr.mxu0 0.0
        %665 = vmatpush1.xpose.msra.mxu0 0.0
        %666 = vmatprep.subr.mxu0 0.0
        %667 = vmatpush1.xpose.msra.mxu0 0.0
        %668 = vmatprep.subr.mxu0 0.0
        %669 = vmatpush1.xpose.msra.mxu0 0.0
        %670 = vmatprep.subr.mxu0 0.0
        %671 = vmatpush1.xpose.msra.mxu0 0.0
        %672 = vmatprep.subr.mxu0 0.0
        %673 = vmatpush1.xpose.msra.mxu0 0.0
        %674 = vmatprep.subr.mxu0 0.0
        %675 = vmatpush1.xpose.msra.mxu0 0.0
        %676 = vmatprep.mubr.f32.mxu0 0.0
        %677 = vmatmul.mubr.f32.gmra.mrb[0].mxu0 %v608
        %v678 = vpop.f32.mrb[0].mxu0
        %v679 = vadd.f32 0.0, %v678
        %v680 = vpop.f32.mrb[0].mxu0
        %681 = vdwg.mxu0
        %683 = vrot.lane.b32.xlu0 %v521, 96
        %v684 = vpop.permute.xlu0 %683
        %v685 = vsel %vm530, %v521, 0
        %v687 = vsel %vm530, %v684, 0
        %689 = vmatprep.subr.mxu0 0.0
        %690 = vmatpush1.xpose.msra.mxu0 %v687
        %691 = vmatprep.subr.mxu0 0.0
        %692 = vmatpush1.xpose.msra.mxu0 0.0
        %693 = vmatprep.subr.mxu0 0.0
        %694 = vmatpush1.xpose.msra.mxu0 0.0
        %695 = vmatprep.subr.mxu0 0.0
        %696 = vmatpush1.xpose.msra.mxu0 0.0
        %697 = vmatprep.subr.mxu0 0.0
        %698 = vmatpush1.xpose.msra.mxu0 0.0
        %699 = vmatprep.subr.mxu0 0.0
        %700 = vmatpush1.xpose.msra.mxu0 0.0
        %701 = vmatprep.subr.mxu0 0.0
        %702 = vmatpush1.xpose.msra.mxu0 0.0
        %703 = vmatprep.subr.mxu0 0.0
        %704 = vmatpush1.xpose.msra.mxu0 0.0
        %705 = vmatprep.subr.mxu0 0.0
        %706 = vmatpush1.xpose.msra.mxu0 0.0
        %707 = vmatprep.subr.mxu0 0.0
        %708 = vmatpush1.xpose.msra.mxu0 0.0
        %709 = vmatprep.subr.mxu0 0.0
        %710 = vmatpush1.xpose.msra.mxu0 0.0
        %711 = vmatprep.subr.mxu0 0.0
        %712 = vmatpush1.xpose.msra.mxu0 0.0
        %713 = vmatprep.subr.mxu0 0.0
        %714 = vmatpush1.xpose.msra.mxu0 0.0
        %715 = vmatprep.subr.mxu0 0.0
        %716 = vmatpush1.xpose.msra.mxu0 0.0
        %717 = vmatprep.subr.mxu0 0.0
        %718 = vmatpush1.xpose.msra.mxu0 0.0
        %719 = vmatprep.subr.mxu0 0.0
        %720 = vmatpush1.xpose.msra.mxu0 0.0
        %721 = vmatprep.subr.mxu0 0.0
        %722 = vmatpush1.xpose.msra.mxu0 0.0
        %723 = vmatprep.subr.mxu0 0.0
        %724 = vmatpush1.xpose.msra.mxu0 0.0
        %725 = vmatprep.subr.mxu0 0.0
        %726 = vmatpush1.xpose.msra.mxu0 0.0
        %727 = vmatprep.subr.mxu0 0.0
        %728 = vmatpush1.xpose.msra.mxu0 0.0
        %729 = vmatprep.subr.mxu0 0.0
        %730 = vmatpush1.xpose.msra.mxu0 0.0
        %731 = vmatprep.subr.mxu0 0.0
        %732 = vmatpush1.xpose.msra.mxu0 0.0
        %733 = vmatprep.subr.mxu0 0.0
        %734 = vmatpush1.xpose.msra.mxu0 0.0
        %735 = vmatprep.subr.mxu0 0.0
        %736 = vmatpush1.xpose.msra.mxu0 0.0
        %737 = vmatprep.subr.mxu0 0.0
        %738 = vmatpush1.xpose.msra.mxu0 0.0
        %739 = vmatprep.subr.mxu0 0.0
        %740 = vmatpush1.xpose.msra.mxu0 0.0
        %741 = vmatprep.subr.mxu0 0.0
        %742 = vmatpush1.xpose.msra.mxu0 0.0
        %743 = vmatprep.subr.mxu0 0.0
        %744 = vmatpush1.xpose.msra.mxu0 0.0
        %745 = vmatprep.subr.mxu0 0.0
        %746 = vmatpush1.xpose.msra.mxu0 0.0
        %747 = vmatprep.subr.mxu0 0.0
        %748 = vmatpush1.xpose.msra.mxu0 0.0
        %749 = vmatprep.subr.mxu0 0.0
        %750 = vmatpush1.xpose.msra.mxu0 0.0
        %751 = vmatprep.subr.mxu0 0.0
        %752 = vmatpush1.xpose.msra.mxu0 0.0
        %753 = vmatprep.mubr.f32.mxu0 0.0
        %754 = vmatmul.mubr.f32.gmra.mrb[0].mxu0 %v685
        %v755 = vpop.f32.mrb[0].mxu0
        %v756 = vadd.f32 0.0, %v755
        %v757 = vpop.f32.mrb[0].mxu0
        %758 = vdwg.mxu0
        %760 = vrot.lane.b32.xlu0 %v524, 96
        %v761 = vpop.permute.xlu0 %760
        %v762 = vsel %vm530, %v524, 0
        %v764 = vsel %vm530, %v761, 0
        %766 = vmatprep.subr.mxu0 0.0
        %767 = vmatpush1.xpose.msra.mxu0 %v764
        %768 = vmatprep.subr.mxu0 0.0
        %769 = vmatpush1.xpose.msra.mxu0 0.0
        %770 = vmatprep.subr.mxu0 0.0
        %771 = vmatpush1.xpose.msra.mxu0 0.0
        %772 = vmatprep.subr.mxu0 0.0
        %773 = vmatpush1.xpose.msra.mxu0 0.0
        %774 = vmatprep.subr.mxu0 0.0
        %775 = vmatpush1.xpose.msra.mxu0 0.0
        %776 = vmatprep.subr.mxu0 0.0
        %777 = vmatpush1.xpose.msra.mxu0 0.0
        %778 = vmatprep.subr.mxu0 0.0
        %779 = vmatpush1.xpose.msra.mxu0 0.0
        %780 = vmatprep.subr.mxu0 0.0
        %781 = vmatpush1.xpose.msra.mxu0 0.0
        %782 = vmatprep.subr.mxu0 0.0
        %783 = vmatpush1.xpose.msra.mxu0 0.0
        %784 = vmatprep.subr.mxu0 0.0
        %785 = vmatpush1.xpose.msra.mxu0 0.0
        %786 = vmatprep.subr.mxu0 0.0
        %787 = vmatpush1.xpose.msra.mxu0 0.0
        %788 = vmatprep.subr.mxu0 0.0
        %789 = vmatpush1.xpose.msra.mxu0 0.0
        %790 = vmatprep.subr.mxu0 0.0
        %791 = vmatpush1.xpose.msra.mxu0 0.0
        %792 = vmatprep.subr.mxu0 0.0
        %793 = vmatpush1.xpose.msra.mxu0 0.0
        %794 = vmatprep.subr.mxu0 0.0
        %795 = vmatpush1.xpose.msra.mxu0 0.0
        %796 = vmatprep.subr.mxu0 0.0
        %797 = vmatpush1.xpose.msra.mxu0 0.0
        %798 = vmatprep.subr.mxu0 0.0
        %799 = vmatpush1.xpose.msra.mxu0 0.0
        %800 = vmatprep.subr.mxu0 0.0
        %801 = vmatpush1.xpose.msra.mxu0 0.0
        %802 = vmatprep.subr.mxu0 0.0
        %803 = vmatpush1.xpose.msra.mxu0 0.0
        %804 = vmatprep.subr.mxu0 0.0
        %805 = vmatpush1.xpose.msra.mxu0 0.0
        %806 = vmatprep.subr.mxu0 0.0
        %807 = vmatpush1.xpose.msra.mxu0 0.0
        %808 = vmatprep.subr.mxu0 0.0
        %809 = vmatpush1.xpose.msra.mxu0 0.0
        %810 = vmatprep.subr.mxu0 0.0
        %811 = vmatpush1.xpose.msra.mxu0 0.0
        %812 = vmatprep.subr.mxu0 0.0
        %813 = vmatpush1.xpose.msra.mxu0 0.0
        %814 = vmatprep.subr.mxu0 0.0
        %815 = vmatpush1.xpose.msra.mxu0 0.0
        %816 = vmatprep.subr.mxu0 0.0
        %817 = vmatpush1.xpose.msra.mxu0 0.0
        %818 = vmatprep.subr.mxu0 0.0
        %819 = vmatpush1.xpose.msra.mxu0 0.0
        %820 = vmatprep.subr.mxu0 0.0
        %821 = vmatpush1.xpose.msra.mxu0 0.0
        %822 = vmatprep.subr.mxu0 0.0
        %823 = vmatpush1.xpose.msra.mxu0 0.0
        %824 = vmatprep.subr.mxu0 0.0
        %825 = vmatpush1.xpose.msra.mxu0 0.0
        %826 = vmatprep.subr.mxu0 0.0
        %827 = vmatpush1.xpose.msra.mxu0 0.0
        %828 = vmatprep.subr.mxu0 0.0
        %829 = vmatpush1.xpose.msra.mxu0 0.0
        %830 = vmatprep.mubr.f32.mxu0 0.0
        %831 = vmatmul.mubr.f32.gmra.mrb[0].mxu0 %v762
        %v832 = vpop.f32.mrb[0].mxu0
        %v833 = vadd.f32 0.0, %v832
        %v834 = vpop.f32.mrb[0].mxu0
        %835 = vdwg.mxu0
        %v836 = vsel %vm530, %v602, -inf
        %837 = vmax.xlane.f32.xlu0 %v836
        %v838 = vpop.xlane.xlu0 %837
        %v839 = vsel %vm530, %v679, -inf
        %840 = vmax.xlane.f32.xlu0 %v839
        %v841 = vpop.xlane.xlu0 %840
        %v842 = vsel %vm530, %v756, -inf
        %843 = vmax.xlane.f32.xlu0 %v842
        %v844 = vpop.xlane.xlu0 %843
        %v845 = vsel %vm530, %v833, -inf
        %846 = vmax.xlane.f32.xlu0 %v845
        %v847 = vpop.xlane.xlu0 %846
        %v848 = vsub.f32 %v602, %v838
        %v849 = vsub.f32 %v679, %v841
        %v850 = vsub.f32 %v756, %v844
        %v851 = vsub.f32 %v833, %v847
        %v852 = vmul.f32 %v848, 1.442695
        %v853 = vpow.pop %v852
        %v854 = vmul.f32 %v849, 1.442695
        %v855 = vpow.pop %v854
        %v856 = vmul.f32 %v850, 1.442695
        %v857 = vpow.pop %v856
        %v858 = vmul.f32 %v851, 1.442695
        %v859 = vpow.pop %v858
        %v860 = vsel %vm530, %v853, 0.0
        %861 = vadd.xlane.f32.xlu0 %v860
        %v862 = vpop.xlane.xlu0 %861
        %v863 = vsel %vm530, %v855, 0.0
        %864 = vadd.xlane.f32.xlu0 %v863
        %v865 = vpop.xlane.xlu0 %864
        %v866 = vsel %vm530, %v857, 0.0
        %867 = vadd.xlane.f32.xlu0 %v866
        %v868 = vpop.xlane.xlu0 %867
        %v869 = vsel %vm530, %v859, 0.0
        %870 = vadd.xlane.f32.xlu0 %v869
        %v871 = vpop.xlane.xlu0 %870
        %v872 = vrcp.pop %v862
        %v873 = vmul.f32 %v853, %v872
        %v874 = vrcp.pop %v865
        %v875 = vmul.f32 %v855, %v874
        %v876 = vrcp.pop %v868
        %v877 = vmul.f32 %v857, %v876
        %v878 = vrcp.pop %v871
        %v879 = vmul.f32 %v859, %v878
        %880 = vrot.lane.b32.xlu0 %v513, 64
        %v881 = vpop.permute.xlu0 %880
        %v884 = vsel %vm530, %v873, 0
        %886 = vmatprep.subr.mxu0 0.0
        %887 = vmatpush1.msra.mxu0 %v881
        %888 = vmatprep.subr.mxu0 0.0
        %889 = vmatpush1.msra.mxu0 0.0
        %890 = vmatprep.subr.mxu0 0.0
        %891 = vmatpush1.msra.mxu0 0.0
        %892 = vmatprep.subr.mxu0 0.0
        %893 = vmatpush1.msra.mxu0 0.0
        %894 = vmatprep.subr.mxu0 0.0
        %895 = vmatpush1.msra.mxu0 0.0
        %896 = vmatprep.subr.mxu0 0.0
        %897 = vmatpush1.msra.mxu0 0.0
        %898 = vmatprep.subr.mxu0 0.0
        %899 = vmatpush1.msra.mxu0 0.0
        %900 = vmatprep.subr.mxu0 0.0
        %901 = vmatpush1.msra.mxu0 0.0
        %902 = vmatprep.subr.mxu0 0.0
        %903 = vmatpush1.msra.mxu0 0.0
        %904 = vmatprep.subr.mxu0 0.0
        %905 = vmatpush1.msra.mxu0 0.0
        %906 = vmatprep.subr.mxu0 0.0
        %907 = vmatpush1.msra.mxu0 0.0
        %908 = vmatprep.subr.mxu0 0.0
        %909 = vmatpush1.msra.mxu0 0.0
        %910 = vmatprep.subr.mxu0 0.0
        %911 = vmatpush1.msra.mxu0 0.0
        %912 = vmatprep.subr.mxu0 0.0
        %913 = vmatpush1.msra.mxu0 0.0
        %914 = vmatprep.subr.mxu0 0.0
        %915 = vmatpush1.msra.mxu0 0.0
        %916 = vmatprep.subr.mxu0 0.0
        %917 = vmatpush1.msra.mxu0 0.0
        %918 = vmatprep.subr.mxu0 0.0
        %919 = vmatpush1.msra.mxu0 0.0
        %920 = vmatprep.subr.mxu0 0.0
        %921 = vmatpush1.msra.mxu0 0.0
        %922 = vmatprep.subr.mxu0 0.0
        %923 = vmatpush1.msra.mxu0 0.0
        %924 = vmatprep.subr.mxu0 0.0
        %925 = vmatpush1.msra.mxu0 0.0
        %926 = vmatprep.subr.mxu0 0.0
        %927 = vmatpush1.msra.mxu0 0.0
        %928 = vmatprep.subr.mxu0 0.0
        %929 = vmatpush1.msra.mxu0 0.0
        %930 = vmatprep.subr.mxu0 0.0
        %931 = vmatpush1.msra.mxu0 0.0
        %932 = vmatprep.subr.mxu0 0.0
        %933 = vmatpush1.msra.mxu0 0.0
        %934 = vmatprep.subr.mxu0 0.0
        %935 = vmatpush1.msra.mxu0 0.0
        %936 = vmatprep.subr.mxu0 0.0
        %937 = vmatpush1.msra.mxu0 0.0
        %938 = vmatprep.subr.mxu0 0.0
        %939 = vmatpush1.msra.mxu0 0.0
        %940 = vmatprep.subr.mxu0 0.0
        %941 = vmatpush1.msra.mxu0 0.0
        %942 = vmatprep.subr.mxu0 0.0
        %943 = vmatpush1.msra.mxu0 0.0
        %944 = vmatprep.subr.mxu0 0.0
        %945 = vmatpush1.msra.mxu0 0.0
        %946 = vmatprep.subr.mxu0 0.0
        %947 = vmatpush1.msra.mxu0 0.0
        %948 = vmatprep.subr.mxu0 0.0
        %949 = vmatpush1.msra.mxu0 0.0
        %950 = vmatprep.mubr.f32.mxu0 0.0
        %951 = vmatmul.mubr.f32.gmra.mrb[0].mxu0 %v884
        %v952 = vpop.f32.mrb[0].mxu0
        %v953 = vadd.f32 0.0, %v952
        %v954 = vpop.f32.mrb[0].mxu0
        %955 = vdwg.mxu0
        %956 = vrot.lane.b32.xlu0 %v516, 64
        %v957 = vpop.permute.xlu0 %956
        %v960 = vsel %vm530, %v875, 0
        %962 = vmatprep.subr.mxu0 0.0
        %963 = vmatpush1.msra.mxu0 %v957
        %964 = vmatprep.subr.mxu0 0.0
        %965 = vmatpush1.msra.mxu0 0.0
        %966 = vmatprep.subr.mxu0 0.0
        %967 = vmatpush1.msra.mxu0 0.0
        %968 = vmatprep.subr.mxu0 0.0
        %969 = vmatpush1.msra.mxu0 0.0
        %970 = vmatprep.subr.mxu0 0.0
        %971 = vmatpush1.msra.mxu0 0.0
        %972 = vmatprep.subr.mxu0 0.0
        %973 = vmatpush1.msra.mxu0 0.0
        %974 = vmatprep.subr.mxu0 0.0
        %975 = vmatpush1.msra.mxu0 0.0
        %976 = vmatprep.subr.mxu0 0.0
        %977 = vmatpush1.msra.mxu0 0.0
        %978 = vmatprep.subr.mxu0 0.0
        %979 = vmatpush1.msra.mxu0 0.0
        %980 = vmatprep.subr.mxu0 0.0
        %981 = vmatpush1.msra.mxu0 0.0
        %982 = vmatprep.subr.mxu0 0.0
        %983 = vmatpush1.msra.mxu0 0.0
        %984 = vmatprep.subr.mxu0 0.0
        %985 = vmatpush1.msra.mxu0 0.0
        %986 = vmatprep.subr.mxu0 0.0
        %987 = vmatpush1.msra.mxu0 0.0
        %988 = vmatprep.subr.mxu0 0.0
        %989 = vmatpush1.msra.mxu0 0.0
        %990 = vmatprep.subr.mxu0 0.0
        %991 = vmatpush1.msra.mxu0 0.0
        %992 = vmatprep.subr.mxu0 0.0
        %993 = vmatpush1.msra.mxu0 0.0
        %994 = vmatprep.subr.mxu0 0.0
        %995 = vmatpush1.msra.mxu0 0.0
        %996 = vmatprep.subr.mxu0 0.0
        %997 = vmatpush1.msra.mxu0 0.0
        %998 = vmatprep.subr.mxu0 0.0
        %999 = vmatpush1.msra.mxu0 0.0
        %1000 = vmatprep.subr.mxu0 0.0
        %1001 = vmatpush1.msra.mxu0 0.0
        %1002 = vmatprep.subr.mxu0 0.0
        %1003 = vmatpush1.msra.mxu0 0.0
        %1004 = vmatprep.subr.mxu0 0.0
        %1005 = vmatpush1.msra.mxu0 0.0
        %1006 = vmatprep.subr.mxu0 0.0
        %1007 = vmatpush1.msra.mxu0 0.0
        %1008 = vmatprep.subr.mxu0 0.0
        %1009 = vmatpush1.msra.mxu0 0.0
        %1010 = vmatprep.subr.mxu0 0.0
        %1011 = vmatpush1.msra.mxu0 0.0
        %1012 = vmatprep.subr.mxu0 0.0
        %1013 = vmatpush1.msra.mxu0 0.0
        %1014 = vmatprep.subr.mxu0 0.0
        %1015 = vmatpush1.msra.mxu0 0.0
        %1016 = vmatprep.subr.mxu0 0.0
        %1017 = vmatpush1.msra.mxu0 0.0
        %1018 = vmatprep.subr.mxu0 0.0
        %1019 = vmatpush1.msra.mxu0 0.0
        %1020 = vmatprep.subr.mxu0 0.0
        %1021 = vmatpush1.msra.mxu0 0.0
        %1022 = vmatprep.subr.mxu0 0.0
        %1023 = vmatpush1.msra.mxu0 0.0
        %1024 = vmatprep.subr.mxu0 0.0
        %1025 = vmatpush1.msra.mxu0 0.0
        %1026 = vmatprep.mubr.f32.mxu0 0.0
        %1027 = vmatmul.mubr.f32.gmra.mrb[0].mxu0 %v960
        %v1028 = vpop.f32.mrb[0].mxu0
        %v1029 = vadd.f32 0.0, %v1028
        %v1030 = vpop.f32.mrb[0].mxu0
        %1031 = vdwg.mxu0
        %1032 = vrot.lane.b32.xlu0 %v521, 64
        %v1033 = vpop.permute.xlu0 %1032
        %v1036 = vsel %vm530, %v877, 0
        %1038 = vmatprep.subr.mxu0 0.0
        %1039 = vmatpush1.msra.mxu0 %v1033
        %1040 = vmatprep.subr.mxu0 0.0
        %1041 = vmatpush1.msra.mxu0 0.0
        %1042 = vmatprep.subr.mxu0 0.0
        %1043 = vmatpush1.msra.mxu0 0.0
        %1044 = vmatprep.subr.mxu0 0.0
        %1045 = vmatpush1.msra.mxu0 0.0
        %1046 = vmatprep.subr.mxu0 0.0
        %1047 = vmatpush1.msra.mxu0 0.0
        %1048 = vmatprep.subr.mxu0 0.0
        %1049 = vmatpush1.msra.mxu0 0.0
        %1050 = vmatprep.subr.mxu0 0.0
        %1051 = vmatpush1.msra.mxu0 0.0
        %1052 = vmatprep.subr.mxu0 0.0
        %1053 = vmatpush1.msra.mxu0 0.0
        %1054 = vmatprep.subr.mxu0 0.0
        %1055 = vmatpush1.msra.mxu0 0.0
        %1056 = vmatprep.subr.mxu0 0.0
        %1057 = vmatpush1.msra.mxu0 0.0
        %1058 = vmatprep.subr.mxu0 0.0
        %1059 = vmatpush1.msra.mxu0 0.0
        %1060 = vmatprep.subr.mxu0 0.0
        %1061 = vmatpush1.msra.mxu0 0.0
        %1062 = vmatprep.subr.mxu0 0.0
        %1063 = vmatpush1.msra.mxu0 0.0
        %1064 = vmatprep.subr.mxu0 0.0
        %1065 = vmatpush1.msra.mxu0 0.0
        %1066 = vmatprep.subr.mxu0 0.0
        %1067 = vmatpush1.msra.mxu0 0.0
        %1068 = vmatprep.subr.mxu0 0.0
        %1069 = vmatpush1.msra.mxu0 0.0
        %1070 = vmatprep.subr.mxu0 0.0
        %1071 = vmatpush1.msra.mxu0 0.0
        %1072 = vmatprep.subr.mxu0 0.0
        %1073 = vmatpush1.msra.mxu0 0.0
        %1074 = vmatprep.subr.mxu0 0.0
        %1075 = vmatpush1.msra.mxu0 0.0
        %1076 = vmatprep.subr.mxu0 0.0
        %1077 = vmatpush1.msra.mxu0 0.0
        %1078 = vmatprep.subr.mxu0 0.0
        %1079 = vmatpush1.msra.mxu0 0.0
        %1080 = vmatprep.subr.mxu0 0.0
        %1081 = vmatpush1.msra.mxu0 0.0
        %1082 = vmatprep.subr.mxu0 0.0
        %1083 = vmatpush1.msra.mxu0 0.0
        %1084 = vmatprep.subr.mxu0 0.0
        %1085 = vmatpush1.msra.mxu0 0.0
        %1086 = vmatprep.subr.mxu0 0.0
        %1087 = vmatpush1.msra.mxu0 0.0
        %1088 = vmatprep.subr.mxu0 0.0
        %1089 = vmatpush1.msra.mxu0 0.0
        %1090 = vmatprep.subr.mxu0 0.0
        %1091 = vmatpush1.msra.mxu0 0.0
        %1092 = vmatprep.subr.mxu0 0.0
        %1093 = vmatpush1.msra.mxu0 0.0
        %1094 = vmatprep.subr.mxu0 0.0
        %1095 = vmatpush1.msra.mxu0 0.0
        %1096 = vmatprep.subr.mxu0 0.0
        %1097 = vmatpush1.msra.mxu0 0.0
        %1098 = vmatprep.subr.mxu0 0.0
        %1099 = vmatpush1.msra.mxu0 0.0
        %1100 = vmatprep.subr.mxu0 0.0
        %1101 = vmatpush1.msra.mxu0 0.0
        %1102 = vmatprep.mubr.f32.mxu0 0.0
        %1103 = vmatmul.mubr.f32.gmra.mrb[0].mxu0 %v1036
        %v1104 = vpop.f32.mrb[0].mxu0
        %v1105 = vadd.f32 0.0, %v1104
        %v1106 = vpop.f32.mrb[0].mxu0
        %1107 = vdwg.mxu0
        %1108 = vrot.lane.b32.xlu0 %v524, 64
        %v1109 = vpop.permute.xlu0 %1108
        %v1112 = vsel %vm530, %v879, 0
        %1114 = vmatprep.subr.mxu0 0.0
        %1115 = vmatpush1.msra.mxu0 %v1109
        %1116 = vmatprep.subr.mxu0 0.0
        %1117 = vmatpush1.msra.mxu0 0.0
        %1118 = vmatprep.subr.mxu0 0.0
        %1119 = vmatpush1.msra.mxu0 0.0
        %1120 = vmatprep.subr.mxu0 0.0
        %1121 = vmatpush1.msra.mxu0 0.0
        %1122 = vmatprep.subr.mxu0 0.0
        %1123 = vmatpush1.msra.mxu0 0.0
        %1124 = vmatprep.subr.mxu0 0.0
        %1125 = vmatpush1.msra.mxu0 0.0
        %1126 = vmatprep.subr.mxu0 0.0
        %1127 = vmatpush1.msra.mxu0 0.0
        %1128 = vmatprep.subr.mxu0 0.0
        %1129 = vmatpush1.msra.mxu0 0.0
        %1130 = vmatprep.subr.mxu0 0.0
        %1131 = vmatpush1.msra.mxu0 0.0
        %1132 = vmatprep.subr.mxu0 0.0
        %1133 = vmatpush1.msra.mxu0 0.0
        %1134 = vmatprep.subr.mxu0 0.0
        %1135 = vmatpush1.msra.mxu0 0.0
        %1136 = vmatprep.subr.mxu0 0.0
        %1137 = vmatpush1.msra.mxu0 0.0
        %1138 = vmatprep.subr.mxu0 0.0
        %1139 = vmatpush1.msra.mxu0 0.0
        %1140 = vmatprep.subr.mxu0 0.0
        %1141 = vmatpush1.msra.mxu0 0.0
        %1142 = vmatprep.subr.mxu0 0.0
        %1143 = vmatpush1.msra.mxu0 0.0
        %1144 = vmatprep.subr.mxu0 0.0
        %1145 = vmatpush1.msra.mxu0 0.0
        %1146 = vmatprep.subr.mxu0 0.0
        %1147 = vmatpush1.msra.mxu0 0.0
        %1148 = vmatprep.subr.mxu0 0.0
        %1149 = vmatpush1.msra.mxu0 0.0
        %1150 = vmatprep.subr.mxu0 0.0
        %1151 = vmatpush1.msra.mxu0 0.0
        %1152 = vmatprep.subr.mxu0 0.0
        %1153 = vmatpush1.msra.mxu0 0.0
        %1154 = vmatprep.subr.mxu0 0.0
        %1155 = vmatpush1.msra.mxu0 0.0
        %1156 = vmatprep.subr.mxu0 0.0
        %1157 = vmatpush1.msra.mxu0 0.0
        %1158 = vmatprep.subr.mxu0 0.0
        %1159 = vmatpush1.msra.mxu0 0.0
        %1160 = vmatprep.subr.mxu0 0.0
        %1161 = vmatpush1.msra.mxu0 0.0
        %1162 = vmatprep.subr.mxu0 0.0
        %1163 = vmatpush1.msra.mxu0 0.0
        %1164 = vmatprep.subr.mxu0 0.0
        %1165 = vmatpush1.msra.mxu0 0.0
        %1166 = vmatprep.subr.mxu0 0.0
        %1167 = vmatpush1.msra.mxu0 0.0
        %1168 = vmatprep.subr.mxu0 0.0
        %1169 = vmatpush1.msra.mxu0 0.0
        %1170 = vmatprep.subr.mxu0 0.0
        %1171 = vmatpush1.msra.mxu0 0.0
        %1172 = vmatprep.subr.mxu0 0.0
        %1173 = vmatpush1.msra.mxu0 0.0
        %1174 = vmatprep.subr.mxu0 0.0
        %1175 = vmatpush1.msra.mxu0 0.0
        %1176 = vmatprep.subr.mxu0 0.0
        %1177 = vmatpush1.msra.mxu0 0.0
        %1178 = vmatprep.mubr.f32.mxu0 0.0
        %1179 = vmatmul.mubr.f32.gmra.mrb[0].mxu0 %v1112
        %v1180 = vpop.f32.mrb[0].mxu0
        %v1181 = vadd.f32 0.0, %v1180
        %v1182 = vpop.f32.mrb[0].mxu0
        %1183 = vdwg.mxu0
        %1184 = vrot.lane.b32.xlu0 %v513, 120
        %v1185 = vpop.permute.xlu0 %1184
        %1186 = vrot.lane.b32.xlu0 %v513, 88
        %v1187 = vpop.permute.xlu0 %1186
        %v1188 = vsel %vm530, %v1185, 0
        %v1190 = vsel %vm530, %v1187, 0
        %1192 = vmatprep.subr.mxu0 0.0
        %1193 = vmatpush1.xpose.msra.mxu0 %v1190
        %1194 = vmatprep.subr.mxu0 0.0
        %1195 = vmatpush1.xpose.msra.mxu0 0.0
        %1196 = vmatprep.subr.mxu0 0.0
        %1197 = vmatpush1.xpose.msra.mxu0 0.0
        %1198 = vmatprep.subr.mxu0 0.0
        %1199 = vmatpush1.xpose.msra.mxu0 0.0
        %1200 = vmatprep.subr.mxu0 0.0
        %1201 = vmatpush1.xpose.msra.mxu0 0.0
        %1202 = vmatprep.subr.mxu0 0.0
        %1203 = vmatpush1.xpose.msra.mxu0 0.0
        %1204 = vmatprep.subr.mxu0 0.0
        %1205 = vmatpush1.xpose.msra.mxu0 0.0
        %1206 = vmatprep.subr.mxu0 0.0
        %1207 = vmatpush1.xpose.msra.mxu0 0.0
        %1208 = vmatprep.subr.mxu0 0.0
        %1209 = vmatpush1.xpose.msra.mxu0 0.0
        %1210 = vmatprep.subr.mxu0 0.0
        %1211 = vmatpush1.xpose.msra.mxu0 0.0
        %1212 = vmatprep.subr.mxu0 0.0
        %1213 = vmatpush1.xpose.msra.mxu0 0.0
        %1214 = vmatprep.subr.mxu0 0.0
        %1215 = vmatpush1.xpose.msra.mxu0 0.0
        %1216 = vmatprep.subr.mxu0 0.0
        %1217 = vmatpush1.xpose.msra.mxu0 0.0
        %1218 = vmatprep.subr.mxu0 0.0
        %1219 = vmatpush1.xpose.msra.mxu0 0.0
        %1220 = vmatprep.subr.mxu0 0.0
        %1221 = vmatpush1.xpose.msra.mxu0 0.0
        %1222 = vmatprep.subr.mxu0 0.0
        %1223 = vmatpush1.xpose.msra.mxu0 0.0
        %1224 = vmatprep.subr.mxu0 0.0
        %1225 = vmatpush1.xpose.msra.mxu0 0.0
        %1226 = vmatprep.subr.mxu0 0.0
        %1227 = vmatpush1.xpose.msra.mxu0 0.0
        %1228 = vmatprep.subr.mxu0 0.0
        %1229 = vmatpush1.xpose.msra.mxu0 0.0
        %1230 = vmatprep.subr.mxu0 0.0
        %1231 = vmatpush1.xpose.msra.mxu0 0.0
        %1232 = vmatprep.subr.mxu0 0.0
        %1233 = vmatpush1.xpose.msra.mxu0 0.0
        %1234 = vmatprep.subr.mxu0 0.0
        %1235 = vmatpush1.xpose.msra.mxu0 0.0
        %1236 = vmatprep.subr.mxu0 0.0
        %1237 = vmatpush1.xpose.msra.mxu0 0.0
        %1238 = vmatprep.subr.mxu0 0.0
        %1239 = vmatpush1.xpose.msra.mxu0 0.0
        %1240 = vmatprep.subr.mxu0 0.0
        %1241 = vmatpush1.xpose.msra.mxu0 0.0
        %1242 = vmatprep.subr.mxu0 0.0
        %1243 = vmatpush1.xpose.msra.mxu0 0.0
        %1244 = vmatprep.subr.mxu0 0.0
        %1245 = vmatpush1.xpose.msra.mxu0 0.0
        %1246 = vmatprep.subr.mxu0 0.0
        %1247 = vmatpush1.xpose.msra.mxu0 0.0
        %1248 = vmatprep.subr.mxu0 0.0
        %1249 = vmatpush1.xpose.msra.mxu0 0.0
        %1250 = vmatprep.subr.mxu0 0.0
        %1251 = vmatpush1.xpose.msra.mxu0 0.0
        %1252 = vmatprep.subr.mxu0 0.0
        %1253 = vmatpush1.xpose.msra.mxu0 0.0
        %1254 = vmatprep.subr.mxu0 0.0
        %1255 = vmatpush1.xpose.msra.mxu0 0.0
        %1256 = vmatprep.mubr.f32.mxu0 0.0
        %1257 = vmatmul.mubr.f32.gmra.mrb[0].mxu0 %v1188
        %v1258 = vpop.f32.mrb[0].mxu0
        %v1259 = vadd.f32 0.0, %v1258
        %v1260 = vpop.f32.mrb[0].mxu0
        %1261 = vdwg.mxu0
        %1262 = vrot.lane.b32.xlu0 %v516, 120
        %v1263 = vpop.permute.xlu0 %1262
        %1264 = vrot.lane.b32.xlu0 %v516, 88
        %v1265 = vpop.permute.xlu0 %1264
        %v1266 = vsel %vm530, %v1263, 0
        %v1268 = vsel %vm530, %v1265, 0
        %1270 = vmatprep.subr.mxu0 0.0
        %1271 = vmatpush1.xpose.msra.mxu0 %v1268
        %1272 = vmatprep.subr.mxu0 0.0
        %1273 = vmatpush1.xpose.msra.mxu0 0.0
        %1274 = vmatprep.subr.mxu0 0.0
        %1275 = vmatpush1.xpose.msra.mxu0 0.0
        %1276 = vmatprep.subr.mxu0 0.0
        %1277 = vmatpush1.xpose.msra.mxu0 0.0
        %1278 = vmatprep.subr.mxu0 0.0
        %1279 = vmatpush1.xpose.msra.mxu0 0.0
        %1280 = vmatprep.subr.mxu0 0.0
        %1281 = vmatpush1.xpose.msra.mxu0 0.0
        %1282 = vmatprep.subr.mxu0 0.0
        %1283 = vmatpush1.xpose.msra.mxu0 0.0
        %1284 = vmatprep.subr.mxu0 0.0
        %1285 = vmatpush1.xpose.msra.mxu0 0.0
        %1286 = vmatprep.subr.mxu0 0.0
        %1287 = vmatpush1.xpose.msra.mxu0 0.0
        %1288 = vmatprep.subr.mxu0 0.0
        %1289 = vmatpush1.xpose.msra.mxu0 0.0
        %1290 = vmatprep.subr.mxu0 0.0
        %1291 = vmatpush1.xpose.msra.mxu0 0.0
        %1292 = vmatprep.subr.mxu0 0.0
        %1293 = vmatpush1.xpose.msra.mxu0 0.0
        %1294 = vmatprep.subr.mxu0 0.0
        %1295 = vmatpush1.xpose.msra.mxu0 0.0
        %1296 = vmatprep.subr.mxu0 0.0
        %1297 = vmatpush1.xpose.msra.mxu0 0.0
        %1298 = vmatprep.subr.mxu0 0.0
        %1299 = vmatpush1.xpose.msra.mxu0 0.0
        %1300 = vmatprep.subr.mxu0 0.0
        %1301 = vmatpush1.xpose.msra.mxu0 0.0
        %1302 = vmatprep.subr.mxu0 0.0
        %1303 = vmatpush1.xpose.msra.mxu0 0.0
        %1304 = vmatprep.subr.mxu0 0.0
        %1305 = vmatpush1.xpose.msra.mxu0 0.0
        %1306 = vmatprep.subr.mxu0 0.0
        %1307 = vmatpush1.xpose.msra.mxu0 0.0
        %1308 = vmatprep.subr.mxu0 0.0
        %1309 = vmatpush1.xpose.msra.mxu0 0.0
        %1310 = vmatprep.subr.mxu0 0.0
        %1311 = vmatpush1.xpose.msra.mxu0 0.0
        %1312 = vmatprep.subr.mxu0 0.0
        %1313 = vmatpush1.xpose.msra.mxu0 0.0
        %1314 = vmatprep.subr.mxu0 0.0
        %1315 = vmatpush1.xpose.msra.mxu0 0.0
        %1316 = vmatprep.subr.mxu0 0.0
        %1317 = vmatpush1.xpose.msra.mxu0 0.0
        %1318 = vmatprep.subr.mxu0 0.0
        %1319 = vmatpush1.xpose.msra.mxu0 0.0
        %1320 = vmatprep.subr.mxu0 0.0
        %1321 = vmatpush1.xpose.msra.mxu0 0.0
        %1322 = vmatprep.subr.mxu0 0.0
        %1323 = vmatpush1.xpose.msra.mxu0 0.0
        %1324 = vmatprep.subr.mxu0 0.0
        %1325 = vmatpush1.xpose.msra.mxu0 0.0
        %1326 = vmatprep.subr.mxu0 0.0
        %1327 = vmatpush1.xpose.msra.mxu0 0.0
        %1328 = vmatprep.subr.mxu0 0.0
        %1329 = vmatpush1.xpose.msra.mxu0 0.0
        %1330 = vmatprep.subr.mxu0 0.0
        %1331 = vmatpush1.xpose.msra.mxu0 0.0
        %1332 = vmatprep.subr.mxu0 0.0
        %1333 = vmatpush1.xpose.msra.mxu0 0.0
        %1334 = vmatprep.mubr.f32.mxu0 0.0
        %1335 = vmatmul.mubr.f32.gmra.mrb[0].mxu0 %v1266
        %v1336 = vpop.f32.mrb[0].mxu0
        %v1337 = vadd.f32 0.0, %v1336
        %v1338 = vpop.f32.mrb[0].mxu0
        %1339 = vdwg.mxu0
        %1340 = vrot.lane.b32.xlu0 %v521, 120
        %v1341 = vpop.permute.xlu0 %1340
        %1342 = vrot.lane.b32.xlu0 %v521, 88
        %v1343 = vpop.permute.xlu0 %1342
        %v1344 = vsel %vm530, %v1341, 0
        %v1346 = vsel %vm530, %v1343, 0
        %1348 = vmatprep.subr.mxu0 0.0
        %1349 = vmatpush1.xpose.msra.mxu0 %v1346
        %1350 = vmatprep.subr.mxu0 0.0
        %1351 = vmatpush1.xpose.msra.mxu0 0.0
        %1352 = vmatprep.subr.mxu0 0.0
        %1353 = vmatpush1.xpose.msra.mxu0 0.0
        %1354 = vmatprep.subr.mxu0 0.0
        %1355 = vmatpush1.xpose.msra.mxu0 0.0
        %1356 = vmatprep.subr.mxu0 0.0
        %1357 = vmatpush1.xpose.msra.mxu0 0.0
        %1358 = vmatprep.subr.mxu0 0.0
        %1359 = vmatpush1.xpose.msra.mxu0 0.0
        %1360 = vmatprep.subr.mxu0 0.0
        %1361 = vmatpush1.xpose.msra.mxu0 0.0
        %1362 = vmatprep.subr.mxu0 0.0
        %1363 = vmatpush1.xpose.msra.mxu0 0.0
        %1364 = vmatprep.subr.mxu0 0.0
        %1365 = vmatpush1.xpose.msra.mxu0 0.0
        %1366 = vmatprep.subr.mxu0 0.0
        %1367 = vmatpush1.xpose.msra.mxu0 0.0
        %1368 = vmatprep.subr.mxu0 0.0
        %1369 = vmatpush1.xpose.msra.mxu0 0.0
        %1370 = vmatprep.subr.mxu0 0.0
        %1371 = vmatpush1.xpose.msra.mxu0 0.0
        %1372 = vmatprep.subr.mxu0 0.0
        %1373 = vmatpush1.xpose.msra.mxu0 0.0
        %1374 = vmatprep.subr.mxu0 0.0
        %1375 = vmatpush1.xpose.msra.mxu0 0.0
        %1376 = vmatprep.subr.mxu0 0.0
        %1377 = vmatpush1.xpose.msra.mxu0 0.0
        %1378 = vmatprep.subr.mxu0 0.0
        %1379 = vmatpush1.xpose.msra.mxu0 0.0
        %1380 = vmatprep.subr.mxu0 0.0
        %1381 = vmatpush1.xpose.msra.mxu0 0.0
        %1382 = vmatprep.subr.mxu0 0.0
        %1383 = vmatpush1.xpose.msra.mxu0 0.0
        %1384 = vmatprep.subr.mxu0 0.0
        %1385 = vmatpush1.xpose.msra.mxu0 0.0
        %1386 = vmatprep.subr.mxu0 0.0
        %1387 = vmatpush1.xpose.msra.mxu0 0.0
        %1388 = vmatprep.subr.mxu0 0.0
        %1389 = vmatpush1.xpose.msra.mxu0 0.0
        %1390 = vmatprep.subr.mxu0 0.0
        %1391 = vmatpush1.xpose.msra.mxu0 0.0
        %1392 = vmatprep.subr.mxu0 0.0
        %1393 = vmatpush1.xpose.msra.mxu0 0.0
        %1394 = vmatprep.subr.mxu0 0.0
        %1395 = vmatpush1.xpose.msra.mxu0 0.0
        %1396 = vmatprep.subr.mxu0 0.0
        %1397 = vmatpush1.xpose.msra.mxu0 0.0
        %1398 = vmatprep.subr.mxu0 0.0
        %1399 = vmatpush1.xpose.msra.mxu0 0.0
        %1400 = vmatprep.subr.mxu0 0.0
        %1401 = vmatpush1.xpose.msra.mxu0 0.0
        %1402 = vmatprep.subr.mxu0 0.0
        %1403 = vmatpush1.xpose.msra.mxu0 0.0
        %1404 = vmatprep.subr.mxu0 0.0
        %1405 = vmatpush1.xpose.msra.mxu0 0.0
        %1406 = vmatprep.subr.mxu0 0.0
        %1407 = vmatpush1.xpose.msra.mxu0 0.0
        %1408 = vmatprep.subr.mxu0 0.0
        %1409 = vmatpush1.xpose.msra.mxu0 0.0
        %1410 = vmatprep.subr.mxu0 0.0
        %1411 = vmatpush1.xpose.msra.mxu0 0.0
        %1412 = vmatprep.mubr.f32.mxu0 0.0
        %1413 = vmatmul.mubr.f32.gmra.mrb[0].mxu0 %v1344
        %v1414 = vpop.f32.mrb[0].mxu0
        %v1415 = vadd.f32 0.0, %v1414
        %v1416 = vpop.f32.mrb[0].mxu0
        %1417 = vdwg.mxu0
        %1418 = vrot.lane.b32.xlu0 %v524, 120
        %v1419 = vpop.permute.xlu0 %1418
        %1420 = vrot.lane.b32.xlu0 %v524, 88
        %v1421 = vpop.permute.xlu0 %1420
        %v1422 = vsel %vm530, %v1419, 0
        %v1424 = vsel %vm530, %v1421, 0
        %1426 = vmatprep.subr.mxu0 0.0
        %1427 = vmatpush1.xpose.msra.mxu0 %v1424
        %1428 = vmatprep.subr.mxu0 0.0
        %1429 = vmatpush1.xpose.msra.mxu0 0.0
        %1430 = vmatprep.subr.mxu0 0.0
        %1431 = vmatpush1.xpose.msra.mxu0 0.0
        %1432 = vmatprep.subr.mxu0 0.0
        %1433 = vmatpush1.xpose.msra.mxu0 0.0
        %1434 = vmatprep.subr.mxu0 0.0
        %1435 = vmatpush1.xpose.msra.mxu0 0.0
        %1436 = vmatprep.subr.mxu0 0.0
        %1437 = vmatpush1.xpose.msra.mxu0 0.0
        %1438 = vmatprep.subr.mxu0 0.0
        %1439 = vmatpush1.xpose.msra.mxu0 0.0
        %1440 = vmatprep.subr.mxu0 0.0
        %1441 = vmatpush1.xpose.msra.mxu0 0.0
        %1442 = vmatprep.subr.mxu0 0.0
        %1443 = vmatpush1.xpose.msra.mxu0 0.0
        %1444 = vmatprep.subr.mxu0 0.0
        %1445 = vmatpush1.xpose.msra.mxu0 0.0
        %1446 = vmatprep.subr.mxu0 0.0
        %1447 = vmatpush1.xpose.msra.mxu0 0.0
        %1448 = vmatprep.subr.mxu0 0.0
        %1449 = vmatpush1.xpose.msra.mxu0 0.0
        %1450 = vmatprep.subr.mxu0 0.0
        %1451 = vmatpush1.xpose.msra.mxu0 0.0
        %1452 = vmatprep.subr.mxu0 0.0
        %1453 = vmatpush1.xpose.msra.mxu0 0.0
        %1454 = vmatprep.subr.mxu0 0.0
        %1455 = vmatpush1.xpose.msra.mxu0 0.0
        %1456 = vmatprep.subr.mxu0 0.0
        %1457 = vmatpush1.xpose.msra.mxu0 0.0
        %1458 = vmatprep.subr.mxu0 0.0
        %1459 = vmatpush1.xpose.msra.mxu0 0.0
        %1460 = vmatprep.subr.mxu0 0.0
        %1461 = vmatpush1.xpose.msra.mxu0 0.0
        %1462 = vmatprep.subr.mxu0 0.0
        %1463 = vmatpush1.xpose.msra.mxu0 0.0
        %1464 = vmatprep.subr.mxu0 0.0
        %1465 = vmatpush1.xpose.msra.mxu0 0.0
        %1466 = vmatprep.subr.mxu0 0.0
        %1467 = vmatpush1.xpose.msra.mxu0 0.0
        %1468 = vmatprep.subr.mxu0 0.0
        %1469 = vmatpush1.xpose.msra.mxu0 0.0
        %1470 = vmatprep.subr.mxu0 0.0
        %1471 = vmatpush1.xpose.msra.mxu0 0.0
        %1472 = vmatprep.subr.mxu0 0.0
        %1473 = vmatpush1.xpose.msra.mxu0 0.0
        %1474 = vmatprep.subr.mxu0 0.0
        %1475 = vmatpush1.xpose.msra.mxu0 0.0
        %1476 = vmatprep.subr.mxu0 0.0
        %1477 = vmatpush1.xpose.msra.mxu0 0.0
        %1478 = vmatprep.subr.mxu0 0.0
        %1479 = vmatpush1.xpose.msra.mxu0 0.0
        %1480 = vmatprep.subr.mxu0 0.0
        %1481 = vmatpush1.xpose.msra.mxu0 0.0
        %1482 = vmatprep.subr.mxu0 0.0
        %1483 = vmatpush1.xpose.msra.mxu0 0.0
        %1484 = vmatprep.subr.mxu0 0.0
        %1485 = vmatpush1.xpose.msra.mxu0 0.0
        %1486 = vmatprep.subr.mxu0 0.0
        %1487 = vmatpush1.xpose.msra.mxu0 0.0
        %1488 = vmatprep.subr.mxu0 0.0
        %1489 = vmatpush1.xpose.msra.mxu0 0.0
        %1490 = vmatprep.mubr.f32.mxu0 0.0
        %1491 = vmatmul.mubr.f32.gmra.mrb[0].mxu0 %v1422
        %v1492 = vpop.f32.mrb[0].mxu0
        %v1493 = vadd.f32 0.0, %v1492
        %v1494 = vpop.f32.mrb[0].mxu0
        %1495 = vdwg.mxu0
        %v1496 = vsel %vm530, %v1259, -inf
        %1497 = vmax.xlane.f32.xlu0 %v1496
        %v1498 = vpop.xlane.xlu0 %1497
        %v1499 = vsel %vm530, %v1337, -inf
        %1500 = vmax.xlane.f32.xlu0 %v1499
        %v1501 = vpop.xlane.xlu0 %1500
        %v1502 = vsel %vm530, %v1415, -inf
        %1503 = vmax.xlane.f32.xlu0 %v1502
        %v1504 = vpop.xlane.xlu0 %1503
        %v1505 = vsel %vm530, %v1493, -inf
        %1506 = vmax.xlane.f32.xlu0 %v1505
        %v1507 = vpop.xlane.xlu0 %1506
        %v1508 = vsub.f32 %v1259, %v1498
        %v1509 = vsub.f32 %v1337, %v1501
        %v1510 = vsub.f32 %v1415, %v1504
        %v1511 = vsub.f32 %v1493, %v1507
        %v1512 = vmul.f32 %v1508, 1.442695
        %v1513 = vpow.pop %v1512
        %v1514 = vmul.f32 %v1509, 1.442695
        %v1515 = vpow.pop %v1514
        %v1516 = vmul.f32 %v1510, 1.442695
        %v1517 = vpow.pop %v1516
        %v1518 = vmul.f32 %v1511, 1.442695
        %v1519 = vpow.pop %v1518
        %v1520 = vsel %vm530, %v1513, 0.0
        %1521 = vadd.xlane.f32.xlu0 %v1520
        %v1522 = vpop.xlane.xlu0 %1521
        %v1523 = vsel %vm530, %v1515, 0.0
        %1524 = vadd.xlane.f32.xlu0 %v1523
        %v1525 = vpop.xlane.xlu0 %1524
        %v1526 = vsel %vm530, %v1517, 0.0
        %1527 = vadd.xlane.f32.xlu0 %v1526
        %v1528 = vpop.xlane.xlu0 %1527
        %v1529 = vsel %vm530, %v1519, 0.0
        %1530 = vadd.xlane.f32.xlu0 %v1529
        %v1531 = vpop.xlane.xlu0 %1530
        %v1532 = vrcp.pop %v1522
        %v1533 = vmul.f32 %v1513, %v1532
        %v1534 = vrcp.pop %v1525
        %v1535 = vmul.f32 %v1515, %v1534
        %v1536 = vrcp.pop %v1528
        %v1537 = vmul.f32 %v1517, %v1536
        %v1538 = vrcp.pop %v1531
        %v1539 = vmul.f32 %v1519, %v1538
        %1540 = vrot.lane.b32.xlu0 %v513, 56
        %v1541 = vpop.permute.xlu0 %1540
        %v1544 = vsel %vm530, %v1533, 0
        %1546 = vmatprep.subr.mxu0 0.0
        %1547 = vmatpush1.msra.mxu0 %v1541
        %1548 = vmatprep.subr.mxu0 0.0
        %1549 = vmatpush1.msra.mxu0 0.0
        %1550 = vmatprep.subr.mxu0 0.0
        %1551 = vmatpush1.msra.mxu0 0.0
        %1552 = vmatprep.subr.mxu0 0.0
        %1553 = vmatpush1.msra.mxu0 0.0
        %1554 = vmatprep.subr.mxu0 0.0
        %1555 = vmatpush1.msra.mxu0 0.0
        %1556 = vmatprep.subr.mxu0 0.0
        %1557 = vmatpush1.msra.mxu0 0.0
        %1558 = vmatprep.subr.mxu0 0.0
        %1559 = vmatpush1.msra.mxu0 0.0
        %1560 = vmatprep.subr.mxu0 0.0
        %1561 = vmatpush1.msra.mxu0 0.0
        %1562 = vmatprep.subr.mxu0 0.0
        %1563 = vmatpush1.msra.mxu0 0.0
        %1564 = vmatprep.subr.mxu0 0.0
        %1565 = vmatpush1.msra.mxu0 0.0
        %1566 = vmatprep.subr.mxu0 0.0
        %1567 = vmatpush1.msra.mxu0 0.0
        %1568 = vmatprep.subr.mxu0 0.0
        %1569 = vmatpush1.msra.mxu0 0.0
        %1570 = vmatprep.subr.mxu0 0.0
        %1571 = vmatpush1.msra.mxu0 0.0
        %1572 = vmatprep.subr.mxu0 0.0
        %1573 = vmatpush1.msra.mxu0 0.0
        %1574 = vmatprep.subr.mxu0 0.0
        %1575 = vmatpush1.msra.mxu0 0.0
        %1576 = vmatprep.subr.mxu0 0.0
        %1577 = vmatpush1.msra.mxu0 0.0
        %1578 = vmatprep.subr.mxu0 0.0
        %1579 = vmatpush1.msra.mxu0 0.0
        %1580 = vmatprep.subr.mxu0 0.0
        %1581 = vmatpush1.msra.mxu0 0.0
        %1582 = vmatprep.subr.mxu0 0.0
        %1583 = vmatpush1.msra.mxu0 0.0
        %1584 = vmatprep.subr.mxu0 0.0
        %1585 = vmatpush1.msra.mxu0 0.0
        %1586 = vmatprep.subr.mxu0 0.0
        %1587 = vmatpush1.msra.mxu0 0.0
        %1588 = vmatprep.subr.mxu0 0.0
        %1589 = vmatpush1.msra.mxu0 0.0
        %1590 = vmatprep.subr.mxu0 0.0
        %1591 = vmatpush1.msra.mxu0 0.0
        %1592 = vmatprep.subr.mxu0 0.0
        %1593 = vmatpush1.msra.mxu0 0.0
        %1594 = vmatprep.subr.mxu0 0.0
        %1595 = vmatpush1.msra.mxu0 0.0
        %1596 = vmatprep.subr.mxu0 0.0
        %1597 = vmatpush1.msra.mxu0 0.0
        %1598 = vmatprep.subr.mxu0 0.0
        %1599 = vmatpush1.msra.mxu0 0.0
        %1600 = vmatprep.subr.mxu0 0.0
        %1601 = vmatpush1.msra.mxu0 0.0
        %1602 = vmatprep.subr.mxu0 0.0
        %1603 = vmatpush1.msra.mxu0 0.0
        %1604 = vmatprep.subr.mxu0 0.0
        %1605 = vmatpush1.msra.mxu0 0.0
        %1606 = vmatprep.subr.mxu0 0.0
        %1607 = vmatpush1.msra.mxu0 0.0
        %1608 = vmatprep.subr.mxu0 0.0
        %1609 = vmatpush1.msra.mxu0 0.0
        %1610 = vmatprep.mubr.f32.mxu0 0.0
        %1611 = vmatmul.mubr.f32.gmra.mrb[0].mxu0 %v1544
        %v1612 = vpop.f32.mrb[0].mxu0
        %v1613 = vadd.f32 0.0, %v1612
        %v1614 = vpop.f32.mrb[0].mxu0
        %1615 = vdwg.mxu0
        %1616 = vrot.lane.b32.xlu0 %v516, 56
        %v1617 = vpop.permute.xlu0 %1616
        %v1620 = vsel %vm530, %v1535, 0
        %1622 = vmatprep.subr.mxu0 0.0
        %1623 = vmatpush1.msra.mxu0 %v1617
        %1624 = vmatprep.subr.mxu0 0.0
        %1625 = vmatpush1.msra.mxu0 0.0
        %1626 = vmatprep.subr.mxu0 0.0
        %1627 = vmatpush1.msra.mxu0 0.0
        %1628 = vmatprep.subr.mxu0 0.0
        %1629 = vmatpush1.msra.mxu0 0.0
        %1630 = vmatprep.subr.mxu0 0.0
        %1631 = vmatpush1.msra.mxu0 0.0
        %1632 = vmatprep.subr.mxu0 0.0
        %1633 = vmatpush1.msra.mxu0 0.0
        %1634 = vmatprep.subr.mxu0 0.0
        %1635 = vmatpush1.msra.mxu0 0.0
        %1636 = vmatprep.subr.mxu0 0.0
        %1637 = vmatpush1.msra.mxu0 0.0
        %1638 = vmatprep.subr.mxu0 0.0
        %1639 = vmatpush1.msra.mxu0 0.0
        %1640 = vmatprep.subr.mxu0 0.0
        %1641 = vmatpush1.msra.mxu0 0.0
        %1642 = vmatprep.subr.mxu0 0.0
        %1643 = vmatpush1.msra.mxu0 0.0
        %1644 = vmatprep.subr.mxu0 0.0
        %1645 = vmatpush1.msra.mxu0 0.0
        %1646 = vmatprep.subr.mxu0 0.0
        %1647 = vmatpush1.msra.mxu0 0.0
        %1648 = vmatprep.subr.mxu0 0.0
        %1649 = vmatpush1.msra.mxu0 0.0
        %1650 = vmatprep.subr.mxu0 0.0
        %1651 = vmatpush1.msra.mxu0 0.0
        %1652 = vmatprep.subr.mxu0 0.0
        %1653 = vmatpush1.msra.mxu0 0.0
        %1654 = vmatprep.subr.mxu0 0.0
        %1655 = vmatpush1.msra.mxu0 0.0
        %1656 = vmatprep.subr.mxu0 0.0
        %1657 = vmatpush1.msra.mxu0 0.0
        %1658 = vmatprep.subr.mxu0 0.0
        %1659 = vmatpush1.msra.mxu0 0.0
        %1660 = vmatprep.subr.mxu0 0.0
        %1661 = vmatpush1.msra.mxu0 0.0
        %1662 = vmatprep.subr.mxu0 0.0
        %1663 = vmatpush1.msra.mxu0 0.0
        %1664 = vmatprep.subr.mxu0 0.0
        %1665 = vmatpush1.msra.mxu0 0.0
        %1666 = vmatprep.subr.mxu0 0.0
        %1667 = vmatpush1.msra.mxu0 0.0
        %1668 = vmatprep.subr.mxu0 0.0
        %1669 = vmatpush1.msra.mxu0 0.0
        %1670 = vmatprep.subr.mxu0 0.0
        %1671 = vmatpush1.msra.mxu0 0.0
        %1672 = vmatprep.subr.mxu0 0.0
        %1673 = vmatpush1.msra.mxu0 0.0
        %1674 = vmatprep.subr.mxu0 0.0
        %1675 = vmatpush1.msra.mxu0 0.0
        %1676 = vmatprep.subr.mxu0 0.0
        %1677 = vmatpush1.msra.mxu0 0.0
        %1678 = vmatprep.subr.mxu0 0.0
        %1679 = vmatpush1.msra.mxu0 0.0
        %1680 = vmatprep.subr.mxu0 0.0
        %1681 = vmatpush1.msra.mxu0 0.0
        %1682 = vmatprep.subr.mxu0 0.0
        %1683 = vmatpush1.msra.mxu0 0.0
        %1684 = vmatprep.subr.mxu0 0.0
        %1685 = vmatpush1.msra.mxu0 0.0
        %1686 = vmatprep.mubr.f32.mxu0 0.0
        %1687 = vmatmul.mubr.f32.gmra.mrb[0].mxu0 %v1620
        %v1688 = vpop.f32.mrb[0].mxu0
        %v1689 = vadd.f32 0.0, %v1688
        %v1690 = vpop.f32.mrb[0].mxu0
        %1691 = vdwg.mxu0
        %1692 = vrot.lane.b32.xlu0 %v521, 56
        %v1693 = vpop.permute.xlu0 %1692
        %v1696 = vsel %vm530, %v1537, 0
        %1698 = vmatprep.subr.mxu0 0.0
        %1699 = vmatpush1.msra.mxu0 %v1693
        %1700 = vmatprep.subr.mxu0 0.0
        %1701 = vmatpush1.msra.mxu0 0.0
        %1702 = vmatprep.subr.mxu0 0.0
        %1703 = vmatpush1.msra.mxu0 0.0
        %1704 = vmatprep.subr.mxu0 0.0
        %1705 = vmatpush1.msra.mxu0 0.0
        %1706 = vmatprep.subr.mxu0 0.0
        %1707 = vmatpush1.msra.mxu0 0.0
        %1708 = vmatprep.subr.mxu0 0.0
        %1709 = vmatpush1.msra.mxu0 0.0
        %1710 = vmatprep.subr.mxu0 0.0
        %1711 = vmatpush1.msra.mxu0 0.0
        %1712 = vmatprep.subr.mxu0 0.0
        %1713 = vmatpush1.msra.mxu0 0.0
        %1714 = vmatprep.subr.mxu0 0.0
        %1715 = vmatpush1.msra.mxu0 0.0
        %1716 = vmatprep.subr.mxu0 0.0
        %1717 = vmatpush1.msra.mxu0 0.0
        %1718 = vmatprep.subr.mxu0 0.0
        %1719 = vmatpush1.msra.mxu0 0.0
        %1720 = vmatprep.subr.mxu0 0.0
        %1721 = vmatpush1.msra.mxu0 0.0
        %1722 = vmatprep.subr.mxu0 0.0
        %1723 = vmatpush1.msra.mxu0 0.0
        %1724 = vmatprep.subr.mxu0 0.0
        %1725 = vmatpush1.msra.mxu0 0.0
        %1726 = vmatprep.subr.mxu0 0.0
        %1727 = vmatpush1.msra.mxu0 0.0
        %1728 = vmatprep.subr.mxu0 0.0
        %1729 = vmatpush1.msra.mxu0 0.0
        %1730 = vmatprep.subr.mxu0 0.0
        %1731 = vmatpush1.msra.mxu0 0.0
        %1732 = vmatprep.subr.mxu0 0.0
        %1733 = vmatpush1.msra.mxu0 0.0
        %1734 = vmatprep.subr.mxu0 0.0
        %1735 = vmatpush1.msra.mxu0 0.0
        %1736 = vmatprep.subr.mxu0 0.0
        %1737 = vmatpush1.msra.mxu0 0.0
        %1738 = vmatprep.subr.mxu0 0.0
        %1739 = vmatpush1.msra.mxu0 0.0
        %1740 = vmatprep.subr.mxu0 0.0
        %1741 = vmatpush1.msra.mxu0 0.0
        %1742 = vmatprep.subr.mxu0 0.0
        %1743 = vmatpush1.msra.mxu0 0.0
        %1744 = vmatprep.subr.mxu0 0.0
        %1745 = vmatpush1.msra.mxu0 0.0
        %1746 = vmatprep.subr.mxu0 0.0
        %1747 = vmatpush1.msra.mxu0 0.0
        %1748 = vmatprep.subr.mxu0 0.0
        %1749 = vmatpush1.msra.mxu0 0.0
        %1750 = vmatprep.subr.mxu0 0.0
        %1751 = vmatpush1.msra.mxu0 0.0
        %1752 = vmatprep.subr.mxu0 0.0
        %1753 = vmatpush1.msra.mxu0 0.0
        %1754 = vmatprep.subr.mxu0 0.0
        %1755 = vmatpush1.msra.mxu0 0.0
        %1756 = vmatprep.subr.mxu0 0.0
        %1757 = vmatpush1.msra.mxu0 0.0
        %1758 = vmatprep.subr.mxu0 0.0
        %1759 = vmatpush1.msra.mxu0 0.0
        %1760 = vmatprep.subr.mxu0 0.0
        %1761 = vmatpush1.msra.mxu0 0.0
        %1762 = vmatprep.mubr.f32.mxu0 0.0
        %1763 = vmatmul.mubr.f32.gmra.mrb[0].mxu0 %v1696
        %v1764 = vpop.f32.mrb[0].mxu0
        %v1765 = vadd.f32 0.0, %v1764
        %v1766 = vpop.f32.mrb[0].mxu0
        %1767 = vdwg.mxu0
        %1768 = vrot.lane.b32.xlu0 %v524, 56
        %v1769 = vpop.permute.xlu0 %1768
        %v1772 = vsel %vm530, %v1539, 0
        %1774 = vmatprep.subr.mxu0 0.0
        %1775 = vmatpush1.msra.mxu0 %v1769
        %1776 = vmatprep.subr.mxu0 0.0
        %1777 = vmatpush1.msra.mxu0 0.0
        %1778 = vmatprep.subr.mxu0 0.0
        %1779 = vmatpush1.msra.mxu0 0.0
        %1780 = vmatprep.subr.mxu0 0.0
        %1781 = vmatpush1.msra.mxu0 0.0
        %1782 = vmatprep.subr.mxu0 0.0
        %1783 = vmatpush1.msra.mxu0 0.0
        %1784 = vmatprep.subr.mxu0 0.0
        %1785 = vmatpush1.msra.mxu0 0.0
        %1786 = vmatprep.subr.mxu0 0.0
        %1787 = vmatpush1.msra.mxu0 0.0
        %1788 = vmatprep.subr.mxu0 0.0
        %1789 = vmatpush1.msra.mxu0 0.0
        %1790 = vmatprep.subr.mxu0 0.0
        %1791 = vmatpush1.msra.mxu0 0.0
        %1792 = vmatprep.subr.mxu0 0.0
        %1793 = vmatpush1.msra.mxu0 0.0
        %1794 = vmatprep.subr.mxu0 0.0
        %1795 = vmatpush1.msra.mxu0 0.0
        %1796 = vmatprep.subr.mxu0 0.0
        %1797 = vmatpush1.msra.mxu0 0.0
        %1798 = vmatprep.subr.mxu0 0.0
        %1799 = vmatpush1.msra.mxu0 0.0
        %1800 = vmatprep.subr.mxu0 0.0
        %1801 = vmatpush1.msra.mxu0 0.0
        %1802 = vmatprep.subr.mxu0 0.0
        %1803 = vmatpush1.msra.mxu0 0.0
        %1804 = vmatprep.subr.mxu0 0.0
        %1805 = vmatpush1.msra.mxu0 0.0
        %1806 = vmatprep.subr.mxu0 0.0
        %1807 = vmatpush1.msra.mxu0 0.0
        %1808 = vmatprep.subr.mxu0 0.0
        %1809 = vmatpush1.msra.mxu0 0.0
        %1810 = vmatprep.subr.mxu0 0.0
        %1811 = vmatpush1.msra.mxu0 0.0
        %1812 = vmatprep.subr.mxu0 0.0
        %1813 = vmatpush1.msra.mxu0 0.0
        %1814 = vmatprep.subr.mxu0 0.0
        %1815 = vmatpush1.msra.mxu0 0.0
        %1816 = vmatprep.subr.mxu0 0.0
        %1817 = vmatpush1.msra.mxu0 0.0
        %1818 = vmatprep.subr.mxu0 0.0
        %1819 = vmatpush1.msra.mxu0 0.0
        %1820 = vmatprep.subr.mxu0 0.0
        %1821 = vmatpush1.msra.mxu0 0.0
        %1822 = vmatprep.subr.mxu0 0.0
        %1823 = vmatpush1.msra.mxu0 0.0
        %1824 = vmatprep.subr.mxu0 0.0
        %1825 = vmatpush1.msra.mxu0 0.0
        %1826 = vmatprep.subr.mxu0 0.0
        %1827 = vmatpush1.msra.mxu0 0.0
        %1828 = vmatprep.subr.mxu0 0.0
        %1829 = vmatpush1.msra.mxu0 0.0
        %1830 = vmatprep.subr.mxu0 0.0
        %1831 = vmatpush1.msra.mxu0 0.0
        %1832 = vmatprep.subr.mxu0 0.0
        %1833 = vmatpush1.msra.mxu0 0.0
        %1834 = vmatprep.subr.mxu0 0.0
        %1835 = vmatpush1.msra.mxu0 0.0
        %1836 = vmatprep.subr.mxu0 0.0
        %1837 = vmatpush1.msra.mxu0 0.0
        %1838 = vmatprep.mubr.f32.mxu0 0.0
        %1839 = vmatmul.mubr.f32.gmra.mrb[0].mxu0 %v1772
        %v1840 = vpop.f32.mrb[0].mxu0
        %v1841 = vadd.f32 0.0, %v1840
        %v1842 = vpop.f32.mrb[0].mxu0
        %1843 = vdwg.mxu0
        %1844 = vrot.lane.b32.xlu0 %v513, 112
        %v1845 = vpop.permute.xlu0 %1844
        %1846 = vrot.lane.b32.xlu0 %v513, 80
        %v1847 = vpop.permute.xlu0 %1846
        %v1848 = vsel %vm530, %v1845, 0
        %v1850 = vsel %vm530, %v1847, 0
        %1852 = vmatprep.subr.mxu0 0.0
        %1853 = vmatpush1.xpose.msra.mxu0 %v1850
        %1854 = vmatprep.subr.mxu0 0.0
        %1855 = vmatpush1.xpose.msra.mxu0 0.0
        %1856 = vmatprep.subr.mxu0 0.0
        %1857 = vmatpush1.xpose.msra.mxu0 0.0
        %1858 = vmatprep.subr.mxu0 0.0
        %1859 = vmatpush1.xpose.msra.mxu0 0.0
        %1860 = vmatprep.subr.mxu0 0.0
        %1861 = vmatpush1.xpose.msra.mxu0 0.0
        %1862 = vmatprep.subr.mxu0 0.0
        %1863 = vmatpush1.xpose.msra.mxu0 0.0
        %1864 = vmatprep.subr.mxu0 0.0
        %1865 = vmatpush1.xpose.msra.mxu0 0.0
        %1866 = vmatprep.subr.mxu0 0.0
        %1867 = vmatpush1.xpose.msra.mxu0 0.0
        %1868 = vmatprep.subr.mxu0 0.0
        %1869 = vmatpush1.xpose.msra.mxu0 0.0
        %1870 = vmatprep.subr.mxu0 0.0
        %1871 = vmatpush1.xpose.msra.mxu0 0.0
        %1872 = vmatprep.subr.mxu0 0.0
        %1873 = vmatpush1.xpose.msra.mxu0 0.0
        %1874 = vmatprep.subr.mxu0 0.0
        %1875 = vmatpush1.xpose.msra.mxu0 0.0
        %1876 = vmatprep.subr.mxu0 0.0
        %1877 = vmatpush1.xpose.msra.mxu0 0.0
        %1878 = vmatprep.subr.mxu0 0.0
        %1879 = vmatpush1.xpose.msra.mxu0 0.0
        %1880 = vmatprep.subr.mxu0 0.0
        %1881 = vmatpush1.xpose.msra.mxu0 0.0
        %1882 = vmatprep.subr.mxu0 0.0
        %1883 = vmatpush1.xpose.msra.mxu0 0.0
        %1884 = vmatprep.subr.mxu0 0.0
        %1885 = vmatpush1.xpose.msra.mxu0 0.0
        %1886 = vmatprep.subr.mxu0 0.0
        %1887 = vmatpush1.xpose.msra.mxu0 0.0
        %1888 = vmatprep.subr.mxu0 0.0
        %1889 = vmatpush1.xpose.msra.mxu0 0.0
        %1890 = vmatprep.subr.mxu0 0.0
        %1891 = vmatpush1.xpose.msra.mxu0 0.0
        %1892 = vmatprep.subr.mxu0 0.0
        %1893 = vmatpush1.xpose.msra.mxu0 0.0
        %1894 = vmatprep.subr.mxu0 0.0
        %1895 = vmatpush1.xpose.msra.mxu0 0.0
        %1896 = vmatprep.subr.mxu0 0.0
        %1897 = vmatpush1.xpose.msra.mxu0 0.0
        %1898 = vmatprep.subr.mxu0 0.0
        %1899 = vmatpush1.xpose.msra.mxu0 0.0
        %1900 = vmatprep.subr.mxu0 0.0
        %1901 = vmatpush1.xpose.msra.mxu0 0.0
        %1902 = vmatprep.subr.mxu0 0.0
        %1903 = vmatpush1.xpose.msra.mxu0 0.0
        %1904 = vmatprep.subr.mxu0 0.0
        %1905 = vmatpush1.xpose.msra.mxu0 0.0
        %1906 = vmatprep.subr.mxu0 0.0
        %1907 = vmatpush1.xpose.msra.mxu0 0.0
        %1908 = vmatprep.subr.mxu0 0.0
        %1909 = vmatpush1.xpose.msra.mxu0 0.0
        %1910 = vmatprep.subr.mxu0 0.0
        %1911 = vmatpush1.xpose.msra.mxu0 0.0
        %1912 = vmatprep.subr.mxu0 0.0
        %1913 = vmatpush1.xpose.msra.mxu0 0.0
        %1914 = vmatprep.subr.mxu0 0.0
        %1915 = vmatpush1.xpose.msra.mxu0 0.0
        %1916 = vmatprep.mubr.f32.mxu0 0.0
        %1917 = vmatmul.mubr.f32.gmra.mrb[0].mxu0 %v1848
        %v1918 = vpop.f32.mrb[0].mxu0
        %v1919 = vadd.f32 0.0, %v1918
        %v1920 = vpop.f32.mrb[0].mxu0
        %1921 = vdwg.mxu0
        %1922 = vrot.lane.b32.xlu0 %v516, 112
        %v1923 = vpop.permute.xlu0 %1922
        %1924 = vrot.lane.b32.xlu0 %v516, 80
        %v1925 = vpop.permute.xlu0 %1924
        %v1926 = vsel %vm530, %v1923, 0
        %v1928 = vsel %vm530, %v1925, 0
        %1930 = vmatprep.subr.mxu0 0.0
        %1931 = vmatpush1.xpose.msra.mxu0 %v1928
        %1932 = vmatprep.subr.mxu0 0.0
        %1933 = vmatpush1.xpose.msra.mxu0 0.0
        %1934 = vmatprep.subr.mxu0 0.0
        %1935 = vmatpush1.xpose.msra.mxu0 0.0
        %1936 = vmatprep.subr.mxu0 0.0
        %1937 = vmatpush1.xpose.msra.mxu0 0.0
        %1938 = vmatprep.subr.mxu0 0.0
        %1939 = vmatpush1.xpose.msra.mxu0 0.0
        %1940 = vmatprep.subr.mxu0 0.0
        %1941 = vmatpush1.xpose.msra.mxu0 0.0
        %1942 = vmatprep.subr.mxu0 0.0
        %1943 = vmatpush1.xpose.msra.mxu0 0.0
        %1944 = vmatprep.subr.mxu0 0.0
        %1945 = vmatpush1.xpose.msra.mxu0 0.0
        %1946 = vmatprep.subr.mxu0 0.0
        %1947 = vmatpush1.xpose.msra.mxu0 0.0
        %1948 = vmatprep.subr.mxu0 0.0
        %1949 = vmatpush1.xpose.msra.mxu0 0.0
        %1950 = vmatprep.subr.mxu0 0.0
        %1951 = vmatpush1.xpose.msra.mxu0 0.0
        %1952 = vmatprep.subr.mxu0 0.0
        %1953 = vmatpush1.xpose.msra.mxu0 0.0
        %1954 = vmatprep.subr.mxu0 0.0
        %1955 = vmatpush1.xpose.msra.mxu0 0.0
        %1956 = vmatprep.subr.mxu0 0.0
        %1957 = vmatpush1.xpose.msra.mxu0 0.0
        %1958 = vmatprep.subr.mxu0 0.0
        %1959 = vmatpush1.xpose.msra.mxu0 0.0
        %1960 = vmatprep.subr.mxu0 0.0
        %1961 = vmatpush1.xpose.msra.mxu0 0.0
        %1962 = vmatprep.subr.mxu0 0.0
        %1963 = vmatpush1.xpose.msra.mxu0 0.0
        %1964 = vmatprep.subr.mxu0 0.0
        %1965 = vmatpush1.xpose.msra.mxu0 0.0
        %1966 = vmatprep.subr.mxu0 0.0
        %1967 = vmatpush1.xpose.msra.mxu0 0.0
        %1968 = vmatprep.subr.mxu0 0.0
        %1969 = vmatpush1.xpose.msra.mxu0 0.0
        %1970 = vmatprep.subr.mxu0 0.0
        %1971 = vmatpush1.xpose.msra.mxu0 0.0
        %1972 = vmatprep.subr.mxu0 0.0
        %1973 = vmatpush1.xpose.msra.mxu0 0.0
        %1974 = vmatprep.subr.mxu0 0.0
        %1975 = vmatpush1.xpose.msra.mxu0 0.0
        %1976 = vmatprep.subr.mxu0 0.0
        %1977 = vmatpush1.xpose.msra.mxu0 0.0
        %1978 = vmatprep.subr.mxu0 0.0
        %1979 = vmatpush1.xpose.msra.mxu0 0.0
        %1980 = vmatprep.subr.mxu0 0.0
        %1981 = vmatpush1.xpose.msra.mxu0 0.0
        %1982 = vmatprep.subr.mxu0 0.0
        %1983 = vmatpush1.xpose.msra.mxu0 0.0
        %1984 = vmatprep.subr.mxu0 0.0
        %1985 = vmatpush1.xpose.msra.mxu0 0.0
        %1986 = vmatprep.subr.mxu0 0.0
        %1987 = vmatpush1.xpose.msra.mxu0 0.0
        %1988 = vmatprep.subr.mxu0 0.0
        %1989 = vmatpush1.xpose.msra.mxu0 0.0
        %1990 = vmatprep.subr.mxu0 0.0
        %1991 = vmatpush1.xpose.msra.mxu0 0.0
        %1992 = vmatprep.subr.mxu0 0.0
        %1993 = vmatpush1.xpose.msra.mxu0 0.0
        %1994 = vmatprep.mubr.f32.mxu0 0.0
        %1995 = vmatmul.mubr.f32.gmra.mrb[0].mxu0 %v1926
        %v1996 = vpop.f32.mrb[0].mxu0
        %v1997 = vadd.f32 0.0, %v1996
        %v1998 = vpop.f32.mrb[0].mxu0
        %1999 = vdwg.mxu0
        %2000 = vrot.lane.b32.xlu0 %v521, 112
        %v2001 = vpop.permute.xlu0 %2000
        %2002 = vrot.lane.b32.xlu0 %v521, 80
        %v2003 = vpop.permute.xlu0 %2002
        %v2004 = vsel %vm530, %v2001, 0
        %v2006 = vsel %vm530, %v2003, 0
        %2008 = vmatprep.subr.mxu0 0.0
        %2009 = vmatpush1.xpose.msra.mxu0 %v2006
        %2010 = vmatprep.subr.mxu0 0.0
        %2011 = vmatpush1.xpose.msra.mxu0 0.0
        %2012 = vmatprep.subr.mxu0 0.0
        %2013 = vmatpush1.xpose.msra.mxu0 0.0
        %2014 = vmatprep.subr.mxu0 0.0
        %2015 = vmatpush1.xpose.msra.mxu0 0.0
        %2016 = vmatprep.subr.mxu0 0.0
        %2017 = vmatpush1.xpose.msra.mxu0 0.0
        %2018 = vmatprep.subr.mxu0 0.0
        %2019 = vmatpush1.xpose.msra.mxu0 0.0
        %2020 = vmatprep.subr.mxu0 0.0
        %2021 = vmatpush1.xpose.msra.mxu0 0.0
        %2022 = vmatprep.subr.mxu0 0.0
        %2023 = vmatpush1.xpose.msra.mxu0 0.0
        %2024 = vmatprep.subr.mxu0 0.0
        %2025 = vmatpush1.xpose.msra.mxu0 0.0
        %2026 = vmatprep.subr.mxu0 0.0
        %2027 = vmatpush1.xpose.msra.mxu0 0.0
        %2028 = vmatprep.subr.mxu0 0.0
        %2029 = vmatpush1.xpose.msra.mxu0 0.0
        %2030 = vmatprep.subr.mxu0 0.0
        %2031 = vmatpush1.xpose.msra.mxu0 0.0
        %2032 = vmatprep.subr.mxu0 0.0
        %2033 = vmatpush1.xpose.msra.mxu0 0.0
        %2034 = vmatprep.subr.mxu0 0.0
        %2035 = vmatpush1.xpose.msra.mxu0 0.0
        %2036 = vmatprep.subr.mxu0 0.0
        %2037 = vmatpush1.xpose.msra.mxu0 0.0
        %2038 = vmatprep.subr.mxu0 0.0
        %2039 = vmatpush1.xpose.msra.mxu0 0.0
        %2040 = vmatprep.subr.mxu0 0.0
        %2041 = vmatpush1.xpose.msra.mxu0 0.0
        %2042 = vmatprep.subr.mxu0 0.0
        %2043 = vmatpush1.xpose.msra.mxu0 0.0
        %2044 = vmatprep.subr.mxu0 0.0
        %2045 = vmatpush1.xpose.msra.mxu0 0.0
        %2046 = vmatprep.subr.mxu0 0.0
        %2047 = vmatpush1.xpose.msra.mxu0 0.0
        %2048 = vmatprep.subr.mxu0 0.0
        %2049 = vmatpush1.xpose.msra.mxu0 0.0
        %2050 = vmatprep.subr.mxu0 0.0
        %2051 = vmatpush1.xpose.msra.mxu0 0.0
        %2052 = vmatprep.subr.mxu0 0.0
        %2053 = vmatpush1.xpose.msra.mxu0 0.0
        %2054 = vmatprep.subr.mxu0 0.0
        %2055 = vmatpush1.xpose.msra.mxu0 0.0
        %2056 = vmatprep.subr.mxu0 0.0
        %2057 = vmatpush1.xpose.msra.mxu0 0.0
        %2058 = vmatprep.subr.mxu0 0.0
        %2059 = vmatpush1.xpose.msra.mxu0 0.0
        %2060 = vmatprep.subr.mxu0 0.0
        %2061 = vmatpush1.xpose.msra.mxu0 0.0
        %2062 = vmatprep.subr.mxu0 0.0
        %2063 = vmatpush1.xpose.msra.mxu0 0.0
        %2064 = vmatprep.subr.mxu0 0.0
        %2065 = vmatpush1.xpose.msra.mxu0 0.0
        %2066 = vmatprep.subr.mxu0 0.0
        %2067 = vmatpush1.xpose.msra.mxu0 0.0
        %2068 = vmatprep.subr.mxu0 0.0
        %2069 = vmatpush1.xpose.msra.mxu0 0.0
        %2070 = vmatprep.subr.mxu0 0.0
        %2071 = vmatpush1.xpose.msra.mxu0 0.0
        %2072 = vmatprep.mubr.f32.mxu0 0.0
        %2073 = vmatmul.mubr.f32.gmra.mrb[0].mxu0 %v2004
        %v2074 = vpop.f32.mrb[0].mxu0
        %v2075 = vadd.f32 0.0, %v2074
        %v2076 = vpop.f32.mrb[0].mxu0
        %2077 = vdwg.mxu0
        %2078 = vrot.lane.b32.xlu0 %v524, 112
        %v2079 = vpop.permute.xlu0 %2078
        %2080 = vrot.lane.b32.xlu0 %v524, 80
        %v2081 = vpop.permute.xlu0 %2080
        %v2082 = vsel %vm530, %v2079, 0
        %v2084 = vsel %vm530, %v2081, 0
        %2086 = vmatprep.subr.mxu0 0.0
        %2087 = vmatpush1.xpose.msra.mxu0 %v2084
        %2088 = vmatprep.subr.mxu0 0.0
        %2089 = vmatpush1.xpose.msra.mxu0 0.0
        %2090 = vmatprep.subr.mxu0 0.0
        %2091 = vmatpush1.xpose.msra.mxu0 0.0
        %2092 = vmatprep.subr.mxu0 0.0
        %2093 = vmatpush1.xpose.msra.mxu0 0.0
        %2094 = vmatprep.subr.mxu0 0.0
        %2095 = vmatpush1.xpose.msra.mxu0 0.0
        %2096 = vmatprep.subr.mxu0 0.0
        %2097 = vmatpush1.xpose.msra.mxu0 0.0
        %2098 = vmatprep.subr.mxu0 0.0
        %2099 = vmatpush1.xpose.msra.mxu0 0.0
        %2100 = vmatprep.subr.mxu0 0.0
        %2101 = vmatpush1.xpose.msra.mxu0 0.0
        %2102 = vmatprep.subr.mxu0 0.0
        %2103 = vmatpush1.xpose.msra.mxu0 0.0
        %2104 = vmatprep.subr.mxu0 0.0
        %2105 = vmatpush1.xpose.msra.mxu0 0.0
        %2106 = vmatprep.subr.mxu0 0.0
        %2107 = vmatpush1.xpose.msra.mxu0 0.0
        %2108 = vmatprep.subr.mxu0 0.0
        %2109 = vmatpush1.xpose.msra.mxu0 0.0
        %2110 = vmatprep.subr.mxu0 0.0
        %2111 = vmatpush1.xpose.msra.mxu0 0.0
        %2112 = vmatprep.subr.mxu0 0.0
        %2113 = vmatpush1.xpose.msra.mxu0 0.0
        %2114 = vmatprep.subr.mxu0 0.0
        %2115 = vmatpush1.xpose.msra.mxu0 0.0
        %2116 = vmatprep.subr.mxu0 0.0
        %2117 = vmatpush1.xpose.msra.mxu0 0.0
        %2118 = vmatprep.subr.mxu0 0.0
        %2119 = vmatpush1.xpose.msra.mxu0 0.0
        %2120 = vmatprep.subr.mxu0 0.0
        %2121 = vmatpush1.xpose.msra.mxu0 0.0
        %2122 = vmatprep.subr.mxu0 0.0
        %2123 = vmatpush1.xpose.msra.mxu0 0.0
        %2124 = vmatprep.subr.mxu0 0.0
        %2125 = vmatpush1.xpose.msra.mxu0 0.0
        %2126 = vmatprep.subr.mxu0 0.0
        %2127 = vmatpush1.xpose.msra.mxu0 0.0
        %2128 = vmatprep.subr.mxu0 0.0
        %2129 = vmatpush1.xpose.msra.mxu0 0.0
        %2130 = vmatprep.subr.mxu0 0.0
        %2131 = vmatpush1.xpose.msra.mxu0 0.0
        %2132 = vmatprep.subr.mxu0 0.0
        %2133 = vmatpush1.xpose.msra.mxu0 0.0
        %2134 = vmatprep.subr.mxu0 0.0
        %2135 = vmatpush1.xpose.msra.mxu0 0.0
        %2136 = vmatprep.subr.mxu0 0.0
        %2137 = vmatpush1.xpose.msra.mxu0 0.0
        %2138 = vmatprep.subr.mxu0 0.0
        %2139 = vmatpush1.xpose.msra.mxu0 0.0
        %2140 = vmatprep.subr.mxu0 0.0
        %2141 = vmatpush1.xpose.msra.mxu0 0.0
        %2142 = vmatprep.subr.mxu0 0.0
        %2143 = vmatpush1.xpose.msra.mxu0 0.0
        %2144 = vmatprep.subr.mxu0 0.0
        %2145 = vmatpush1.xpose.msra.mxu0 0.0
        %2146 = vmatprep.subr.mxu0 0.0
        %2147 = vmatpush1.xpose.msra.mxu0 0.0
        %2148 = vmatprep.subr.mxu0 0.0
        %2149 = vmatpush1.xpose.msra.mxu0 0.0
        %2150 = vmatprep.mubr.f32.mxu0 0.0
        %2151 = vmatmul.mubr.f32.gmra.mrb[0].mxu0 %v2082
        %v2152 = vpop.f32.mrb[0].mxu0
        %v2153 = vadd.f32 0.0, %v2152
        %v2154 = vpop.f32.mrb[0].mxu0
        %2155 = vdwg.mxu0
        %v2156 = vsel %vm530, %v1919, -inf
        %2157 = vmax.xlane.f32.xlu0 %v2156
        %v2158 = vpop.xlane.xlu0 %2157
        %v2159 = vsel %vm530, %v1997, -inf
        %2160 = vmax.xlane.f32.xlu0 %v2159
        %v2161 = vpop.xlane.xlu0 %2160
        %v2162 = vsel %vm530, %v2075, -inf
        %2163 = vmax.xlane.f32.xlu0 %v2162
        %v2164 = vpop.xlane.xlu0 %2163
        %v2165 = vsel %vm530, %v2153, -inf
        %2166 = vmax.xlane.f32.xlu0 %v2165
        %v2167 = vpop.xlane.xlu0 %2166
        %v2168 = vsub.f32 %v1919, %v2158
        %v2169 = vsub.f32 %v1997, %v2161
        %v2170 = vsub.f32 %v2075, %v2164
        %v2171 = vsub.f32 %v2153, %v2167
        %v2172 = vmul.f32 %v2168, 1.442695
        %v2173 = vpow.pop %v2172
        %v2174 = vmul.f32 %v2169, 1.442695
        %v2175 = vpow.pop %v2174
        %v2176 = vmul.f32 %v2170, 1.442695
        %v2177 = vpow.pop %v2176
        %v2178 = vmul.f32 %v2171, 1.442695
        %v2179 = vpow.pop %v2178
        %v2180 = vsel %vm530, %v2173, 0.0
        %2181 = vadd.xlane.f32.xlu0 %v2180
        %v2182 = vpop.xlane.xlu0 %2181
        %v2183 = vsel %vm530, %v2175, 0.0
        %2184 = vadd.xlane.f32.xlu0 %v2183
        %v2185 = vpop.xlane.xlu0 %2184
        %v2186 = vsel %vm530, %v2177, 0.0
        %2187 = vadd.xlane.f32.xlu0 %v2186
        %v2188 = vpop.xlane.xlu0 %2187
        %v2189 = vsel %vm530, %v2179, 0.0
        %2190 = vadd.xlane.f32.xlu0 %v2189
        %v2191 = vpop.xlane.xlu0 %2190
        %v2192 = vrcp.pop %v2182
        %v2193 = vmul.f32 %v2173, %v2192
        %v2194 = vrcp.pop %v2185
        %v2195 = vmul.f32 %v2175, %v2194
        %v2196 = vrcp.pop %v2188
        %v2197 = vmul.f32 %v2177, %v2196
        %v2198 = vrcp.pop %v2191
        %v2199 = vmul.f32 %v2179, %v2198
        %2200 = vrot.lane.b32.xlu0 %v513, 48
        %v2201 = vpop.permute.xlu0 %2200
        %v2204 = vsel %vm530, %v2193, 0
        %2206 = vmatprep.subr.mxu0 0.0
        %2207 = vmatpush1.msra.mxu0 %v2201
        %2208 = vmatprep.subr.mxu0 0.0
        %2209 = vmatpush1.msra.mxu0 0.0
        %2210 = vmatprep.subr.mxu0 0.0
        %2211 = vmatpush1.msra.mxu0 0.0
        %2212 = vmatprep.subr.mxu0 0.0
        %2213 = vmatpush1.msra.mxu0 0.0
        %2214 = vmatprep.subr.mxu0 0.0
        %2215 = vmatpush1.msra.mxu0 0.0
        %2216 = vmatprep.subr.mxu0 0.0
        %2217 = vmatpush1.msra.mxu0 0.0
        %2218 = vmatprep.subr.mxu0 0.0
        %2219 = vmatpush1.msra.mxu0 0.0
        %2220 = vmatprep.subr.mxu0 0.0
        %2221 = vmatpush1.msra.mxu0 0.0
        %2222 = vmatprep.subr.mxu0 0.0
        %2223 = vmatpush1.msra.mxu0 0.0
        %2224 = vmatprep.subr.mxu0 0.0
        %2225 = vmatpush1.msra.mxu0 0.0
        %2226 = vmatprep.subr.mxu0 0.0
        %2227 = vmatpush1.msra.mxu0 0.0
        %2228 = vmatprep.subr.mxu0 0.0
        %2229 = vmatpush1.msra.mxu0 0.0
        %2230 = vmatprep.subr.mxu0 0.0
        %2231 = vmatpush1.msra.mxu0 0.0
        %2232 = vmatprep.subr.mxu0 0.0
        %2233 = vmatpush1.msra.mxu0 0.0
        %2234 = vmatprep.subr.mxu0 0.0
        %2235 = vmatpush1.msra.mxu0 0.0
        %2236 = vmatprep.subr.mxu0 0.0
        %2237 = vmatpush1.msra.mxu0 0.0
        %2238 = vmatprep.subr.mxu0 0.0
        %2239 = vmatpush1.msra.mxu0 0.0
        %2240 = vmatprep.subr.mxu0 0.0
        %2241 = vmatpush1.msra.mxu0 0.0
        %2242 = vmatprep.subr.mxu0 0.0
        %2243 = vmatpush1.msra.mxu0 0.0
        %2244 = vmatprep.subr.mxu0 0.0
        %2245 = vmatpush1.msra.mxu0 0.0
        %2246 = vmatprep.subr.mxu0 0.0
        %2247 = vmatpush1.msra.mxu0 0.0
        %2248 = vmatprep.subr.mxu0 0.0
        %2249 = vmatpush1.msra.mxu0 0.0
        %2250 = vmatprep.subr.mxu0 0.0
        %2251 = vmatpush1.msra.mxu0 0.0
        %2252 = vmatprep.subr.mxu0 0.0
        %2253 = vmatpush1.msra.mxu0 0.0
        %2254 = vmatprep.subr.mxu0 0.0
        %2255 = vmatpush1.msra.mxu0 0.0
        %2256 = vmatprep.subr.mxu0 0.0
        %2257 = vmatpush1.msra.mxu0 0.0
        %2258 = vmatprep.subr.mxu0 0.0
        %2259 = vmatpush1.msra.mxu0 0.0
        %2260 = vmatprep.subr.mxu0 0.0
        %2261 = vmatpush1.msra.mxu0 0.0
        %2262 = vmatprep.subr.mxu0 0.0
        %2263 = vmatpush1.msra.mxu0 0.0
        %2264 = vmatprep.subr.mxu0 0.0
        %2265 = vmatpush1.msra.mxu0 0.0
        %2266 = vmatprep.subr.mxu0 0.0
        %2267 = vmatpush1.msra.mxu0 0.0
        %2268 = vmatprep.subr.mxu0 0.0
        %2269 = vmatpush1.msra.mxu0 0.0
        %2270 = vmatprep.mubr.f32.mxu0 0.0
        %2271 = vmatmul.mubr.f32.gmra.mrb[0].mxu0 %v2204
        %v2272 = vpop.f32.mrb[0].mxu0
        %v2273 = vadd.f32 0.0, %v2272
        %v2274 = vpop.f32.mrb[0].mxu0
        %2275 = vdwg.mxu0
        %2276 = vrot.lane.b32.xlu0 %v516, 48
        %v2277 = vpop.permute.xlu0 %2276
        %v2280 = vsel %vm530, %v2195, 0
        %2282 = vmatprep.subr.mxu0 0.0
        %2283 = vmatpush1.msra.mxu0 %v2277
        %2284 = vmatprep.subr.mxu0 0.0
        %2285 = vmatpush1.msra.mxu0 0.0
        %2286 = vmatprep.subr.mxu0 0.0
        %2287 = vmatpush1.msra.mxu0 0.0
        %2288 = vmatprep.subr.mxu0 0.0
        %2289 = vmatpush1.msra.mxu0 0.0
        %2290 = vmatprep.subr.mxu0 0.0
        %2291 = vmatpush1.msra.mxu0 0.0
        %2292 = vmatprep.subr.mxu0 0.0
        %2293 = vmatpush1.msra.mxu0 0.0
        %2294 = vmatprep.subr.mxu0 0.0
        %2295 = vmatpush1.msra.mxu0 0.0
        %2296 = vmatprep.subr.mxu0 0.0
        %2297 = vmatpush1.msra.mxu0 0.0
        %2298 = vmatprep.subr.mxu0 0.0
        %2299 = vmatpush1.msra.mxu0 0.0
        %2300 = vmatprep.subr.mxu0 0.0
        %2301 = vmatpush1.msra.mxu0 0.0
        %2302 = vmatprep.subr.mxu0 0.0
        %2303 = vmatpush1.msra.mxu0 0.0
        %2304 = vmatprep.subr.mxu0 0.0
        %2305 = vmatpush1.msra.mxu0 0.0
        %2306 = vmatprep.subr.mxu0 0.0
        %2307 = vmatpush1.msra.mxu0 0.0
        %2308 = vmatprep.subr.mxu0 0.0
        %2309 = vmatpush1.msra.mxu0 0.0
        %2310 = vmatprep.subr.mxu0 0.0
        %2311 = vmatpush1.msra.mxu0 0.0
        %2312 = vmatprep.subr.mxu0 0.0
        %2313 = vmatpush1.msra.mxu0 0.0
        %2314 = vmatprep.subr.mxu0 0.0
        %2315 = vmatpush1.msra.mxu0 0.0
        %2316 = vmatprep.subr.mxu0 0.0
        %2317 = vmatpush1.msra.mxu0 0.0
        %2318 = vmatprep.subr.mxu0 0.0
        %2319 = vmatpush1.msra.mxu0 0.0
        %2320 = vmatprep.subr.mxu0 0.0
        %2321 = vmatpush1.msra.mxu0 0.0
        %2322 = vmatprep.subr.mxu0 0.0
        %2323 = vmatpush1.msra.mxu0 0.0
        %2324 = vmatprep.subr.mxu0 0.0
        %2325 = vmatpush1.msra.mxu0 0.0
        %2326 = vmatprep.subr.mxu0 0.0
        %2327 = vmatpush1.msra.mxu0 0.0
        %2328 = vmatprep.subr.mxu0 0.0
        %2329 = vmatpush1.msra.mxu0 0.0
        %2330 = vmatprep.subr.mxu0 0.0
        %2331 = vmatpush1.msra.mxu0 0.0
        %2332 = vmatprep.subr.mxu0 0.0
        %2333 = vmatpush1.msra.mxu0 0.0
        %2334 = vmatprep.subr.mxu0 0.0
        %2335 = vmatpush1.msra.mxu0 0.0
        %2336 = vmatprep.subr.mxu0 0.0
        %2337 = vmatpush1.msra.mxu0 0.0
        %2338 = vmatprep.subr.mxu0 0.0
        %2339 = vmatpush1.msra.mxu0 0.0
        %2340 = vmatprep.subr.mxu0 0.0
        %2341 = vmatpush1.msra.mxu0 0.0
        %2342 = vmatprep.subr.mxu0 0.0
        %2343 = vmatpush1.msra.mxu0 0.0
        %2344 = vmatprep.subr.mxu0 0.0
        %2345 = vmatpush1.msra.mxu0 0.0
        %2346 = vmatprep.mubr.f32.mxu0 0.0
        %2347 = vmatmul.mubr.f32.gmra.mrb[0].mxu0 %v2280
        %v2348 = vpop.f32.mrb[0].mxu0
        %v2349 = vadd.f32 0.0, %v2348
        %v2350 = vpop.f32.mrb[0].mxu0
        %2351 = vdwg.mxu0
        %2352 = vrot.lane.b32.xlu0 %v521, 48
        %v2353 = vpop.permute.xlu0 %2352
        %v2356 = vsel %vm530, %v2197, 0
        %2358 = vmatprep.subr.mxu0 0.0
        %2359 = vmatpush1.msra.mxu0 %v2353
        %2360 = vmatprep.subr.mxu0 0.0
        %2361 = vmatpush1.msra.mxu0 0.0
        %2362 = vmatprep.subr.mxu0 0.0
        %2363 = vmatpush1.msra.mxu0 0.0
        %2364 = vmatprep.subr.mxu0 0.0
        %2365 = vmatpush1.msra.mxu0 0.0
        %2366 = vmatprep.subr.mxu0 0.0
        %2367 = vmatpush1.msra.mxu0 0.0
        %2368 = vmatprep.subr.mxu0 0.0
        %2369 = vmatpush1.msra.mxu0 0.0
        %2370 = vmatprep.subr.mxu0 0.0
        %2371 = vmatpush1.msra.mxu0 0.0
        %2372 = vmatprep.subr.mxu0 0.0
        %2373 = vmatpush1.msra.mxu0 0.0
        %2374 = vmatprep.subr.mxu0 0.0
        %2375 = vmatpush1.msra.mxu0 0.0
        %2376 = vmatprep.subr.mxu0 0.0
        %2377 = vmatpush1.msra.mxu0 0.0
        %2378 = vmatprep.subr.mxu0 0.0
        %2379 = vmatpush1.msra.mxu0 0.0
        %2380 = vmatprep.subr.mxu0 0.0
        %2381 = vmatpush1.msra.mxu0 0.0
        %2382 = vmatprep.subr.mxu0 0.0
        %2383 = vmatpush1.msra.mxu0 0.0
        %2384 = vmatprep.subr.mxu0 0.0
        %2385 = vmatpush1.msra.mxu0 0.0
        %2386 = vmatprep.subr.mxu0 0.0
        %2387 = vmatpush1.msra.mxu0 0.0
        %2388 = vmatprep.subr.mxu0 0.0
        %2389 = vmatpush1.msra.mxu0 0.0
        %2390 = vmatprep.subr.mxu0 0.0
        %2391 = vmatpush1.msra.mxu0 0.0
        %2392 = vmatprep.subr.mxu0 0.0
        %2393 = vmatpush1.msra.mxu0 0.0
        %2394 = vmatprep.subr.mxu0 0.0
        %2395 = vmatpush1.msra.mxu0 0.0
        %2396 = vmatprep.subr.mxu0 0.0
        %2397 = vmatpush1.msra.mxu0 0.0
        %2398 = vmatprep.subr.mxu0 0.0
        %2399 = vmatpush1.msra.mxu0 0.0
        %2400 = vmatprep.subr.mxu0 0.0
        %2401 = vmatpush1.msra.mxu0 0.0
        %2402 = vmatprep.subr.mxu0 0.0
        %2403 = vmatpush1.msra.mxu0 0.0
        %2404 = vmatprep.subr.mxu0 0.0
        %2405 = vmatpush1.msra.mxu0 0.0
        %2406 = vmatprep.subr.mxu0 0.0
        %2407 = vmatpush1.msra.mxu0 0.0
        %2408 = vmatprep.subr.mxu0 0.0
        %2409 = vmatpush1.msra.mxu0 0.0
        %2410 = vmatprep.subr.mxu0 0.0
        %2411 = vmatpush1.msra.mxu0 0.0
        %2412 = vmatprep.subr.mxu0 0.0
        %2413 = vmatpush1.msra.mxu0 0.0
        %2414 = vmatprep.subr.mxu0 0.0
        %2415 = vmatpush1.msra.mxu0 0.0
        %2416 = vmatprep.subr.mxu0 0.0
        %2417 = vmatpush1.msra.mxu0 0.0
        %2418 = vmatprep.subr.mxu0 0.0
        %2419 = vmatpush1.msra.mxu0 0.0
        %2420 = vmatprep.subr.mxu0 0.0
        %2421 = vmatpush1.msra.mxu0 0.0
        %2422 = vmatprep.mubr.f32.mxu0 0.0
        %2423 = vmatmul.mubr.f32.gmra.mrb[0].mxu0 %v2356
        %v2424 = vpop.f32.mrb[0].mxu0
        %v2425 = vadd.f32 0.0, %v2424
        %v2426 = vpop.f32.mrb[0].mxu0
        %2427 = vdwg.mxu0
        %2428 = vrot.lane.b32.xlu0 %v524, 48
        %v2429 = vpop.permute.xlu0 %2428
        %v2432 = vsel %vm530, %v2199, 0
        %2434 = vmatprep.subr.mxu0 0.0
        %2435 = vmatpush1.msra.mxu0 %v2429
        %2436 = vmatprep.subr.mxu0 0.0
        %2437 = vmatpush1.msra.mxu0 0.0
        %2438 = vmatprep.subr.mxu0 0.0
        %2439 = vmatpush1.msra.mxu0 0.0
        %2440 = vmatprep.subr.mxu0 0.0
        %2441 = vmatpush1.msra.mxu0 0.0
        %2442 = vmatprep.subr.mxu0 0.0
        %2443 = vmatpush1.msra.mxu0 0.0
        %2444 = vmatprep.subr.mxu0 0.0
        %2445 = vmatpush1.msra.mxu0 0.0
        %2446 = vmatprep.subr.mxu0 0.0
        %2447 = vmatpush1.msra.mxu0 0.0
        %2448 = vmatprep.subr.mxu0 0.0
        %2449 = vmatpush1.msra.mxu0 0.0
        %2450 = vmatprep.subr.mxu0 0.0
        %2451 = vmatpush1.msra.mxu0 0.0
        %2452 = vmatprep.subr.mxu0 0.0
        %2453 = vmatpush1.msra.mxu0 0.0
        %2454 = vmatprep.subr.mxu0 0.0
        %2455 = vmatpush1.msra.mxu0 0.0
        %2456 = vmatprep.subr.mxu0 0.0
        %2457 = vmatpush1.msra.mxu0 0.0
        %2458 = vmatprep.subr.mxu0 0.0
        %2459 = vmatpush1.msra.mxu0 0.0
        %2460 = vmatprep.subr.mxu0 0.0
        %2461 = vmatpush1.msra.mxu0 0.0
        %2462 = vmatprep.subr.mxu0 0.0
        %2463 = vmatpush1.msra.mxu0 0.0
        %2464 = vmatprep.subr.mxu0 0.0
        %2465 = vmatpush1.msra.mxu0 0.0
        %2466 = vmatprep.subr.mxu0 0.0
        %2467 = vmatpush1.msra.mxu0 0.0
        %2468 = vmatprep.subr.mxu0 0.0
        %2469 = vmatpush1.msra.mxu0 0.0
        %2470 = vmatprep.subr.mxu0 0.0
        %2471 = vmatpush1.msra.mxu0 0.0
        %2472 = vmatprep.subr.mxu0 0.0
        %2473 = vmatpush1.msra.mxu0 0.0
        %2474 = vmatprep.subr.mxu0 0.0
        %2475 = vmatpush1.msra.mxu0 0.0
        %2476 = vmatprep.subr.mxu0 0.0
        %2477 = vmatpush1.msra.mxu0 0.0
        %2478 = vmatprep.subr.mxu0 0.0
        %2479 = vmatpush1.msra.mxu0 0.0
        %2480 = vmatprep.subr.mxu0 0.0
        %2481 = vmatpush1.msra.mxu0 0.0
        %2482 = vmatprep.subr.mxu0 0.0
        %2483 = vmatpush1.msra.mxu0 0.0
        %2484 = vmatprep.subr.mxu0 0.0
        %2485 = vmatpush1.msra.mxu0 0.0
        %2486 = vmatprep.subr.mxu0 0.0
        %2487 = vmatpush1.msra.mxu0 0.0
        %2488 = vmatprep.subr.mxu0 0.0
        %2489 = vmatpush1.msra.mxu0 0.0
        %2490 = vmatprep.subr.mxu0 0.0
        %2491 = vmatpush1.msra.mxu0 0.0
        %2492 = vmatprep.subr.mxu0 0.0
        %2493 = vmatpush1.msra.mxu0 0.0
        %2494 = vmatprep.subr.mxu0 0.0
        %2495 = vmatpush1.msra.mxu0 0.0
        %2496 = vmatprep.subr.mxu0 0.0
        %2497 = vmatpush1.msra.mxu0 0.0
        %2498 = vmatprep.mubr.f32.mxu0 0.0
        %2499 = vmatmul.mubr.f32.gmra.mrb[0].mxu0 %v2432
        %v2500 = vpop.f32.mrb[0].mxu0
        %v2501 = vadd.f32 0.0, %v2500
        %v2502 = vpop.f32.mrb[0].mxu0
        %2503 = vdwg.mxu0
        %2504 = vrot.lane.b32.xlu0 %v513, 104
        %v2505 = vpop.permute.xlu0 %2504
        %2506 = vrot.lane.b32.xlu0 %v513, 72
        %v2507 = vpop.permute.xlu0 %2506
        %v2508 = vsel %vm530, %v2505, 0
        %v2510 = vsel %vm530, %v2507, 0
        %2512 = vmatprep.subr.mxu0 0.0
        %2513 = vmatpush1.xpose.msra.mxu0 %v2510
        %2514 = vmatprep.subr.mxu0 0.0
        %2515 = vmatpush1.xpose.msra.mxu0 0.0
        %2516 = vmatprep.subr.mxu0 0.0
        %2517 = vmatpush1.xpose.msra.mxu0 0.0
        %2518 = vmatprep.subr.mxu0 0.0
        %2519 = vmatpush1.xpose.msra.mxu0 0.0
        %2520 = vmatprep.subr.mxu0 0.0
        %2521 = vmatpush1.xpose.msra.mxu0 0.0
        %2522 = vmatprep.subr.mxu0 0.0
        %2523 = vmatpush1.xpose.msra.mxu0 0.0
        %2524 = vmatprep.subr.mxu0 0.0
        %2525 = vmatpush1.xpose.msra.mxu0 0.0
        %2526 = vmatprep.subr.mxu0 0.0
        %2527 = vmatpush1.xpose.msra.mxu0 0.0
        %2528 = vmatprep.subr.mxu0 0.0
        %2529 = vmatpush1.xpose.msra.mxu0 0.0
        %2530 = vmatprep.subr.mxu0 0.0
        %2531 = vmatpush1.xpose.msra.mxu0 0.0
        %2532 = vmatprep.subr.mxu0 0.0
        %2533 = vmatpush1.xpose.msra.mxu0 0.0
        %2534 = vmatprep.subr.mxu0 0.0
        %2535 = vmatpush1.xpose.msra.mxu0 0.0
        %2536 = vmatprep.subr.mxu0 0.0
        %2537 = vmatpush1.xpose.msra.mxu0 0.0
        %2538 = vmatprep.subr.mxu0 0.0
        %2539 = vmatpush1.xpose.msra.mxu0 0.0
        %2540 = vmatprep.subr.mxu0 0.0
        %2541 = vmatpush1.xpose.msra.mxu0 0.0
        %2542 = vmatprep.subr.mxu0 0.0
        %2543 = vmatpush1.xpose.msra.mxu0 0.0
        %2544 = vmatprep.subr.mxu0 0.0
        %2545 = vmatpush1.xpose.msra.mxu0 0.0
        %2546 = vmatprep.subr.mxu0 0.0
        %2547 = vmatpush1.xpose.msra.mxu0 0.0
        %2548 = vmatprep.subr.mxu0 0.0
        %2549 = vmatpush1.xpose.msra.mxu0 0.0
        %2550 = vmatprep.subr.mxu0 0.0
        %2551 = vmatpush1.xpose.msra.mxu0 0.0
        %2552 = vmatprep.subr.mxu0 0.0
        %2553 = vmatpush1.xpose.msra.mxu0 0.0
        %2554 = vmatprep.subr.mxu0 0.0
        %2555 = vmatpush1.xpose.msra.mxu0 0.0
        %2556 = vmatprep.subr.mxu0 0.0
        %2557 = vmatpush1.xpose.msra.mxu0 0.0
        %2558 = vmatprep.subr.mxu0 0.0
        %2559 = vmatpush1.xpose.msra.mxu0 0.0
        %2560 = vmatprep.subr.mxu0 0.0
        %2561 = vmatpush1.xpose.msra.mxu0 0.0
        %2562 = vmatprep.subr.mxu0 0.0
        %2563 = vmatpush1.xpose.msra.mxu0 0.0
        %2564 = vmatprep.subr.mxu0 0.0
        %2565 = vmatpush1.xpose.msra.mxu0 0.0
        %2566 = vmatprep.subr.mxu0 0.0
        %2567 = vmatpush1.xpose.msra.mxu0 0.0
        %2568 = vmatprep.subr.mxu0 0.0
        %2569 = vmatpush1.xpose.msra.mxu0 0.0
        %2570 = vmatprep.subr.mxu0 0.0
        %2571 = vmatpush1.xpose.msra.mxu0 0.0
        %2572 = vmatprep.subr.mxu0 0.0
        %2573 = vmatpush1.xpose.msra.mxu0 0.0
        %2574 = vmatprep.subr.mxu0 0.0
        %2575 = vmatpush1.xpose.msra.mxu0 0.0
        %2576 = vmatprep.mubr.f32.mxu0 0.0
        %2577 = vmatmul.mubr.f32.gmra.mrb[0].mxu0 %v2508
        %v2578 = vpop.f32.mrb[0].mxu0
        %v2579 = vadd.f32 0.0, %v2578
        %v2580 = vpop.f32.mrb[0].mxu0
        %2581 = vdwg.mxu0
        %2582 = vrot.lane.b32.xlu0 %v516, 104
        %v2583 = vpop.permute.xlu0 %2582
        %2584 = vrot.lane.b32.xlu0 %v516, 72
        %v2585 = vpop.permute.xlu0 %2584
        %v2586 = vsel %vm530, %v2583, 0
        %v2588 = vsel %vm530, %v2585, 0
        %2590 = vmatprep.subr.mxu0 0.0
        %2591 = vmatpush1.xpose.msra.mxu0 %v2588
        %2592 = vmatprep.subr.mxu0 0.0
        %2593 = vmatpush1.xpose.msra.mxu0 0.0
        %2594 = vmatprep.subr.mxu0 0.0
        %2595 = vmatpush1.xpose.msra.mxu0 0.0
        %2596 = vmatprep.subr.mxu0 0.0
        %2597 = vmatpush1.xpose.msra.mxu0 0.0
        %2598 = vmatprep.subr.mxu0 0.0
        %2599 = vmatpush1.xpose.msra.mxu0 0.0
        %2600 = vmatprep.subr.mxu0 0.0
        %2601 = vmatpush1.xpose.msra.mxu0 0.0
        %2602 = vmatprep.subr.mxu0 0.0
        %2603 = vmatpush1.xpose.msra.mxu0 0.0
        %2604 = vmatprep.subr.mxu0 0.0
        %2605 = vmatpush1.xpose.msra.mxu0 0.0
        %2606 = vmatprep.subr.mxu0 0.0
        %2607 = vmatpush1.xpose.msra.mxu0 0.0
        %2608 = vmatprep.subr.mxu0 0.0
        %2609 = vmatpush1.xpose.msra.mxu0 0.0
        %2610 = vmatprep.subr.mxu0 0.0
        %2611 = vmatpush1.xpose.msra.mxu0 0.0
        %2612 = vmatprep.subr.mxu0 0.0
        %2613 = vmatpush1.xpose.msra.mxu0 0.0
        %2614 = vmatprep.subr.mxu0 0.0
        %2615 = vmatpush1.xpose.msra.mxu0 0.0
        %2616 = vmatprep.subr.mxu0 0.0
        %2617 = vmatpush1.xpose.msra.mxu0 0.0
        %2618 = vmatprep.subr.mxu0 0.0
        %2619 = vmatpush1.xpose.msra.mxu0 0.0
        %2620 = vmatprep.subr.mxu0 0.0
        %2621 = vmatpush1.xpose.msra.mxu0 0.0
        %2622 = vmatprep.subr.mxu0 0.0
        %2623 = vmatpush1.xpose.msra.mxu0 0.0
        %2624 = vmatprep.subr.mxu0 0.0
        %2625 = vmatpush1.xpose.msra.mxu0 0.0
        %2626 = vmatprep.subr.mxu0 0.0
        %2627 = vmatpush1.xpose.msra.mxu0 0.0
        %2628 = vmatprep.subr.mxu0 0.0
        %2629 = vmatpush1.xpose.msra.mxu0 0.0
        %2630 = vmatprep.subr.mxu0 0.0
        %2631 = vmatpush1.xpose.msra.mxu0 0.0
        %2632 = vmatprep.subr.mxu0 0.0
        %2633 = vmatpush1.xpose.msra.mxu0 0.0
        %2634 = vmatprep.subr.mxu0 0.0
        %2635 = vmatpush1.xpose.msra.mxu0 0.0
        %2636 = vmatprep.subr.mxu0 0.0
        %2637 = vmatpush1.xpose.msra.mxu0 0.0
        %2638 = vmatprep.subr.mxu0 0.0
        %2639 = vmatpush1.xpose.msra.mxu0 0.0
        %2640 = vmatprep.subr.mxu0 0.0
        %2641 = vmatpush1.xpose.msra.mxu0 0.0
        %2642 = vmatprep.subr.mxu0 0.0
        %2643 = vmatpush1.xpose.msra.mxu0 0.0
        %2644 = vmatprep.subr.mxu0 0.0
        %2645 = vmatpush1.xpose.msra.mxu0 0.0
        %2646 = vmatprep.subr.mxu0 0.0
        %2647 = vmatpush1.xpose.msra.mxu0 0.0
        %2648 = vmatprep.subr.mxu0 0.0
        %2649 = vmatpush1.xpose.msra.mxu0 0.0
        %2650 = vmatprep.subr.mxu0 0.0
        %2651 = vmatpush1.xpose.msra.mxu0 0.0
        %2652 = vmatprep.subr.mxu0 0.0
        %2653 = vmatpush1.xpose.msra.mxu0 0.0
        %2654 = vmatprep.mubr.f32.mxu0 0.0
        %2655 = vmatmul.mubr.f32.gmra.mrb[0].mxu0 %v2586
        %v2656 = vpop.f32.mrb[0].mxu0
        %v2657 = vadd.f32 0.0, %v2656
        %v2658 = vpop.f32.mrb[0].mxu0
        %2659 = vdwg.mxu0
        %2660 = vrot.lane.b32.xlu0 %v521, 104
        %v2661 = vpop.permute.xlu0 %2660
        %2662 = vrot.lane.b32.xlu0 %v521, 72
        %v2663 = vpop.permute.xlu0 %2662
        %v2664 = vsel %vm530, %v2661, 0
        %v2666 = vsel %vm530, %v2663, 0
        %2668 = vmatprep.subr.mxu0 0.0
        %2669 = vmatpush1.xpose.msra.mxu0 %v2666
        %2670 = vmatprep.subr.mxu0 0.0
        %2671 = vmatpush1.xpose.msra.mxu0 0.0
        %2672 = vmatprep.subr.mxu0 0.0
        %2673 = vmatpush1.xpose.msra.mxu0 0.0
        %2674 = vmatprep.subr.mxu0 0.0
        %2675 = vmatpush1.xpose.msra.mxu0 0.0
        %2676 = vmatprep.subr.mxu0 0.0
        %2677 = vmatpush1.xpose.msra.mxu0 0.0
        %2678 = vmatprep.subr.mxu0 0.0
        %2679 = vmatpush1.xpose.msra.mxu0 0.0
        %2680 = vmatprep.subr.mxu0 0.0
        %2681 = vmatpush1.xpose.msra.mxu0 0.0
        %2682 = vmatprep.subr.mxu0 0.0
        %2683 = vmatpush1.xpose.msra.mxu0 0.0
        %2684 = vmatprep.subr.mxu0 0.0
        %2685 = vmatpush1.xpose.msra.mxu0 0.0
        %2686 = vmatprep.subr.mxu0 0.0
        %2687 = vmatpush1.xpose.msra.mxu0 0.0
        %2688 = vmatprep.subr.mxu0 0.0
        %2689 = vmatpush1.xpose.msra.mxu0 0.0
        %2690 = vmatprep.subr.mxu0 0.0
        %2691 = vmatpush1.xpose.msra.mxu0 0.0
        %2692 = vmatprep.subr.mxu0 0.0
        %2693 = vmatpush1.xpose.msra.mxu0 0.0
        %2694 = vmatprep.subr.mxu0 0.0
        %2695 = vmatpush1.xpose.msra.mxu0 0.0
        %2696 = vmatprep.subr.mxu0 0.0
        %2697 = vmatpush1.xpose.msra.mxu0 0.0
        %2698 = vmatprep.subr.mxu0 0.0
        %2699 = vmatpush1.xpose.msra.mxu0 0.0
        %2700 = vmatprep.subr.mxu0 0.0
        %2701 = vmatpush1.xpose.msra.mxu0 0.0
        %2702 = vmatprep.subr.mxu0 0.0
        %2703 = vmatpush1.xpose.msra.mxu0 0.0
        %2704 = vmatprep.subr.mxu0 0.0
        %2705 = vmatpush1.xpose.msra.mxu0 0.0
        %2706 = vmatprep.subr.mxu0 0.0
        %2707 = vmatpush1.xpose.msra.mxu0 0.0
        %2708 = vmatprep.subr.mxu0 0.0
        %2709 = vmatpush1.xpose.msra.mxu0 0.0
        %2710 = vmatprep.subr.mxu0 0.0
        %2711 = vmatpush1.xpose.msra.mxu0 0.0
        %2712 = vmatprep.subr.mxu0 0.0
        %2713 = vmatpush1.xpose.msra.mxu0 0.0
        %2714 = vmatprep.subr.mxu0 0.0
        %2715 = vmatpush1.xpose.msra.mxu0 0.0
        %2716 = vmatprep.subr.mxu0 0.0
        %2717 = vmatpush1.xpose.msra.mxu0 0.0
        %2718 = vmatprep.subr.mxu0 0.0
        %2719 = vmatpush1.xpose.msra.mxu0 0.0
        %2720 = vmatprep.subr.mxu0 0.0
        %2721 = vmatpush1.xpose.msra.mxu0 0.0
        %2722 = vmatprep.subr.mxu0 0.0
        %2723 = vmatpush1.xpose.msra.mxu0 0.0
        %2724 = vmatprep.subr.mxu0 0.0
        %2725 = vmatpush1.xpose.msra.mxu0 0.0
        %2726 = vmatprep.subr.mxu0 0.0
        %2727 = vmatpush1.xpose.msra.mxu0 0.0
        %2728 = vmatprep.subr.mxu0 0.0
        %2729 = vmatpush1.xpose.msra.mxu0 0.0
        %2730 = vmatprep.subr.mxu0 0.0
        %2731 = vmatpush1.xpose.msra.mxu0 0.0
        %2732 = vmatprep.mubr.f32.mxu0 0.0
        %2733 = vmatmul.mubr.f32.gmra.mrb[0].mxu0 %v2664
        %v2734 = vpop.f32.mrb[0].mxu0
        %v2735 = vadd.f32 0.0, %v2734
        %v2736 = vpop.f32.mrb[0].mxu0
        %2737 = vdwg.mxu0
        %2738 = vrot.lane.b32.xlu0 %v524, 104
        %v2739 = vpop.permute.xlu0 %2738
        %2740 = vrot.lane.b32.xlu0 %v524, 72
        %v2741 = vpop.permute.xlu0 %2740
        %v2742 = vsel %vm530, %v2739, 0
        %v2744 = vsel %vm530, %v2741, 0
        %2746 = vmatprep.subr.mxu0 0.0
        %2747 = vmatpush1.xpose.msra.mxu0 %v2744
        %2748 = vmatprep.subr.mxu0 0.0
        %2749 = vmatpush1.xpose.msra.mxu0 0.0
        %2750 = vmatprep.subr.mxu0 0.0
        %2751 = vmatpush1.xpose.msra.mxu0 0.0
        %2752 = vmatprep.subr.mxu0 0.0
        %2753 = vmatpush1.xpose.msra.mxu0 0.0
        %2754 = vmatprep.subr.mxu0 0.0
        %2755 = vmatpush1.xpose.msra.mxu0 0.0
        %2756 = vmatprep.subr.mxu0 0.0
        %2757 = vmatpush1.xpose.msra.mxu0 0.0
        %2758 = vmatprep.subr.mxu0 0.0
        %2759 = vmatpush1.xpose.msra.mxu0 0.0
        %2760 = vmatprep.subr.mxu0 0.0
        %2761 = vmatpush1.xpose.msra.mxu0 0.0
        %2762 = vmatprep.subr.mxu0 0.0
        %2763 = vmatpush1.xpose.msra.mxu0 0.0
        %2764 = vmatprep.subr.mxu0 0.0
        %2765 = vmatpush1.xpose.msra.mxu0 0.0
        %2766 = vmatprep.subr.mxu0 0.0
        %2767 = vmatpush1.xpose.msra.mxu0 0.0
        %2768 = vmatprep.subr.mxu0 0.0
        %2769 = vmatpush1.xpose.msra.mxu0 0.0
        %2770 = vmatprep.subr.mxu0 0.0
        %2771 = vmatpush1.xpose.msra.mxu0 0.0
        %2772 = vmatprep.subr.mxu0 0.0
        %2773 = vmatpush1.xpose.msra.mxu0 0.0
        %2774 = vmatprep.subr.mxu0 0.0
        %2775 = vmatpush1.xpose.msra.mxu0 0.0
        %2776 = vmatprep.subr.mxu0 0.0
        %2777 = vmatpush1.xpose.msra.mxu0 0.0
        %2778 = vmatprep.subr.mxu0 0.0
        %2779 = vmatpush1.xpose.msra.mxu0 0.0
        %2780 = vmatprep.subr.mxu0 0.0
        %2781 = vmatpush1.xpose.msra.mxu0 0.0
        %2782 = vmatprep.subr.mxu0 0.0
        %2783 = vmatpush1.xpose.msra.mxu0 0.0
        %2784 = vmatprep.subr.mxu0 0.0
        %2785 = vmatpush1.xpose.msra.mxu0 0.0
        %2786 = vmatprep.subr.mxu0 0.0
        %2787 = vmatpush1.xpose.msra.mxu0 0.0
        %2788 = vmatprep.subr.mxu0 0.0
        %2789 = vmatpush1.xpose.msra.mxu0 0.0
        %2790 = vmatprep.subr.mxu0 0.0
        %2791 = vmatpush1.xpose.msra.mxu0 0.0
        %2792 = vmatprep.subr.mxu0 0.0
        %2793 = vmatpush1.xpose.msra.mxu0 0.0
        %2794 = vmatprep.subr.mxu0 0.0
        %2795 = vmatpush1.xpose.msra.mxu0 0.0
        %2796 = vmatprep.subr.mxu0 0.0
        %2797 = vmatpush1.xpose.msra.mxu0 0.0
        %2798 = vmatprep.subr.mxu0 0.0
        %2799 = vmatpush1.xpose.msra.mxu0 0.0
        %2800 = vmatprep.subr.mxu0 0.0
        %2801 = vmatpush1.xpose.msra.mxu0 0.0
        %2802 = vmatprep.subr.mxu0 0.0
        %2803 = vmatpush1.xpose.msra.mxu0 0.0
        %2804 = vmatprep.subr.mxu0 0.0
        %2805 = vmatpush1.xpose.msra.mxu0 0.0
        %2806 = vmatprep.subr.mxu0 0.0
        %2807 = vmatpush1.xpose.msra.mxu0 0.0
        %2808 = vmatprep.subr.mxu0 0.0
        %2809 = vmatpush1.xpose.msra.mxu0 0.0
        %2810 = vmatprep.mubr.f32.mxu0 0.0
        %2811 = vmatmul.mubr.f32.gmra.mrb[0].mxu0 %v2742
        %v2812 = vpop.f32.mrb[0].mxu0
        %v2813 = vadd.f32 0.0, %v2812
        %v2814 = vpop.f32.mrb[0].mxu0
        %2815 = vdwg.mxu0
        %v2816 = vsel %vm530, %v2579, -inf
        %2817 = vmax.xlane.f32.xlu0 %v2816
        %v2818 = vpop.xlane.xlu0 %2817
        %v2819 = vsel %vm530, %v2657, -inf
        %2820 = vmax.xlane.f32.xlu0 %v2819
        %v2821 = vpop.xlane.xlu0 %2820
        %v2822 = vsel %vm530, %v2735, -inf
        %2823 = vmax.xlane.f32.xlu0 %v2822
        %v2824 = vpop.xlane.xlu0 %2823
        %v2825 = vsel %vm530, %v2813, -inf
        %2826 = vmax.xlane.f32.xlu0 %v2825
        %v2827 = vpop.xlane.xlu0 %2826
        %v2828 = vsub.f32 %v2579, %v2818
        %v2829 = vsub.f32 %v2657, %v2821
        %v2830 = vsub.f32 %v2735, %v2824
        %v2831 = vsub.f32 %v2813, %v2827
        %v2832 = vmul.f32 %v2828, 1.442695
        %v2833 = vpow.pop %v2832
        %v2834 = vmul.f32 %v2829, 1.442695
        %v2835 = vpow.pop %v2834
        %v2836 = vmul.f32 %v2830, 1.442695
        %v2837 = vpow.pop %v2836
        %v2838 = vmul.f32 %v2831, 1.442695
        %v2839 = vpow.pop %v2838
        %v2840 = vsel %vm530, %v2833, 0.0
        %2841 = vadd.xlane.f32.xlu0 %v2840
        %v2842 = vpop.xlane.xlu0 %2841
        %v2843 = vsel %vm530, %v2835, 0.0
        %2844 = vadd.xlane.f32.xlu0 %v2843
        %v2845 = vpop.xlane.xlu0 %2844
        %v2846 = vsel %vm530, %v2837, 0.0
        %2847 = vadd.xlane.f32.xlu0 %v2846
        %v2848 = vpop.xlane.xlu0 %2847
        %v2849 = vsel %vm530, %v2839, 0.0
        %2850 = vadd.xlane.f32.xlu0 %v2849
        %v2851 = vpop.xlane.xlu0 %2850
        %v2852 = vrcp.pop %v2842
        %v2853 = vmul.f32 %v2833, %v2852
        %v2854 = vrcp.pop %v2845
        %v2855 = vmul.f32 %v2835, %v2854
        %v2856 = vrcp.pop %v2848
        %v2857 = vmul.f32 %v2837, %v2856
        %v2858 = vrcp.pop %v2851
        %v2859 = vmul.f32 %v2839, %v2858
        %2860 = vrot.lane.b32.xlu0 %v513, 40
        %v2861 = vpop.permute.xlu0 %2860
        %v2864 = vsel %vm530, %v2853, 0
        %2866 = vmatprep.subr.mxu0 0.0
        %2867 = vmatpush1.msra.mxu0 %v2861
        %2868 = vmatprep.subr.mxu0 0.0
        %2869 = vmatpush1.msra.mxu0 0.0
        %2870 = vmatprep.subr.mxu0 0.0
        %2871 = vmatpush1.msra.mxu0 0.0
        %2872 = vmatprep.subr.mxu0 0.0
        %2873 = vmatpush1.msra.mxu0 0.0
        %2874 = vmatprep.subr.mxu0 0.0
        %2875 = vmatpush1.msra.mxu0 0.0
        %2876 = vmatprep.subr.mxu0 0.0
        %2877 = vmatpush1.msra.mxu0 0.0
        %2878 = vmatprep.subr.mxu0 0.0
        %2879 = vmatpush1.msra.mxu0 0.0
        %2880 = vmatprep.subr.mxu0 0.0
        %2881 = vmatpush1.msra.mxu0 0.0
        %2882 = vmatprep.subr.mxu0 0.0
        %2883 = vmatpush1.msra.mxu0 0.0
        %2884 = vmatprep.subr.mxu0 0.0
        %2885 = vmatpush1.msra.mxu0 0.0
        %2886 = vmatprep.subr.mxu0 0.0
        %2887 = vmatpush1.msra.mxu0 0.0
        %2888 = vmatprep.subr.mxu0 0.0
        %2889 = vmatpush1.msra.mxu0 0.0
        %2890 = vmatprep.subr.mxu0 0.0
        %2891 = vmatpush1.msra.mxu0 0.0
        %2892 = vmatprep.subr.mxu0 0.0
        %2893 = vmatpush1.msra.mxu0 0.0
        %2894 = vmatprep.subr.mxu0 0.0
        %2895 = vmatpush1.msra.mxu0 0.0
        %2896 = vmatprep.subr.mxu0 0.0
        %2897 = vmatpush1.msra.mxu0 0.0
        %2898 = vmatprep.subr.mxu0 0.0
        %2899 = vmatpush1.msra.mxu0 0.0
        %2900 = vmatprep.subr.mxu0 0.0
        %2901 = vmatpush1.msra.mxu0 0.0
        %2902 = vmatprep.subr.mxu0 0.0
        %2903 = vmatpush1.msra.mxu0 0.0
        %2904 = vmatprep.subr.mxu0 0.0
        %2905 = vmatpush1.msra.mxu0 0.0
        %2906 = vmatprep.subr.mxu0 0.0
        %2907 = vmatpush1.msra.mxu0 0.0
        %2908 = vmatprep.subr.mxu0 0.0
        %2909 = vmatpush1.msra.mxu0 0.0
        %2910 = vmatprep.subr.mxu0 0.0
        %2911 = vmatpush1.msra.mxu0 0.0
        %2912 = vmatprep.subr.mxu0 0.0
        %2913 = vmatpush1.msra.mxu0 0.0
        %2914 = vmatprep.subr.mxu0 0.0
        %2915 = vmatpush1.msra.mxu0 0.0
        %2916 = vmatprep.subr.mxu0 0.0
        %2917 = vmatpush1.msra.mxu0 0.0
        %2918 = vmatprep.subr.mxu0 0.0
        %2919 = vmatpush1.msra.mxu0 0.0
        %2920 = vmatprep.subr.mxu0 0.0
        %2921 = vmatpush1.msra.mxu0 0.0
        %2922 = vmatprep.subr.mxu0 0.0
        %2923 = vmatpush1.msra.mxu0 0.0
        %2924 = vmatprep.subr.mxu0 0.0
        %2925 = vmatpush1.msra.mxu0 0.0
        %2926 = vmatprep.subr.mxu0 0.0
        %2927 = vmatpush1.msra.mxu0 0.0
        %2928 = vmatprep.subr.mxu0 0.0
        %2929 = vmatpush1.msra.mxu0 0.0
        %2930 = vmatprep.mubr.f32.mxu0 0.0
        %2931 = vmatmul.mubr.f32.gmra.mrb[0].mxu0 %v2864
        %v2932 = vpop.f32.mrb[0].mxu0
        %v2933 = vadd.f32 0.0, %v2932
        %v2934 = vpop.f32.mrb[0].mxu0
        %2935 = vdwg.mxu0
        %2936 = vrot.lane.b32.xlu0 %v516, 40
        %v2937 = vpop.permute.xlu0 %2936
        %v2940 = vsel %vm530, %v2855, 0
        %2942 = vmatprep.subr.mxu0 0.0
        %2943 = vmatpush1.msra.mxu0 %v2937
        %2944 = vmatprep.subr.mxu0 0.0
        %2945 = vmatpush1.msra.mxu0 0.0
        %2946 = vmatprep.subr.mxu0 0.0
        %2947 = vmatpush1.msra.mxu0 0.0
        %2948 = vmatprep.subr.mxu0 0.0
        %2949 = vmatpush1.msra.mxu0 0.0
        %2950 = vmatprep.subr.mxu0 0.0
        %2951 = vmatpush1.msra.mxu0 0.0
        %2952 = vmatprep.subr.mxu0 0.0
        %2953 = vmatpush1.msra.mxu0 0.0
        %2954 = vmatprep.subr.mxu0 0.0
        %2955 = vmatpush1.msra.mxu0 0.0
        %2956 = vmatprep.subr.mxu0 0.0
        %2957 = vmatpush1.msra.mxu0 0.0
        %2958 = vmatprep.subr.mxu0 0.0
        %2959 = vmatpush1.msra.mxu0 0.0
        %2960 = vmatprep.subr.mxu0 0.0
        %2961 = vmatpush1.msra.mxu0 0.0
        %2962 = vmatprep.subr.mxu0 0.0
        %2963 = vmatpush1.msra.mxu0 0.0
        %2964 = vmatprep.subr.mxu0 0.0
        %2965 = vmatpush1.msra.mxu0 0.0
        %2966 = vmatprep.subr.mxu0 0.0
        %2967 = vmatpush1.msra.mxu0 0.0
        %2968 = vmatprep.subr.mxu0 0.0
        %2969 = vmatpush1.msra.mxu0 0.0
        %2970 = vmatprep.subr.mxu0 0.0
        %2971 = vmatpush1.msra.mxu0 0.0
        %2972 = vmatprep.subr.mxu0 0.0
        %2973 = vmatpush1.msra.mxu0 0.0
        %2974 = vmatprep.subr.mxu0 0.0
        %2975 = vmatpush1.msra.mxu0 0.0
        %2976 = vmatprep.subr.mxu0 0.0
        %2977 = vmatpush1.msra.mxu0 0.0
        %2978 = vmatprep.subr.mxu0 0.0
        %2979 = vmatpush1.msra.mxu0 0.0
        %2980 = vmatprep.subr.mxu0 0.0
        %2981 = vmatpush1.msra.mxu0 0.0
        %2982 = vmatprep.subr.mxu0 0.0
        %2983 = vmatpush1.msra.mxu0 0.0
        %2984 = vmatprep.subr.mxu0 0.0
        %2985 = vmatpush1.msra.mxu0 0.0
        %2986 = vmatprep.subr.mxu0 0.0
        %2987 = vmatpush1.msra.mxu0 0.0
        %2988 = vmatprep.subr.mxu0 0.0
        %2989 = vmatpush1.msra.mxu0 0.0
        %2990 = vmatprep.subr.mxu0 0.0
        %2991 = vmatpush1.msra.mxu0 0.0
        %2992 = vmatprep.subr.mxu0 0.0
        %2993 = vmatpush1.msra.mxu0 0.0
        %2994 = vmatprep.subr.mxu0 0.0
        %2995 = vmatpush1.msra.mxu0 0.0
        %2996 = vmatprep.subr.mxu0 0.0
        %2997 = vmatpush1.msra.mxu0 0.0
        %2998 = vmatprep.subr.mxu0 0.0
        %2999 = vmatpush1.msra.mxu0 0.0
        %3000 = vmatprep.subr.mxu0 0.0
        %3001 = vmatpush1.msra.mxu0 0.0
        %3002 = vmatprep.subr.mxu0 0.0
        %3003 = vmatpush1.msra.mxu0 0.0
        %3004 = vmatprep.subr.mxu0 0.0
        %3005 = vmatpush1.msra.mxu0 0.0
        %3006 = vmatprep.mubr.f32.mxu0 0.0
        %3007 = vmatmul.mubr.f32.gmra.mrb[0].mxu0 %v2940
        %v3008 = vpop.f32.mrb[0].mxu0
        %v3009 = vadd.f32 0.0, %v3008
        %v3010 = vpop.f32.mrb[0].mxu0
        %3011 = vdwg.mxu0
        %3012 = vrot.lane.b32.xlu0 %v521, 40
        %v3013 = vpop.permute.xlu0 %3012
        %v3016 = vsel %vm530, %v2857, 0
        %3018 = vmatprep.subr.mxu0 0.0
        %3019 = vmatpush1.msra.mxu0 %v3013
        %3020 = vmatprep.subr.mxu0 0.0
        %3021 = vmatpush1.msra.mxu0 0.0
        %3022 = vmatprep.subr.mxu0 0.0
        %3023 = vmatpush1.msra.mxu0 0.0
        %3024 = vmatprep.subr.mxu0 0.0
        %3025 = vmatpush1.msra.mxu0 0.0
        %3026 = vmatprep.subr.mxu0 0.0
        %3027 = vmatpush1.msra.mxu0 0.0
        %3028 = vmatprep.subr.mxu0 0.0
        %3029 = vmatpush1.msra.mxu0 0.0
        %3030 = vmatprep.subr.mxu0 0.0
        %3031 = vmatpush1.msra.mxu0 0.0
        %3032 = vmatprep.subr.mxu0 0.0
        %3033 = vmatpush1.msra.mxu0 0.0
        %3034 = vmatprep.subr.mxu0 0.0
        %3035 = vmatpush1.msra.mxu0 0.0
        %3036 = vmatprep.subr.mxu0 0.0
        %3037 = vmatpush1.msra.mxu0 0.0
        %3038 = vmatprep.subr.mxu0 0.0
        %3039 = vmatpush1.msra.mxu0 0.0
        %3040 = vmatprep.subr.mxu0 0.0
        %3041 = vmatpush1.msra.mxu0 0.0
        %3042 = vmatprep.subr.mxu0 0.0
        %3043 = vmatpush1.msra.mxu0 0.0
        %3044 = vmatprep.subr.mxu0 0.0
        %3045 = vmatpush1.msra.mxu0 0.0
        %3046 = vmatprep.subr.mxu0 0.0
        %3047 = vmatpush1.msra.mxu0 0.0
        %3048 = vmatprep.subr.mxu0 0.0
        %3049 = vmatpush1.msra.mxu0 0.0
        %3050 = vmatprep.subr.mxu0 0.0
        %3051 = vmatpush1.msra.mxu0 0.0
        %3052 = vmatprep.subr.mxu0 0.0
        %3053 = vmatpush1.msra.mxu0 0.0
        %3054 = vmatprep.subr.mxu0 0.0
        %3055 = vmatpush1.msra.mxu0 0.0
        %3056 = vmatprep.subr.mxu0 0.0
        %3057 = vmatpush1.msra.mxu0 0.0
        %3058 = vmatprep.subr.mxu0 0.0
        %3059 = vmatpush1.msra.mxu0 0.0
        %3060 = vmatprep.subr.mxu0 0.0
        %3061 = vmatpush1.msra.mxu0 0.0
        %3062 = vmatprep.subr.mxu0 0.0
        %3063 = vmatpush1.msra.mxu0 0.0
        %3064 = vmatprep.subr.mxu0 0.0
        %3065 = vmatpush1.msra.mxu0 0.0
        %3066 = vmatprep.subr.mxu0 0.0
        %3067 = vmatpush1.msra.mxu0 0.0
        %3068 = vmatprep.subr.mxu0 0.0
        %3069 = vmatpush1.msra.mxu0 0.0
        %3070 = vmatprep.subr.mxu0 0.0
        %3071 = vmatpush1.msra.mxu0 0.0
        %3072 = vmatprep.subr.mxu0 0.0
        %3073 = vmatpush1.msra.mxu0 0.0
        %3074 = vmatprep.subr.mxu0 0.0
        %3075 = vmatpush1.msra.mxu0 0.0
        %3076 = vmatprep.subr.mxu0 0.0
        %3077 = vmatpush1.msra.mxu0 0.0
        %3078 = vmatprep.subr.mxu0 0.0
        %3079 = vmatpush1.msra.mxu0 0.0
        %3080 = vmatprep.subr.mxu0 0.0
        %3081 = vmatpush1.msra.mxu0 0.0
        %3082 = vmatprep.mubr.f32.mxu0 0.0
        %3083 = vmatmul.mubr.f32.gmra.mrb[0].mxu0 %v3016
        %v3084 = vpop.f32.mrb[0].mxu0
        %v3085 = vadd.f32 0.0, %v3084
        %v3086 = vpop.f32.mrb[0].mxu0
        %3087 = vdwg.mxu0
        %3088 = vrot.lane.b32.xlu0 %v524, 40
        %v3089 = vpop.permute.xlu0 %3088
        %v3092 = vsel %vm530, %v2859, 0
        %3094 = vmatprep.subr.mxu0 0.0
        %3095 = vmatpush1.msra.mxu0 %v3089
        %3096 = vmatprep.subr.mxu0 0.0
        %3097 = vmatpush1.msra.mxu0 0.0
        %3098 = vmatprep.subr.mxu0 0.0
        %3099 = vmatpush1.msra.mxu0 0.0
        %3100 = vmatprep.subr.mxu0 0.0
        %3101 = vmatpush1.msra.mxu0 0.0
        %3102 = vmatprep.subr.mxu0 0.0
        %3103 = vmatpush1.msra.mxu0 0.0
        %3104 = vmatprep.subr.mxu0 0.0
        %3105 = vmatpush1.msra.mxu0 0.0
        %3106 = vmatprep.subr.mxu0 0.0
        %3107 = vmatpush1.msra.mxu0 0.0
        %3108 = vmatprep.subr.mxu0 0.0
        %3109 = vmatpush1.msra.mxu0 0.0
        %3110 = vmatprep.subr.mxu0 0.0
        %3111 = vmatpush1.msra.mxu0 0.0
        %3112 = vmatprep.subr.mxu0 0.0
        %3113 = vmatpush1.msra.mxu0 0.0
        %3114 = vmatprep.subr.mxu0 0.0
        %3115 = vmatpush1.msra.mxu0 0.0
        %3116 = vmatprep.subr.mxu0 0.0
        %3117 = vmatpush1.msra.mxu0 0.0
        %3118 = vmatprep.subr.mxu0 0.0
        %3119 = vmatpush1.msra.mxu0 0.0
        %3120 = vmatprep.subr.mxu0 0.0
        %3121 = vmatpush1.msra.mxu0 0.0
        %3122 = vmatprep.subr.mxu0 0.0
        %3123 = vmatpush1.msra.mxu0 0.0
        %3124 = vmatprep.subr.mxu0 0.0
        %3125 = vmatpush1.msra.mxu0 0.0
        %3126 = vmatprep.subr.mxu0 0.0
        %3127 = vmatpush1.msra.mxu0 0.0
        %3128 = vmatprep.subr.mxu0 0.0
        %3129 = vmatpush1.msra.mxu0 0.0
        %3130 = vmatprep.subr.mxu0 0.0
        %3131 = vmatpush1.msra.mxu0 0.0
        %3132 = vmatprep.subr.mxu0 0.0
        %3133 = vmatpush1.msra.mxu0 0.0
        %3134 = vmatprep.subr.mxu0 0.0
        %3135 = vmatpush1.msra.mxu0 0.0
        %3136 = vmatprep.subr.mxu0 0.0
        %3137 = vmatpush1.msra.mxu0 0.0
        %3138 = vmatprep.subr.mxu0 0.0
        %3139 = vmatpush1.msra.mxu0 0.0
        %3140 = vmatprep.subr.mxu0 0.0
        %3141 = vmatpush1.msra.mxu0 0.0
        %3142 = vmatprep.subr.mxu0 0.0
        %3143 = vmatpush1.msra.mxu0 0.0
        %3144 = vmatprep.subr.mxu0 0.0
        %3145 = vmatpush1.msra.mxu0 0.0
        %3146 = vmatprep.subr.mxu0 0.0
        %3147 = vmatpush1.msra.mxu0 0.0
        %3148 = vmatprep.subr.mxu0 0.0
        %3149 = vmatpush1.msra.mxu0 0.0
        %3150 = vmatprep.subr.mxu0 0.0
        %3151 = vmatpush1.msra.mxu0 0.0
        %3152 = vmatprep.subr.mxu0 0.0
        %3153 = vmatpush1.msra.mxu0 0.0
        %3154 = vmatprep.subr.mxu0 0.0
        %3155 = vmatpush1.msra.mxu0 0.0
        %3156 = vmatprep.subr.mxu0 0.0
        %3157 = vmatpush1.msra.mxu0 0.0
        %3158 = vmatprep.mubr.f32.mxu0 0.0
        %3159 = vmatmul.mubr.f32.gmra.mrb[0].mxu0 %v3092
        %v3160 = vpop.f32.mrb[0].mxu0
        %v3161 = vadd.f32 0.0, %v3160
        %v3162 = vpop.f32.mrb[0].mxu0
        %3163 = vdwg.mxu0
        %3168 = vrot.lane.b32.xlu0 %v1613, 8
        %v3169 = vpop.permute.xlu0 %3168
        %3170 = vrot.lane.b32.xlu0 %v1689, 8
        %v3171 = vpop.permute.xlu0 %3170
        %3172 = vrot.lane.b32.xlu0 %v1765, 8
        %v3173 = vpop.permute.xlu0 %3172
        %3174 = vrot.lane.b32.xlu0 %v1841, 8
        %v3175 = vpop.permute.xlu0 %3174
        %3184 = vrot.lane.b32.xlu0 %v2273, 16
        %v3185 = vpop.permute.xlu0 %3184
        %3186 = vrot.lane.b32.xlu0 %v2349, 16
        %v3187 = vpop.permute.xlu0 %3186
        %3188 = vrot.lane.b32.xlu0 %v2425, 16
        %v3189 = vpop.permute.xlu0 %3188
        %3190 = vrot.lane.b32.xlu0 %v2501, 16
        %v3191 = vpop.permute.xlu0 %3190
        %3200 = vrot.lane.b32.xlu0 %v2933, 24
        %v3201 = vpop.permute.xlu0 %3200
        %3202 = vrot.lane.b32.xlu0 %v3009, 24
        %v3203 = vpop.permute.xlu0 %3202
        %3204 = vrot.lane.b32.xlu0 %v3085, 24
        %v3205 = vpop.permute.xlu0 %3204
        %3206 = vrot.lane.b32.xlu0 %v3161, 24
        %v3207 = vpop.permute.xlu0 %3206
        %v3212 = vsel %vm530, %v953, %v3169
        %v3213 = vsel %vm530, %v1029, %v3171
        %v3214 = vsel %vm530, %v1105, %v3173
        %v3215 = vsel %vm530, %v1181, %v3175
        %vm3216 = vcmask 130048
        %v3217 = vsel %vm3216, %v3212, %v3185
        %v3218 = vsel %vm3216, %v3213, %v3187
        %v3219 = vsel %vm3216, %v3214, %v3189
        %v3220 = vsel %vm3216, %v3215, %v3191
        %vm3221 = vcmask 195584
        %v3222 = vsel %vm3221, %v3217, %v3201
        %v3223 = vsel %vm3221, %v3218, %v3203
        %v3224 = vsel %vm3221, %v3219, %v3205
        %v3225 = vsel %vm3221, %v3220, %v3207
        %v3226 = vpack.c.bf16 %v3223, %v3222
        %v3227 = vpack.c.bf16 %v3225, %v3224
        %v3228 = vld [vmem:[%s3] sm:$0xf]
        %v3229 = vld [vmem:[%s3 + $0x4] sm:$0xf]
        %v3230 = vld [vmem:[%s3 + $0x8] sm:$0xf]
        %v3231 = vld [vmem:[%s3 + $0xc] sm:$0xf]
        %v3232 = vld [vmem:[%s4] sm:$0x1]
        %v3234 = vlaneseq
        %v3235 = vshrl.u32 %v3234, 7
        %v3236 = vsub.s32 0, %v3235
        %v3237 = vrot.slane %v3232, %v3236
        %v3243 = vunpack.c.l.b16 %v3228
        %v3244 = vunpack.c.l.b16 %v3229
        %v3245 = vunpack.c.l.b16 %v3230
        %v3246 = vunpack.c.l.b16 %v3231
        %v3247 = vpack.c.b16 %v3244, %v3243
        %v3248 = vpack.c.b16 %v3246, %v3245
        %v3252 = vsel %vm471, %v3226, 0
        %v3255 = vsel %vm471, %v3227, 0
        %3257 = vmatprep.subr.bf16.mxu0 0
        %3258 = vmatpush1.bf16.msra.mxu0 %v3247
        %3259 = vmatprep.subr.bf16.mxu0 0
        %3260 = vmatpush1.bf16.msra.mxu0 %v3248
        %3261 = vmatprep.subr.bf16.mxu0 0
        %3262 = vmatpush1.bf16.msra.mxu0 0
        %3263 = vmatprep.subr.bf16.mxu0 0
        %3264 = vmatpush1.bf16.msra.mxu0 0
        %3265 = vmatprep.subr.bf16.mxu0 0
        %3266 = vmatpush1.bf16.msra.mxu0 0
        %3267 = vmatprep.subr.bf16.mxu0 0
        %3268 = vmatpush1.bf16.msra.mxu0 0
        %3269 = vmatprep.subr.bf16.mxu0 0
        %3270 = vmatpush1.bf16.msra.mxu0 0
        %3271 = vmatprep.subr.bf16.mxu0 0
        %3272 = vmatpush1.bf16.msra.mxu0 0
        %3273 = vmatprep.subr.bf16.mxu0 0
        %3274 = vmatpush1.bf16.msra.mxu0 0
        %3275 = vmatprep.subr.bf16.mxu0 0
        %3276 = vmatpush1.bf16.msra.mxu0 0
        %3277 = vmatprep.subr.bf16.mxu0 0
        %3278 = vmatpush1.bf16.msra.mxu0 0
        %3279 = vmatprep.subr.bf16.mxu0 0
        %3280 = vmatpush1.bf16.msra.mxu0 0
        %3281 = vmatprep.subr.bf16.mxu0 0
        %3282 = vmatpush1.bf16.msra.mxu0 0
        %3283 = vmatprep.subr.bf16.mxu0 0
        %3284 = vmatpush1.bf16.msra.mxu0 0
        %3285 = vmatprep.subr.bf16.mxu0 0
        %3286 = vmatpush1.bf16.msra.mxu0 0
        %3287 = vmatprep.subr.bf16.mxu0 0
        %3288 = vmatpush1.bf16.msra.mxu0 0
        %3289 = vmatprep.mubr.bf16.mxu0 0
        %3290 = vmatmul.mubr.bf16.gmra.mrb[0].mxu0 %v3252
        %v3291 = vpop.f32.mrb[0].mxu0
        %v3292 = vadd.f32 %v3237, %v3291
        %v3293 = vpop.f32.mrb[0].mxu0
        %v3294 = vpop.f32.mrb[0].mxu0
        %v3295 = vadd.f32 %v3237, %v3294
        %v3296 = vpop.f32.mrb[0].mxu0
        %3297 = vmatprep.mubr.bf16.mxu0 0
        %3298 = vmatmul.mubr.bf16.gmra.mrb[0].mxu0 %v3255
        %v3299 = vpop.f32.mrb[0].mxu0
        %v3300 = vadd.f32 %v3237, %v3299
        %v3301 = vpop.f32.mrb[0].mxu0
        %v3302 = vpop.f32.mrb[0].mxu0
        %v3303 = vadd.f32 %v3237, %v3302
        %v3304 = vpop.f32.mrb[0].mxu0
        %3305 = vdwg.mxu0
        %v3306 = vadd.f32 %v3292, %v442
        %v3307 = vadd.f32 %v3295, %v443
        %v3308 = vadd.f32 %v3300, %v444
        %v3309 = vadd.f32 %v3303, %v445
        %v3310 = vsel %vm471, %v3306, 0.0
        %3311 = vadd.xlane.f32.xlu0 %v3310
        %v3312 = vpop.xlane.xlu0 %3311
        %v3313 = vsel %vm471, %v3307, 0.0
        %3314 = vadd.xlane.f32.xlu0 %v3313
        %v3315 = vpop.xlane.xlu0 %3314
        %v3316 = vsel %vm471, %v3308, 0.0
        %3317 = vadd.xlane.f32.xlu0 %v3316
        %v3318 = vpop.xlane.xlu0 %3317
        %v3319 = vsel %vm471, %v3309, 0.0
        %3320 = vadd.xlane.f32.xlu0 %v3319
        %v3321 = vpop.xlane.xlu0 %3320
        %v3322 = vrcp.pop 32.0
        %v3323 = vmul.f32 %v3312, %v3322
        %v3324 = vmul.f32 %v3315, %v3322
        %v3325 = vmul.f32 %v3318, %v3322
        %v3326 = vmul.f32 %v3321, %v3322
        %v3327 = vsub.f32 %v3306, %v3323
        %v3328 = vsub.f32 %v3307, %v3324
        %v3329 = vsub.f32 %v3308, %v3325
        %v3330 = vsub.f32 %v3309, %v3326
        %v3331 = vmul.f32 %v3327, %v3327
        %v3332 = vmul.f32 %v3328, %v3328
        %v3333 = vmul.f32 %v3329, %v3329
        %v3334 = vmul.f32 %v3330, %v3330
        %v3335 = vsel %vm471, %v3331, 0.0
        %3336 = vadd.xlane.f32.xlu0 %v3335
        %v3337 = vpop.xlane.xlu0 %3336
        %v3338 = vsel %vm471, %v3332, 0.0
        %3339 = vadd.xlane.f32.xlu0 %v3338
        %v3340 = vpop.xlane.xlu0 %3339
        %v3341 = vsel %vm471, %v3333, 0.0
        %3342 = vadd.xlane.f32.xlu0 %v3341
        %v3343 = vpop.xlane.xlu0 %3342
        %v3344 = vsel %vm471, %v3334, 0.0
        %3345 = vadd.xlane.f32.xlu0 %v3344
        %v3346 = vpop.xlane.xlu0 %3345
        %v3347 = vmul.f32 %v3337, %v3322
        %v3348 = vmul.f32 %v3340, %v3322
        %v3349 = vmul.f32 %v3343, %v3322
        %v3350 = vmul.f32 %v3346, %v3322
        %v3351 = vadd.f32 %v3347, 1e-05
        %v3352 = vadd.f32 %v3348, 1e-05
        %v3353 = vadd.f32 %v3349, 1e-05
        %v3354 = vadd.f32 %v3350, 1e-05
        %v3355 = vrsqrt.pop %v3351
        %v3356 = vrsqrt.pop %v3352
        %v3357 = vrsqrt.pop %v3353
        %v3358 = vrsqrt.pop %v3354
        %v3359 = vmul.f32 %v3327, %v3355
        %v3360 = vmul.f32 %v3328, %v3356
        %v3361 = vmul.f32 %v3329, %v3357
        %v3362 = vmul.f32 %v3330, %v3358
        %v3363 = vld [vmem:[%s9] sm:$0x1]
        %v3365 = vlaneseq
        %v3366 = vshrl.u32 %v3365, 7
        %v3367 = vsub.s32 0, %v3366
        %v3368 = vrot.slane %v3363, %v3367
        %v3370 = vmul.f32 %v3359, %v3368
        %v3371 = vmul.f32 %v3360, %v3368
        %v3372 = vmul.f32 %v3361, %v3368
        %v3373 = vmul.f32 %v3362, %v3368
        %v3374 = vld [vmem:[%s10] sm:$0x1]
        %v3376 = vlaneseq
        %v3377 = vshrl.u32 %v3376, 7
        %v3378 = vsub.s32 0, %v3377
        %v3379 = vrot.slane %v3374, %v3378
        %v3381 = vadd.f32 %v3370, %v3379
        %v3382 = vadd.f32 %v3371, %v3379
        %v3383 = vadd.f32 %v3372, %v3379
        %v3384 = vadd.f32 %v3373, %v3379
        %v3385 = vpack.c.bf16 %v3382, %v3381
        %v3386 = vpack.c.bf16 %v3384, %v3383
        %v3387 = vld [vmem:[%s5] sm:$0xff]
        %v3388 = vld [vmem:[%s5 + $0x8] sm:$0xff]
        %v3389 = vld [vmem:[%s5 + $0x10] sm:$0xff]
        %v3390 = vld [vmem:[%s5 + $0x18] sm:$0xff]
        %v3391 = vld [vmem:[%s5 + $0x20] sm:$0xff]
        %v3392 = vld [vmem:[%s5 + $0x28] sm:$0xff]
        %v3393 = vld [vmem:[%s5 + $0x30] sm:$0xff]
        %v3394 = vld [vmem:[%s5 + $0x38] sm:$0xff]
        %v3395 = vld [vmem:[%s5 + $0x40] sm:$0xff]
        %v3396 = vld [vmem:[%s5 + $0x48] sm:$0xff]
        %v3397 = vld [vmem:[%s5 + $0x50] sm:$0xff]
        %v3398 = vld [vmem:[%s5 + $0x58] sm:$0xff]
        %v3399 = vld [vmem:[%s5 + $0x60] sm:$0xff]
        %v3400 = vld [vmem:[%s5 + $0x68] sm:$0xff]
        %v3401 = vld [vmem:[%s5 + $0x70] sm:$0xff]
        %v3402 = vld [vmem:[%s5 + $0x78] sm:$0xff]
        %v3403 = vld [vmem:[%s5 + $0x80] sm:$0xff]
        %v3404 = vld [vmem:[%s5 + $0x88] sm:$0xff]
        %v3405 = vld [vmem:[%s5 + $0x90] sm:$0xff]
        %v3406 = vld [vmem:[%s5 + $0x98] sm:$0xff]
        %v3407 = vld [vmem:[%s5 + $0xa0] sm:$0xff]
        %v3408 = vld [vmem:[%s5 + $0xa8] sm:$0xff]
        %v3409 = vld [vmem:[%s5 + $0xb0] sm:$0xff]
        %v3410 = vld [vmem:[%s5 + $0xb8] sm:$0xff]
        %v3411 = vld [vmem:[%s5 + $0xc0] sm:$0xff]
        %v3412 = vld [vmem:[%s5 + $0xc8] sm:$0xff]
        %v3413 = vld [vmem:[%s5 + $0xd0] sm:$0xff]
        %v3414 = vld [vmem:[%s5 + $0xd8] sm:$0xff]
        %v3415 = vld [vmem:[%s5 + $0xe0] sm:$0xff]
        %v3416 = vld [vmem:[%s5 + $0xe8] sm:$0xff]
        %v3417 = vld [vmem:[%s5 + $0xf0] sm:$0xff]
        %v3418 = vld [vmem:[%s5 + $0xf8] sm:$0xff]
        %v3419 = vld [vmem:[%s6] sm:$0xff]
        %v3420 = vld [vmem:[%s6 + $0x8] sm:$0xff]
        %v3423 = vlaneseq
        %v3424 = vshrl.u32 %v3423, 7
        %v3425 = vsub.s32 0, %v3424
        %v3426 = vrot.slane %v3419, %v3425
        %v3427 = vlaneseq
        %v3428 = vshrl.u32 %v3427, 7
        %v3429 = vsub.s32 1, %v3428
        %v3430 = vrot.slane %v3419, %v3429
        %v3431 = vlaneseq
        %v3432 = vshrl.u32 %v3431, 7
        %v3433 = vsub.s32 2, %v3432
        %v3434 = vrot.slane %v3419, %v3433
        %v3435 = vlaneseq
        %v3436 = vshrl.u32 %v3435, 7
        %v3437 = vsub.s32 3, %v3436
        %v3438 = vrot.slane %v3419, %v3437
        %v3439 = vlaneseq
        %v3440 = vshrl.u32 %v3439, 7
        %v3441 = vsub.s32 4, %v3440
        %v3442 = vrot.slane %v3419, %v3441
        %v3443 = vlaneseq
        %v3444 = vshrl.u32 %v3443, 7
        %v3445 = vsub.s32 5, %v3444
        %v3446 = vrot.slane %v3419, %v3445
        %v3447 = vlaneseq
        %v3448 = vshrl.u32 %v3447, 7
        %v3449 = vsub.s32 6, %v3448
        %v3450 = vrot.slane %v3419, %v3449
        %v3451 = vlaneseq
        %v3452 = vshrl.u32 %v3451, 7
        %v3453 = vsub.s32 7, %v3452
        %v3454 = vrot.slane %v3419, %v3453
        %v3455 = vlaneseq
        %v3456 = vshrl.u32 %v3455, 7
        %v3457 = vsub.s32 0, %v3456
        %v3458 = vrot.slane %v3420, %v3457
        %v3459 = vlaneseq
        %v3460 = vshrl.u32 %v3459, 7
        %v3461 = vsub.s32 1, %v3460
        %v3462 = vrot.slane %v3420, %v3461
        %v3463 = vlaneseq
        %v3464 = vshrl.u32 %v3463, 7
        %v3465 = vsub.s32 2, %v3464
        %v3466 = vrot.slane %v3420, %v3465
        %v3467 = vlaneseq
        %v3468 = vshrl.u32 %v3467, 7
        %v3469 = vsub.s32 3, %v3468
        %v3470 = vrot.slane %v3420, %v3469
        %v3471 = vlaneseq
        %v3472 = vshrl.u32 %v3471, 7
        %v3473 = vsub.s32 4, %v3472
        %v3474 = vrot.slane %v3420, %v3473
        %v3475 = vlaneseq
        %v3476 = vshrl.u32 %v3475, 7
        %v3477 = vsub.s32 5, %v3476
        %v3478 = vrot.slane %v3420, %v3477
        %v3479 = vlaneseq
        %v3480 = vshrl.u32 %v3479, 7
        %v3481 = vsub.s32 6, %v3480
        %v3482 = vrot.slane %v3420, %v3481
        %v3483 = vlaneseq
        %v3484 = vshrl.u32 %v3483, 7
        %v3485 = vsub.s32 7, %v3484
        %v3486 = vrot.slane %v3420, %v3485
        %v3535 = vunpack.c.l.b16 %v3387
        %v3536 = vunpack.c.h.b16 %v3387
        %v3537 = vunpack.c.l.b16 %v3388
        %v3538 = vunpack.c.h.b16 %v3388
        %v3539 = vunpack.c.l.b16 %v3389
        %v3540 = vunpack.c.h.b16 %v3389
        %v3541 = vunpack.c.l.b16 %v3390
        %v3542 = vunpack.c.h.b16 %v3390
        %v3543 = vunpack.c.l.b16 %v3391
        %v3544 = vunpack.c.h.b16 %v3391
        %v3545 = vunpack.c.l.b16 %v3392
        %v3546 = vunpack.c.h.b16 %v3392
        %v3547 = vunpack.c.l.b16 %v3393
        %v3548 = vunpack.c.h.b16 %v3393
        %v3549 = vunpack.c.l.b16 %v3394
        %v3550 = vunpack.c.h.b16 %v3394
        %v3551 = vunpack.c.l.b16 %v3395
        %v3552 = vunpack.c.h.b16 %v3395
        %v3553 = vunpack.c.l.b16 %v3396
        %v3554 = vunpack.c.h.b16 %v3396
        %v3555 = vunpack.c.l.b16 %v3397
        %v3556 = vunpack.c.h.b16 %v3397
        %v3557 = vunpack.c.l.b16 %v3398
        %v3558 = vunpack.c.h.b16 %v3398
        %v3559 = vunpack.c.l.b16 %v3399
        %v3560 = vunpack.c.h.b16 %v3399
        %v3561 = vunpack.c.l.b16 %v3400
        %v3562 = vunpack.c.h.b16 %v3400
        %v3563 = vunpack.c.l.b16 %v3401
        %v3564 = vunpack.c.h.b16 %v3401
        %v3565 = vunpack.c.l.b16 %v3402
        %v3566 = vunpack.c.h.b16 %v3402
        %v3567 = vunpack.c.l.b16 %v3403
        %v3568 = vunpack.c.h.b16 %v3403
        %v3569 = vunpack.c.l.b16 %v3404
        %v3570 = vunpack.c.h.b16 %v3404
        %v3571 = vunpack.c.l.b16 %v3405
        %v3572 = vunpack.c.h.b16 %v3405
        %v3573 = vunpack.c.l.b16 %v3406
        %v3574 = vunpack.c.h.b16 %v3406
        %v3575 = vunpack.c.l.b16 %v3407
        %v3576 = vunpack.c.h.b16 %v3407
        %v3577 = vunpack.c.l.b16 %v3408
        %v3578 = vunpack.c.h.b16 %v3408
        %v3579 = vunpack.c.l.b16 %v3409
        %v3580 = vunpack.c.h.b16 %v3409
        %v3581 = vunpack.c.l.b16 %v3410
        %v3582 = vunpack.c.h.b16 %v3410
        %v3583 = vunpack.c.l.b16 %v3411
        %v3584 = vunpack.c.h.b16 %v3411
        %v3585 = vunpack.c.l.b16 %v3412
        %v3586 = vunpack.c.h.b16 %v3412
        %v3587 = vunpack.c.l.b16 %v3413
        %v3588 = vunpack.c.h.b16 %v3413
        %v3589 = vunpack.c.l.b16 %v3414
        %v3590 = vunpack.c.h.b16 %v3414
        %v3591 = vunpack.c.l.b16 %v3415
        %v3592 = vunpack.c.h.b16 %v3415
        %v3593 = vunpack.c.l.b16 %v3416
        %v3594 = vunpack.c.h.b16 %v3416
        %v3595 = vunpack.c.l.b16 %v3417
        %v3596 = vunpack.c.h.b16 %v3417
        %v3597 = vunpack.c.l.b16 %v3418
        %v3598 = vunpack.c.h.b16 %v3418
        %v3599 = vpack.c.b16 %v3551, %v3535
        %v3600 = vpack.c.b16 %v3552, %v3536
        %v3601 = vpack.c.b16 %v3553, %v3537
        %v3602 = vpack.c.b16 %v3554, %v3538
        %v3603 = vpack.c.b16 %v3555, %v3539
        %v3604 = vpack.c.b16 %v3556, %v3540
        %v3605 = vpack.c.b16 %v3557, %v3541
        %v3606 = vpack.c.b16 %v3558, %v3542
        %v3607 = vpack.c.b16 %v3559, %v3543
        %v3608 = vpack.c.b16 %v3560, %v3544
        %v3609 = vpack.c.b16 %v3561, %v3545
        %v3610 = vpack.c.b16 %v3562, %v3546
        %v3611 = vpack.c.b16 %v3563, %v3547
        %v3612 = vpack.c.b16 %v3564, %v3548
        %v3613 = vpack.c.b16 %v3565, %v3549
        %v3614 = vpack.c.b16 %v3566, %v3550
        %v3615 = vpack.c.b16 %v3583, %v3567
        %v3616 = vpack.c.b16 %v3584, %v3568
        %v3617 = vpack.c.b16 %v3585, %v3569
        %v3618 = vpack.c.b16 %v3586, %v3570
        %v3619 = vpack.c.b16 %v3587, %v3571
        %v3620 = vpack.c.b16 %v3588, %v3572
        %v3621 = vpack.c.b16 %v3589, %v3573
        %v3622 = vpack.c.b16 %v3590, %v3574
        %v3623 = vpack.c.b16 %v3591, %v3575
        %v3624 = vpack.c.b16 %v3592, %v3576
        %v3625 = vpack.c.b16 %v3593, %v3577
        %v3626 = vpack.c.b16 %v3594, %v3578
        %v3627 = vpack.c.b16 %v3595, %v3579
        %v3628 = vpack.c.b16 %v3596, %v3580
        %v3629 = vpack.c.b16 %v3597, %v3581
        %v3630 = vpack.c.b16 %v3598, %v3582
        %v3664 = vsel %vm471, %v3385, 0
        %v3667 = vsel %vm471, %v3386, 0
        %3669 = vmatprep.subr.bf16.mxu0 %v3600
        %3670 = vmatpush1.bf16.msra.mxu0 %v3599
        %3671 = vmatprep.subr.bf16.mxu0 %v3616
        %3672 = vmatpush1.bf16.msra.mxu0 %v3615
        %3673 = vmatprep.subr.bf16.mxu0 0
        %3674 = vmatpush1.bf16.msra.mxu0 0
        %3675 = vmatprep.subr.bf16.mxu0 0
        %3676 = vmatpush1.bf16.msra.mxu0 0
        %3677 = vmatprep.subr.bf16.mxu0 0
        %3678 = vmatpush1.bf16.msra.mxu0 0
        %3679 = vmatprep.subr.bf16.mxu0 0
        %3680 = vmatpush1.bf16.msra.mxu0 0
        %3681 = vmatprep.subr.bf16.mxu0 0
        %3682 = vmatpush1.bf16.msra.mxu0 0
        %3683 = vmatprep.subr.bf16.mxu0 0
        %3684 = vmatpush1.bf16.msra.mxu0 0
        %3685 = vmatprep.subr.bf16.mxu0 0
        %3686 = vmatpush1.bf16.msra.mxu0 0
        %3687 = vmatprep.subr.bf16.mxu0 0
        %3688 = vmatpush1.bf16.msra.mxu0 0
        %3689 = vmatprep.subr.bf16.mxu0 0
        %3690 = vmatpush1.bf16.msra.mxu0 0
        %3691 = vmatprep.subr.bf16.mxu0 0
        %3692 = vmatpush1.bf16.msra.mxu0 0
        %3693 = vmatprep.subr.bf16.mxu0 0
        %3694 = vmatpush1.bf16.msra.mxu0 0
        %3695 = vmatprep.subr.bf16.mxu0 0
        %3696 = vmatpush1.bf16.msra.mxu0 0
        %3697 = vmatprep.subr.bf16.mxu0 0
        %3698 = vmatpush1.bf16.msra.mxu0 0
        %3699 = vmatprep.subr.bf16.mxu0 0
        %3700 = vmatpush1.bf16.msra.mxu0 0
        %3701 = vmatprep.mubr.bf16.mxu0 0
        %3702 = vmatmul.mubr.bf16.gmra.mrb[0].mxu0 %v3664
        %v3703 = vpop.f32.mrb[0].mxu0
        %v3704 = vadd.f32 %v3426, %v3703
        %v3705 = vpop.f32.mrb[0].mxu0
        %v3706 = vadd.f32 %v3430, %v3705
        %v3707 = vpop.f32.mrb[0].mxu0
        %v3708 = vadd.f32 %v3426, %v3707
        %v3709 = vpop.f32.mrb[0].mxu0
        %v3710 = vadd.f32 %v3430, %v3709
        %3711 = vmatprep.mubr.bf16.mxu0 0
        %3712 = vmatmul.mubr.bf16.gmra.mrb[0].mxu0 %v3667
        %v3713 = vpop.f32.mrb[0].mxu0
        %v3714 = vadd.f32 %v3426, %v3713
        %v3715 = vpop.f32.mrb[0].mxu0
        %v3716 = vadd.f32 %v3430, %v3715
        %v3717 = vpop.f32.mrb[0].mxu0
        %v3718 = vadd.f32 %v3426, %v3717
        %v3719 = vpop.f32.mrb[0].mxu0
        %v3720 = vadd.f32 %v3430, %v3719
        %3721 = vdwg.mxu0
        %3722 = vmatprep.subr.bf16.mxu0 %v3602
        %3723 = vmatpush1.bf16.msra.mxu0 %v3601
        %3724 = vmatprep.subr.bf16.mxu0 %v3618
        %3725 = vmatpush1.bf16.msra.mxu0 %v3617
        %3726 = vmatprep.subr.bf16.mxu0 0
        %3727 = vmatpush1.bf16.msra.mxu0 0
        %3728 = vmatprep.subr.bf16.mxu0 0
        %3729 = vmatpush1.bf16.msra.mxu0 0
        %3730 = vmatprep.subr.bf16.mxu0 0
        %3731 = vmatpush1.bf16.msra.mxu0 0
        %3732 = vmatprep.subr.bf16.mxu0 0
        %3733 = vmatpush1.bf16.msra.mxu0 0
        %3734 = vmatprep.subr.bf16.mxu0 0
        %3735 = vmatpush1.bf16.msra.mxu0 0
        %3736 = vmatprep.subr.bf16.mxu0 0
        %3737 = vmatpush1.bf16.msra.mxu0 0
        %3738 = vmatprep.subr.bf16.mxu0 0
        %3739 = vmatpush1.bf16.msra.mxu0 0
        %3740 = vmatprep.subr.bf16.mxu0 0
        %3741 = vmatpush1.bf16.msra.mxu0 0
        %3742 = vmatprep.subr.bf16.mxu0 0
        %3743 = vmatpush1.bf16.msra.mxu0 0
        %3744 = vmatprep.subr.bf16.mxu0 0
        %3745 = vmatpush1.bf16.msra.mxu0 0
        %3746 = vmatprep.subr.bf16.mxu0 0
        %3747 = vmatpush1.bf16.msra.mxu0 0
        %3748 = vmatprep.subr.bf16.mxu0 0
        %3749 = vmatpush1.bf16.msra.mxu0 0
        %3750 = vmatprep.subr.bf16.mxu0 0
        %3751 = vmatpush1.bf16.msra.mxu0 0
        %3752 = vmatprep.subr.bf16.mxu0 0
        %3753 = vmatpush1.bf16.msra.mxu0 0
        %3754 = vmatprep.mubr.bf16.mxu0 0
        %3755 = vmatmul.mubr.bf16.gmra.mrb[0].mxu0 %v3664
        %v3756 = vpop.f32.mrb[0].mxu0
        %v3757 = vadd.f32 %v3434, %v3756
        %v3758 = vpop.f32.mrb[0].mxu0
        %v3759 = vadd.f32 %v3438, %v3758
        %v3760 = vpop.f32.mrb[0].mxu0
        %v3761 = vadd.f32 %v3434, %v3760
        %v3762 = vpop.f32.mrb[0].mxu0
        %v3763 = vadd.f32 %v3438, %v3762
        %3764 = vmatprep.mubr.bf16.mxu0 0
        %3765 = vmatmul.mubr.bf16.gmra.mrb[0].mxu0 %v3667
        %v3766 = vpop.f32.mrb[0].mxu0
        %v3767 = vadd.f32 %v3434, %v3766
        %v3768 = vpop.f32.mrb[0].mxu0
        %v3769 = vadd.f32 %v3438, %v3768
        %v3770 = vpop.f32.mrb[0].mxu0
        %v3771 = vadd.f32 %v3434, %v3770
        %v3772 = vpop.f32.mrb[0].mxu0
        %v3773 = vadd.f32 %v3438, %v3772
        %3774 = vdwg.mxu0
        %3775 = vmatprep.subr.bf16.mxu0 %v3604
        %3776 = vmatpush1.bf16.msra.mxu0 %v3603
        %3777 = vmatprep.subr.bf16.mxu0 %v3620
        %3778 = vmatpush1.bf16.msra.mxu0 %v3619
        %3779 = vmatprep.subr.bf16.mxu0 0
        %3780 = vmatpush1.bf16.msra.mxu0 0
        %3781 = vmatprep.subr.bf16.mxu0 0
        %3782 = vmatpush1.bf16.msra.mxu0 0
        %3783 = vmatprep.subr.bf16.mxu0 0
        %3784 = vmatpush1.bf16.msra.mxu0 0
        %3785 = vmatprep.subr.bf16.mxu0 0
        %3786 = vmatpush1.bf16.msra.mxu0 0
        %3787 = vmatprep.subr.bf16.mxu0 0
        %3788 = vmatpush1.bf16.msra.mxu0 0
        %3789 = vmatprep.subr.bf16.mxu0 0
        %3790 = vmatpush1.bf16.msra.mxu0 0
        %3791 = vmatprep.subr.bf16.mxu0 0
        %3792 = vmatpush1.bf16.msra.mxu0 0
        %3793 = vmatprep.subr.bf16.mxu0 0
        %3794 = vmatpush1.bf16.msra.mxu0 0
        %3795 = vmatprep.subr.bf16.mxu0 0
        %3796 = vmatpush1.bf16.msra.mxu0 0
        %3797 = vmatprep.subr.bf16.mxu0 0
        %3798 = vmatpush1.bf16.msra.mxu0 0
        %3799 = vmatprep.subr.bf16.mxu0 0
        %3800 = vmatpush1.bf16.msra.mxu0 0
        %3801 = vmatprep.subr.bf16.mxu0 0
        %3802 = vmatpush1.bf16.msra.mxu0 0
        %3803 = vmatprep.subr.bf16.mxu0 0
        %3804 = vmatpush1.bf16.msra.mxu0 0
        %3805 = vmatprep.subr.bf16.mxu0 0
        %3806 = vmatpush1.bf16.msra.mxu0 0
        %3807 = vmatprep.mubr.bf16.mxu0 0
        %3808 = vmatmul.mubr.bf16.gmra.mrb[0].mxu0 %v3664
        %v3809 = vpop.f32.mrb[0].mxu0
        %v3810 = vadd.f32 %v3442, %v3809
        %v3811 = vpop.f32.mrb[0].mxu0
        %v3812 = vadd.f32 %v3446, %v3811
        %v3813 = vpop.f32.mrb[0].mxu0
        %v3814 = vadd.f32 %v3442, %v3813
        %v3815 = vpop.f32.mrb[0].mxu0
        %v3816 = vadd.f32 %v3446, %v3815
        %3817 = vmatprep.mubr.bf16.mxu0 0
        %3818 = vmatmul.mubr.bf16.gmra.mrb[0].mxu0 %v3667
        %v3819 = vpop.f32.mrb[0].mxu0
        %v3820 = vadd.f32 %v3442, %v3819
        %v3821 = vpop.f32.mrb[0].mxu0
        %v3822 = vadd.f32 %v3446, %v3821
        %v3823 = vpop.f32.mrb[0].mxu0
        %v3824 = vadd.f32 %v3442, %v3823
        %v3825 = vpop.f32.mrb[0].mxu0
        %v3826 = vadd.f32 %v3446, %v3825
        %3827 = vdwg.mxu0
        %3828 = vmatprep.subr.bf16.mxu0 %v3606
        %3829 = vmatpush1.bf16.msra.mxu0 %v3605
        %3830 = vmatprep.subr.bf16.mxu0 %v3622
        %3831 = vmatpush1.bf16.msra.mxu0 %v3621
        %3832 = vmatprep.subr.bf16.mxu0 0
        %3833 = vmatpush1.bf16.msra.mxu0 0
        %3834 = vmatprep.subr.bf16.mxu0 0
        %3835 = vmatpush1.bf16.msra.mxu0 0
        %3836 = vmatprep.subr.bf16.mxu0 0
        %3837 = vmatpush1.bf16.msra.mxu0 0
        %3838 = vmatprep.subr.bf16.mxu0 0
        %3839 = vmatpush1.bf16.msra.mxu0 0
        %3840 = vmatprep.subr.bf16.mxu0 0
        %3841 = vmatpush1.bf16.msra.mxu0 0
        %3842 = vmatprep.subr.bf16.mxu0 0
        %3843 = vmatpush1.bf16.msra.mxu0 0
        %3844 = vmatprep.subr.bf16.mxu0 0
        %3845 = vmatpush1.bf16.msra.mxu0 0
        %3846 = vmatprep.subr.bf16.mxu0 0
        %3847 = vmatpush1.bf16.msra.mxu0 0
        %3848 = vmatprep.subr.bf16.mxu0 0
        %3849 = vmatpush1.bf16.msra.mxu0 0
        %3850 = vmatprep.subr.bf16.mxu0 0
        %3851 = vmatpush1.bf16.msra.mxu0 0
        %3852 = vmatprep.subr.bf16.mxu0 0
        %3853 = vmatpush1.bf16.msra.mxu0 0
        %3854 = vmatprep.subr.bf16.mxu0 0
        %3855 = vmatpush1.bf16.msra.mxu0 0
        %3856 = vmatprep.subr.bf16.mxu0 0
        %3857 = vmatpush1.bf16.msra.mxu0 0
        %3858 = vmatprep.subr.bf16.mxu0 0
        %3859 = vmatpush1.bf16.msra.mxu0 0
        %3860 = vmatprep.mubr.bf16.mxu0 0
        %3861 = vmatmul.mubr.bf16.gmra.mrb[0].mxu0 %v3664
        %v3862 = vpop.f32.mrb[0].mxu0
        %v3863 = vadd.f32 %v3450, %v3862
        %v3864 = vpop.f32.mrb[0].mxu0
        %v3865 = vadd.f32 %v3454, %v3864
        %v3866 = vpop.f32.mrb[0].mxu0
        %v3867 = vadd.f32 %v3450, %v3866
        %v3868 = vpop.f32.mrb[0].mxu0
        %v3869 = vadd.f32 %v3454, %v3868
        %3870 = vmatprep.mubr.bf16.mxu0 0
        %3871 = vmatmul.mubr.bf16.gmra.mrb[0].mxu0 %v3667
        %v3872 = vpop.f32.mrb[0].mxu0
        %v3873 = vadd.f32 %v3450, %v3872
        %v3874 = vpop.f32.mrb[0].mxu0
        %v3875 = vadd.f32 %v3454, %v3874
        %v3876 = vpop.f32.mrb[0].mxu0
        %v3877 = vadd.f32 %v3450, %v3876
        %v3878 = vpop.f32.mrb[0].mxu0
        %v3879 = vadd.f32 %v3454, %v3878
        %3880 = vdwg.mxu0
        %3881 = vmatprep.subr.bf16.mxu0 %v3608
        %3882 = vmatpush1.bf16.msra.mxu0 %v3607
        %3883 = vmatprep.subr.bf16.mxu0 %v3624
        %3884 = vmatpush1.bf16.msra.mxu0 %v3623
        %3885 = vmatprep.subr.bf16.mxu0 0
        %3886 = vmatpush1.bf16.msra.mxu0 0
        %3887 = vmatprep.subr.bf16.mxu0 0
        %3888 = vmatpush1.bf16.msra.mxu0 0
        %3889 = vmatprep.subr.bf16.mxu0 0
        %3890 = vmatpush1.bf16.msra.mxu0 0
        %3891 = vmatprep.subr.bf16.mxu0 0
        %3892 = vmatpush1.bf16.msra.mxu0 0
        %3893 = vmatprep.subr.bf16.mxu0 0
        %3894 = vmatpush1.bf16.msra.mxu0 0
        %3895 = vmatprep.subr.bf16.mxu0 0
        %3896 = vmatpush1.bf16.msra.mxu0 0
        %3897 = vmatprep.subr.bf16.mxu0 0
        %3898 = vmatpush1.bf16.msra.mxu0 0
        %3899 = vmatprep.subr.bf16.mxu0 0
        %3900 = vmatpush1.bf16.msra.mxu0 0
        %3901 = vmatprep.subr.bf16.mxu0 0
        %3902 = vmatpush1.bf16.msra.mxu0 0
        %3903 = vmatprep.subr.bf16.mxu0 0
        %3904 = vmatpush1.bf16.msra.mxu0 0
        %3905 = vmatprep.subr.bf16.mxu0 0
        %3906 = vmatpush1.bf16.msra.mxu0 0
        %3907 = vmatprep.subr.bf16.mxu0 0
        %3908 = vmatpush1.bf16.msra.mxu0 0
        %3909 = vmatprep.subr.bf16.mxu0 0
        %3910 = vmatpush1.bf16.msra.mxu0 0
        %3911 = vmatprep.subr.bf16.mxu0 0
        %3912 = vmatpush1.bf16.msra.mxu0 0
        %3913 = vmatprep.mubr.bf16.mxu0 0
        %3914 = vmatmul.mubr.bf16.gmra.mrb[0].mxu0 %v3664
        %v3915 = vpop.f32.mrb[0].mxu0
        %v3916 = vadd.f32 %v3458, %v3915
        %v3917 = vpop.f32.mrb[0].mxu0
        %v3918 = vadd.f32 %v3462, %v3917
        %v3919 = vpop.f32.mrb[0].mxu0
        %v3920 = vadd.f32 %v3458, %v3919
        %v3921 = vpop.f32.mrb[0].mxu0
        %v3922 = vadd.f32 %v3462, %v3921
        %3923 = vmatprep.mubr.bf16.mxu0 0
        %3924 = vmatmul.mubr.bf16.gmra.mrb[0].mxu0 %v3667
        %v3925 = vpop.f32.mrb[0].mxu0
        %v3926 = vadd.f32 %v3458, %v3925
        %v3927 = vpop.f32.mrb[0].mxu0
        %v3928 = vadd.f32 %v3462, %v3927
        %v3929 = vpop.f32.mrb[0].mxu0
        %v3930 = vadd.f32 %v3458, %v3929
        %v3931 = vpop.f32.mrb[0].mxu0
        %v3932 = vadd.f32 %v3462, %v3931
        %3933 = vdwg.mxu0
        %3934 = vmatprep.subr.bf16.mxu0 %v3610
        %3935 = vmatpush1.bf16.msra.mxu0 %v3609
        %3936 = vmatprep.subr.bf16.mxu0 %v3626
        %3937 = vmatpush1.bf16.msra.mxu0 %v3625
        %3938 = vmatprep.subr.bf16.mxu0 0
        %3939 = vmatpush1.bf16.msra.mxu0 0
        %3940 = vmatprep.subr.bf16.mxu0 0
        %3941 = vmatpush1.bf16.msra.mxu0 0
        %3942 = vmatprep.subr.bf16.mxu0 0
        %3943 = vmatpush1.bf16.msra.mxu0 0
        %3944 = vmatprep.subr.bf16.mxu0 0
        %3945 = vmatpush1.bf16.msra.mxu0 0
        %3946 = vmatprep.subr.bf16.mxu0 0
        %3947 = vmatpush1.bf16.msra.mxu0 0
        %3948 = vmatprep.subr.bf16.mxu0 0
        %3949 = vmatpush1.bf16.msra.mxu0 0
        %3950 = vmatprep.subr.bf16.mxu0 0
        %3951 = vmatpush1.bf16.msra.mxu0 0
        %3952 = vmatprep.subr.bf16.mxu0 0
        %3953 = vmatpush1.bf16.msra.mxu0 0
        %3954 = vmatprep.subr.bf16.mxu0 0
        %3955 = vmatpush1.bf16.msra.mxu0 0
        %3956 = vmatprep.subr.bf16.mxu0 0
        %3957 = vmatpush1.bf16.msra.mxu0 0
        %3958 = vmatprep.subr.bf16.mxu0 0
        %3959 = vmatpush1.bf16.msra.mxu0 0
        %3960 = vmatprep.subr.bf16.mxu0 0
        %3961 = vmatpush1.bf16.msra.mxu0 0
        %3962 = vmatprep.subr.bf16.mxu0 0
        %3963 = vmatpush1.bf16.msra.mxu0 0
        %3964 = vmatprep.subr.bf16.mxu0 0
        %3965 = vmatpush1.bf16.msra.mxu0 0
        %3966 = vmatprep.mubr.bf16.mxu0 0
        %3967 = vmatmul.mubr.bf16.gmra.mrb[0].mxu0 %v3664
        %v3968 = vpop.f32.mrb[0].mxu0
        %v3969 = vadd.f32 %v3466, %v3968
        %v3970 = vpop.f32.mrb[0].mxu0
        %v3971 = vadd.f32 %v3470, %v3970
        %v3972 = vpop.f32.mrb[0].mxu0
        %v3973 = vadd.f32 %v3466, %v3972
        %v3974 = vpop.f32.mrb[0].mxu0
        %v3975 = vadd.f32 %v3470, %v3974
        %3976 = vmatprep.mubr.bf16.mxu0 0
        %3977 = vmatmul.mubr.bf16.gmra.mrb[0].mxu0 %v3667
        %v3978 = vpop.f32.mrb[0].mxu0
        %v3979 = vadd.f32 %v3466, %v3978
        %v3980 = vpop.f32.mrb[0].mxu0
        %v3981 = vadd.f32 %v3470, %v3980
        %v3982 = vpop.f32.mrb[0].mxu0
        %v3983 = vadd.f32 %v3466, %v3982
        %v3984 = vpop.f32.mrb[0].mxu0
        %v3985 = vadd.f32 %v3470, %v3984
        %3986 = vdwg.mxu0
        %3987 = vmatprep.subr.bf16.mxu0 %v3612
        %3988 = vmatpush1.bf16.msra.mxu0 %v3611
        %3989 = vmatprep.subr.bf16.mxu0 %v3628
        %3990 = vmatpush1.bf16.msra.mxu0 %v3627
        %3991 = vmatprep.subr.bf16.mxu0 0
        %3992 = vmatpush1.bf16.msra.mxu0 0
        %3993 = vmatprep.subr.bf16.mxu0 0
        %3994 = vmatpush1.bf16.msra.mxu0 0
        %3995 = vmatprep.subr.bf16.mxu0 0
        %3996 = vmatpush1.bf16.msra.mxu0 0
        %3997 = vmatprep.subr.bf16.mxu0 0
        %3998 = vmatpush1.bf16.msra.mxu0 0
        %3999 = vmatprep.subr.bf16.mxu0 0
        %4000 = vmatpush1.bf16.msra.mxu0 0
        %4001 = vmatprep.subr.bf16.mxu0 0
        %4002 = vmatpush1.bf16.msra.mxu0 0
        %4003 = vmatprep.subr.bf16.mxu0 0
        %4004 = vmatpush1.bf16.msra.mxu0 0
        %4005 = vmatprep.subr.bf16.mxu0 0
        %4006 = vmatpush1.bf16.msra.mxu0 0
        %4007 = vmatprep.subr.bf16.mxu0 0
        %4008 = vmatpush1.bf16.msra.mxu0 0
        %4009 = vmatprep.subr.bf16.mxu0 0
        %4010 = vmatpush1.bf16.msra.mxu0 0
        %4011 = vmatprep.subr.bf16.mxu0 0
        %4012 = vmatpush1.bf16.msra.mxu0 0
        %4013 = vmatprep.subr.bf16.mxu0 0
        %4014 = vmatpush1.bf16.msra.mxu0 0
        %4015 = vmatprep.subr.bf16.mxu0 0
        %4016 = vmatpush1.bf16.msra.mxu0 0
        %4017 = vmatprep.subr.bf16.mxu0 0
        %4018 = vmatpush1.bf16.msra.mxu0 0
        %4019 = vmatprep.mubr.bf16.mxu0 0
        %4020 = vmatmul.mubr.bf16.gmra.mrb[0].mxu0 %v3664
        %v4021 = vpop.f32.mrb[0].mxu0
        %v4022 = vadd.f32 %v3474, %v4021
        %v4023 = vpop.f32.mrb[0].mxu0
        %v4024 = vadd.f32 %v3478, %v4023
        %v4025 = vpop.f32.mrb[0].mxu0
        %v4026 = vadd.f32 %v3474, %v4025
        %v4027 = vpop.f32.mrb[0].mxu0
        %v4028 = vadd.f32 %v3478, %v4027
        %4029 = vmatprep.mubr.bf16.mxu0 0
        %4030 = vmatmul.mubr.bf16.gmra.mrb[0].mxu0 %v3667
        %v4031 = vpop.f32.mrb[0].mxu0
        %v4032 = vadd.f32 %v3474, %v4031
        %v4033 = vpop.f32.mrb[0].mxu0
        %v4034 = vadd.f32 %v3478, %v4033
        %v4035 = vpop.f32.mrb[0].mxu0
        %v4036 = vadd.f32 %v3474, %v4035
        %v4037 = vpop.f32.mrb[0].mxu0
        %v4038 = vadd.f32 %v3478, %v4037
        %4039 = vdwg.mxu0
        %4040 = vmatprep.subr.bf16.mxu0 %v3614
        %4041 = vmatpush1.bf16.msra.mxu0 %v3613
        %4042 = vmatprep.subr.bf16.mxu0 %v3630
        %4043 = vmatpush1.bf16.msra.mxu0 %v3629
        %4044 = vmatprep.subr.bf16.mxu0 0
        %4045 = vmatpush1.bf16.msra.mxu0 0
        %4046 = vmatprep.subr.bf16.mxu0 0
        %4047 = vmatpush1.bf16.msra.mxu0 0
        %4048 = vmatprep.subr.bf16.mxu0 0
        %4049 = vmatpush1.bf16.msra.mxu0 0
        %4050 = vmatprep.subr.bf16.mxu0 0
        %4051 = vmatpush1.bf16.msra.mxu0 0
        %4052 = vmatprep.subr.bf16.mxu0 0
        %4053 = vmatpush1.bf16.msra.mxu0 0
        %4054 = vmatprep.subr.bf16.mxu0 0
        %4055 = vmatpush1.bf16.msra.mxu0 0
        %4056 = vmatprep.subr.bf16.mxu0 0
        %4057 = vmatpush1.bf16.msra.mxu0 0
        %4058 = vmatprep.subr.bf16.mxu0 0
        %4059 = vmatpush1.bf16.msra.mxu0 0
        %4060 = vmatprep.subr.bf16.mxu0 0
        %4061 = vmatpush1.bf16.msra.mxu0 0
        %4062 = vmatprep.subr.bf16.mxu0 0
        %4063 = vmatpush1.bf16.msra.mxu0 0
        %4064 = vmatprep.subr.bf16.mxu0 0
        %4065 = vmatpush1.bf16.msra.mxu0 0
        %4066 = vmatprep.subr.bf16.mxu0 0
        %4067 = vmatpush1.bf16.msra.mxu0 0
        %4068 = vmatprep.subr.bf16.mxu0 0
        %4069 = vmatpush1.bf16.msra.mxu0 0
        %4070 = vmatprep.subr.bf16.mxu0 0
        %4071 = vmatpush1.bf16.msra.mxu0 0
        %4072 = vmatprep.mubr.bf16.mxu0 0
        %4073 = vmatmul.mubr.bf16.gmra.mrb[0].mxu0 %v3664
        %v4074 = vpop.f32.mrb[0].mxu0
        %v4075 = vadd.f32 %v3482, %v4074
        %v4076 = vpop.f32.mrb[0].mxu0
        %v4077 = vadd.f32 %v3486, %v4076
        %v4078 = vpop.f32.mrb[0].mxu0
        %v4079 = vadd.f32 %v3482, %v4078
        %v4080 = vpop.f32.mrb[0].mxu0
        %v4081 = vadd.f32 %v3486, %v4080
        %4082 = vmatprep.mubr.bf16.mxu0 0
        %4083 = vmatmul.mubr.bf16.gmra.mrb[0].mxu0 %v3667
        %v4084 = vpop.f32.mrb[0].mxu0
        %v4085 = vadd.f32 %v3482, %v4084
        %v4086 = vpop.f32.mrb[0].mxu0
        %v4087 = vadd.f32 %v3486, %v4086
        %v4088 = vpop.f32.mrb[0].mxu0
        %v4089 = vadd.f32 %v3482, %v4088
        %v4090 = vpop.f32.mrb[0].mxu0
        %v4091 = vadd.f32 %v3486, %v4090
        %4092 = vdwg.mxu0
        %v4093 = vmax.f32 %v3704, 0.0
        %v4094 = vmax.f32 %v3706, 0.0
        %v4095 = vmax.f32 %v3757, 0.0
        %v4096 = vmax.f32 %v3759, 0.0
        %v4097 = vmax.f32 %v3810, 0.0
        %v4098 = vmax.f32 %v3812, 0.0
        %v4099 = vmax.f32 %v3863, 0.0
        %v4100 = vmax.f32 %v3865, 0.0
        %v4101 = vmax.f32 %v3916, 0.0
        %v4102 = vmax.f32 %v3918, 0.0
        %v4103 = vmax.f32 %v3969, 0.0
        %v4104 = vmax.f32 %v3971, 0.0
        %v4105 = vmax.f32 %v4022, 0.0
        %v4106 = vmax.f32 %v4024, 0.0
        %v4107 = vmax.f32 %v4075, 0.0
        %v4108 = vmax.f32 %v4077, 0.0
        %v4109 = vmax.f32 %v3708, 0.0
        %v4110 = vmax.f32 %v3710, 0.0
        %v4111 = vmax.f32 %v3761, 0.0
        %v4112 = vmax.f32 %v3763, 0.0
        %v4113 = vmax.f32 %v3814, 0.0
        %v4114 = vmax.f32 %v3816, 0.0
        %v4115 = vmax.f32 %v3867, 0.0
        %v4116 = vmax.f32 %v3869, 0.0
        %v4117 = vmax.f32 %v3920, 0.0
        %v4118 = vmax.f32 %v3922, 0.0
        %v4119 = vmax.f32 %v3973, 0.0
        %v4120 = vmax.f32 %v3975, 0.0
        %v4121 = vmax.f32 %v4026, 0.0
        %v4122 = vmax.f32 %v4028, 0.0
        %v4123 = vmax.f32 %v4079, 0.0
        %v4124 = vmax.f32 %v4081, 0.0
        %v4125 = vmax.f32 %v3714, 0.0
        %v4126 = vmax.f32 %v3716, 0.0
        %v4127 = vmax.f32 %v3767, 0.0
        %v4128 = vmax.f32 %v3769, 0.0
        %v4129 = vmax.f32 %v3820, 0.0
        %v4130 = vmax.f32 %v3822, 0.0
        %v4131 = vmax.f32 %v3873, 0.0
        %v4132 = vmax.f32 %v3875, 0.0
        %v4133 = vmax.f32 %v3926, 0.0
        %v4134 = vmax.f32 %v3928, 0.0
        %v4135 = vmax.f32 %v3979, 0.0
        %v4136 = vmax.f32 %v3981, 0.0
        %v4137 = vmax.f32 %v4032, 0.0
        %v4138 = vmax.f32 %v4034, 0.0
        %v4139 = vmax.f32 %v4085, 0.0
        %v4140 = vmax.f32 %v4087, 0.0
        %v4141 = vmax.f32 %v3718, 0.0
        %v4142 = vmax.f32 %v3720, 0.0
        %v4143 = vmax.f32 %v3771, 0.0
        %v4144 = vmax.f32 %v3773, 0.0
        %v4145 = vmax.f32 %v3824, 0.0
        %v4146 = vmax.f32 %v3826, 0.0
        %v4147 = vmax.f32 %v3877, 0.0
        %v4148 = vmax.f32 %v3879, 0.0
        %v4149 = vmax.f32 %v3930, 0.0
        %v4150 = vmax.f32 %v3932, 0.0
        %v4151 = vmax.f32 %v3983, 0.0
        %v4152 = vmax.f32 %v3985, 0.0
        %v4153 = vmax.f32 %v4036, 0.0
        %v4154 = vmax.f32 %v4038, 0.0
        %v4155 = vmax.f32 %v4089, 0.0
        %v4156 = vmax.f32 %v4091, 0.0
        %v4157 = vpack.c.bf16 %v4109, %v4093
        %v4158 = vpack.c.bf16 %v4110, %v4094
        %v4159 = vpack.c.bf16 %v4111, %v4095
        %v4160 = vpack.c.bf16 %v4112, %v4096
        %v4161 = vpack.c.bf16 %v4113, %v4097
        %v4162 = vpack.c.bf16 %v4114, %v4098
        %v4163 = vpack.c.bf16 %v4115, %v4099
        %v4164 = vpack.c.bf16 %v4116, %v4100
        %v4165 = vpack.c.bf16 %v4117, %v4101
        %v4166 = vpack.c.bf16 %v4118, %v4102
        %v4167 = vpack.c.bf16 %v4119, %v4103
        %v4168 = vpack.c.bf16 %v4120, %v4104
        %v4169 = vpack.c.bf16 %v4121, %v4105
        %v4170 = vpack.c.bf16 %v4122, %v4106
        %v4171 = vpack.c.bf16 %v4123, %v4107
        %v4172 = vpack.c.bf16 %v4124, %v4108
        %v4173 = vpack.c.bf16 %v4141, %v4125
        %v4174 = vpack.c.bf16 %v4142, %v4126
        %v4175 = vpack.c.bf16 %v4143, %v4127
        %v4176 = vpack.c.bf16 %v4144, %v4128
        %v4177 = vpack.c.bf16 %v4145, %v4129
        %v4178 = vpack.c.bf16 %v4146, %v4130
        %v4179 = vpack.c.bf16 %v4147, %v4131
        %v4180 = vpack.c.bf16 %v4148, %v4132
        %v4181 = vpack.c.bf16 %v4149, %v4133
        %v4182 = vpack.c.bf16 %v4150, %v4134
        %v4183 = vpack.c.bf16 %v4151, %v4135
        %v4184 = vpack.c.bf16 %v4152, %v4136
        %v4185 = vpack.c.bf16 %v4153, %v4137
        %v4186 = vpack.c.bf16 %v4154, %v4138
        %v4187 = vpack.c.bf16 %v4155, %v4139
        %v4188 = vpack.c.bf16 %v4156, %v4140
        %v4189 = vld [vmem:[%s7] sm:$0xf]
        %v4190 = vld [vmem:[%s7 + $0x4] sm:$0xf]
        %v4191 = vld [vmem:[%s7 + $0x8] sm:$0xf]
        %v4192 = vld [vmem:[%s7 + $0xc] sm:$0xf]
        %v4193 = vld [vmem:[%s7 + $0x10] sm:$0xf]
        %v4194 = vld [vmem:[%s7 + $0x14] sm:$0xf]
        %v4195 = vld [vmem:[%s7 + $0x18] sm:$0xf]
        %v4196 = vld [vmem:[%s7 + $0x1c] sm:$0xf]
        %v4197 = vld [vmem:[%s7 + $0x20] sm:$0xf]
        %v4198 = vld [vmem:[%s7 + $0x24] sm:$0xf]
        %v4199 = vld [vmem:[%s7 + $0x28] sm:$0xf]
        %v4200 = vld [vmem:[%s7 + $0x2c] sm:$0xf]
        %v4201 = vld [vmem:[%s7 + $0x30] sm:$0xf]
        %v4202 = vld [vmem:[%s7 + $0x34] sm:$0xf]
        %v4203 = vld [vmem:[%s7 + $0x38] sm:$0xf]
        %v4204 = vld [vmem:[%s7 + $0x3c] sm:$0xf]
        %v4205 = vld [vmem:[%s7 + $0x40] sm:$0xf]
        %v4206 = vld [vmem:[%s7 + $0x44] sm:$0xf]
        %v4207 = vld [vmem:[%s7 + $0x48] sm:$0xf]
        %v4208 = vld [vmem:[%s7 + $0x4c] sm:$0xf]
        %v4209 = vld [vmem:[%s7 + $0x50] sm:$0xf]
        %v4210 = vld [vmem:[%s7 + $0x54] sm:$0xf]
        %v4211 = vld [vmem:[%s7 + $0x58] sm:$0xf]
        %v4212 = vld [vmem:[%s7 + $0x5c] sm:$0xf]
        %v4213 = vld [vmem:[%s7 + $0x60] sm:$0xf]
        %v4214 = vld [vmem:[%s7 + $0x64] sm:$0xf]
        %v4215 = vld [vmem:[%s7 + $0x68] sm:$0xf]
        %v4216 = vld [vmem:[%s7 + $0x6c] sm:$0xf]
        %v4217 = vld [vmem:[%s7 + $0x70] sm:$0xf]
        %v4218 = vld [vmem:[%s7 + $0x74] sm:$0xf]
        %v4219 = vld [vmem:[%s7 + $0x78] sm:$0xf]
        %v4220 = vld [vmem:[%s7 + $0x7c] sm:$0xf]
        %v4221 = vld [vmem:[%s7 + $0x80] sm:$0xf]
        %v4222 = vld [vmem:[%s7 + $0x84] sm:$0xf]
        %v4223 = vld [vmem:[%s7 + $0x88] sm:$0xf]
        %v4224 = vld [vmem:[%s7 + $0x8c] sm:$0xf]
        %v4225 = vld [vmem:[%s7 + $0x90] sm:$0xf]
        %v4226 = vld [vmem:[%s7 + $0x94] sm:$0xf]
        %v4227 = vld [vmem:[%s7 + $0x98] sm:$0xf]
        %v4228 = vld [vmem:[%s7 + $0x9c] sm:$0xf]
        %v4229 = vld [vmem:[%s7 + $0xa0] sm:$0xf]
        %v4230 = vld [vmem:[%s7 + $0xa4] sm:$0xf]
        %v4231 = vld [vmem:[%s7 + $0xa8] sm:$0xf]
        %v4232 = vld [vmem:[%s7 + $0xac] sm:$0xf]
        %v4233 = vld [vmem:[%s7 + $0xb0] sm:$0xf]
        %v4234 = vld [vmem:[%s7 + $0xb4] sm:$0xf]
        %v4235 = vld [vmem:[%s7 + $0xb8] sm:$0xf]
        %v4236 = vld [vmem:[%s7 + $0xbc] sm:$0xf]
        %v4237 = vld [vmem:[%s7 + $0xc0] sm:$0xf]
        %v4238 = vld [vmem:[%s7 + $0xc4] sm:$0xf]
        %v4239 = vld [vmem:[%s7 + $0xc8] sm:$0xf]
        %v4240 = vld [vmem:[%s7 + $0xcc] sm:$0xf]
        %v4241 = vld [vmem:[%s7 + $0xd0] sm:$0xf]
        %v4242 = vld [vmem:[%s7 + $0xd4] sm:$0xf]
        %v4243 = vld [vmem:[%s7 + $0xd8] sm:$0xf]
        %v4244 = vld [vmem:[%s7 + $0xdc] sm:$0xf]
        %v4245 = vld [vmem:[%s7 + $0xe0] sm:$0xf]
        %v4246 = vld [vmem:[%s7 + $0xe4] sm:$0xf]
        %v4247 = vld [vmem:[%s7 + $0xe8] sm:$0xf]
        %v4248 = vld [vmem:[%s7 + $0xec] sm:$0xf]
        %v4249 = vld [vmem:[%s7 + $0xf0] sm:$0xf]
        %v4250 = vld [vmem:[%s7 + $0xf4] sm:$0xf]
        %v4251 = vld [vmem:[%s7 + $0xf8] sm:$0xf]
        %v4252 = vld [vmem:[%s7 + $0xfc] sm:$0xf]
        %v4253 = vld [vmem:[%s7 + $0x100] sm:$0xf]
        %v4254 = vld [vmem:[%s7 + $0x104] sm:$0xf]
        %v4255 = vld [vmem:[%s7 + $0x108] sm:$0xf]
        %v4256 = vld [vmem:[%s7 + $0x10c] sm:$0xf]
        %v4257 = vld [vmem:[%s7 + $0x110] sm:$0xf]
        %v4258 = vld [vmem:[%s7 + $0x114] sm:$0xf]
        %v4259 = vld [vmem:[%s7 + $0x118] sm:$0xf]
        %v4260 = vld [vmem:[%s7 + $0x11c] sm:$0xf]
        %v4261 = vld [vmem:[%s7 + $0x120] sm:$0xf]
        %v4262 = vld [vmem:[%s7 + $0x124] sm:$0xf]
        %v4263 = vld [vmem:[%s7 + $0x128] sm:$0xf]
        %v4264 = vld [vmem:[%s7 + $0x12c] sm:$0xf]
        %v4265 = vld [vmem:[%s7 + $0x130] sm:$0xf]
        %v4266 = vld [vmem:[%s7 + $0x134] sm:$0xf]
        %v4267 = vld [vmem:[%s7 + $0x138] sm:$0xf]
        %v4268 = vld [vmem:[%s7 + $0x13c] sm:$0xf]
        %v4269 = vld [vmem:[%s7 + $0x140] sm:$0xf]
        %v4270 = vld [vmem:[%s7 + $0x144] sm:$0xf]
        %v4271 = vld [vmem:[%s7 + $0x148] sm:$0xf]
        %v4272 = vld [vmem:[%s7 + $0x14c] sm:$0xf]
        %v4273 = vld [vmem:[%s7 + $0x150] sm:$0xf]
        %v4274 = vld [vmem:[%s7 + $0x154] sm:$0xf]
        %v4275 = vld [vmem:[%s7 + $0x158] sm:$0xf]
        %v4276 = vld [vmem:[%s7 + $0x15c] sm:$0xf]
        %v4277 = vld [vmem:[%s7 + $0x160] sm:$0xf]
        %v4278 = vld [vmem:[%s7 + $0x164] sm:$0xf]
        %v4279 = vld [vmem:[%s7 + $0x168] sm:$0xf]
        %v4280 = vld [vmem:[%s7 + $0x16c] sm:$0xf]
        %v4281 = vld [vmem:[%s7 + $0x170] sm:$0xf]
        %v4282 = vld [vmem:[%s7 + $0x174] sm:$0xf]
        %v4283 = vld [vmem:[%s7 + $0x178] sm:$0xf]
        %v4284 = vld [vmem:[%s7 + $0x17c] sm:$0xf]
        %v4285 = vld [vmem:[%s7 + $0x180] sm:$0xf]
        %v4286 = vld [vmem:[%s7 + $0x184] sm:$0xf]
        %v4287 = vld [vmem:[%s7 + $0x188] sm:$0xf]
        %v4288 = vld [vmem:[%s7 + $0x18c] sm:$0xf]
        %v4289 = vld [vmem:[%s7 + $0x190] sm:$0xf]
        %v4290 = vld [vmem:[%s7 + $0x194] sm:$0xf]
        %v4291 = vld [vmem:[%s7 + $0x198] sm:$0xf]
        %v4292 = vld [vmem:[%s7 + $0x19c] sm:$0xf]
        %v4293 = vld [vmem:[%s7 + $0x1a0] sm:$0xf]
        %v4294 = vld [vmem:[%s7 + $0x1a4] sm:$0xf]
        %v4295 = vld [vmem:[%s7 + $0x1a8] sm:$0xf]
        %v4296 = vld [vmem:[%s7 + $0x1ac] sm:$0xf]
        %v4297 = vld [vmem:[%s7 + $0x1b0] sm:$0xf]
        %v4298 = vld [vmem:[%s7 + $0x1b4] sm:$0xf]
        %v4299 = vld [vmem:[%s7 + $0x1b8] sm:$0xf]
        %v4300 = vld [vmem:[%s7 + $0x1bc] sm:$0xf]
        %v4301 = vld [vmem:[%s7 + $0x1c0] sm:$0xf]
        %v4302 = vld [vmem:[%s7 + $0x1c4] sm:$0xf]
        %v4303 = vld [vmem:[%s7 + $0x1c8] sm:$0xf]
        %v4304 = vld [vmem:[%s7 + $0x1cc] sm:$0xf]
        %v4305 = vld [vmem:[%s7 + $0x1d0] sm:$0xf]
        %v4306 = vld [vmem:[%s7 + $0x1d4] sm:$0xf]
        %v4307 = vld [vmem:[%s7 + $0x1d8] sm:$0xf]
        %v4308 = vld [vmem:[%s7 + $0x1dc] sm:$0xf]
        %v4309 = vld [vmem:[%s7 + $0x1e0] sm:$0xf]
        %v4310 = vld [vmem:[%s7 + $0x1e4] sm:$0xf]
        %v4311 = vld [vmem:[%s7 + $0x1e8] sm:$0xf]
        %v4312 = vld [vmem:[%s7 + $0x1ec] sm:$0xf]
        %v4313 = vld [vmem:[%s7 + $0x1f0] sm:$0xf]
        %v4314 = vld [vmem:[%s7 + $0x1f4] sm:$0xf]
        %v4315 = vld [vmem:[%s7 + $0x1f8] sm:$0xf]
        %v4316 = vld [vmem:[%s7 + $0x1fc] sm:$0xf]
        %v4317 = vld [vmem:[%s7 + $0x200] sm:$0xf]
        %v4318 = vld [vmem:[%s7 + $0x204] sm:$0xf]
        %v4319 = vld [vmem:[%s7 + $0x208] sm:$0xf]
        %v4320 = vld [vmem:[%s7 + $0x20c] sm:$0xf]
        %v4321 = vld [vmem:[%s7 + $0x210] sm:$0xf]
        %v4322 = vld [vmem:[%s7 + $0x214] sm:$0xf]
        %v4323 = vld [vmem:[%s7 + $0x218] sm:$0xf]
        %v4324 = vld [vmem:[%s7 + $0x21c] sm:$0xf]
        %v4325 = vld [vmem:[%s7 + $0x220] sm:$0xf]
        %v4326 = vld [vmem:[%s7 + $0x224] sm:$0xf]
        %v4327 = vld [vmem:[%s7 + $0x228] sm:$0xf]
        %v4328 = vld [vmem:[%s7 + $0x22c] sm:$0xf]
        %v4329 = vld [vmem:[%s7 + $0x230] sm:$0xf]
        %v4330 = vld [vmem:[%s7 + $0x234] sm:$0xf]
        %v4331 = vld [vmem:[%s7 + $0x238] sm:$0xf]
        %v4332 = vld [vmem:[%s7 + $0x23c] sm:$0xf]
        %v4333 = vld [vmem:[%s7 + $0x240] sm:$0xf]
        %v4334 = vld [vmem:[%s7 + $0x244] sm:$0xf]
        %v4335 = vld [vmem:[%s7 + $0x248] sm:$0xf]
        %v4336 = vld [vmem:[%s7 + $0x24c] sm:$0xf]
        %v4337 = vld [vmem:[%s7 + $0x250] sm:$0xf]
        %v4338 = vld [vmem:[%s7 + $0x254] sm:$0xf]
        %v4339 = vld [vmem:[%s7 + $0x258] sm:$0xf]
        %v4340 = vld [vmem:[%s7 + $0x25c] sm:$0xf]
        %v4341 = vld [vmem:[%s7 + $0x260] sm:$0xf]
        %v4342 = vld [vmem:[%s7 + $0x264] sm:$0xf]
        %v4343 = vld [vmem:[%s7 + $0x268] sm:$0xf]
        %v4344 = vld [vmem:[%s7 + $0x26c] sm:$0xf]
        %v4345 = vld [vmem:[%s7 + $0x270] sm:$0xf]
        %v4346 = vld [vmem:[%s7 + $0x274] sm:$0xf]
        %v4347 = vld [vmem:[%s7 + $0x278] sm:$0xf]
        %v4348 = vld [vmem:[%s7 + $0x27c] sm:$0xf]
        %v4349 = vld [vmem:[%s7 + $0x280] sm:$0xf]
        %v4350 = vld [vmem:[%s7 + $0x284] sm:$0xf]
        %v4351 = vld [vmem:[%s7 + $0x288] sm:$0xf]
        %v4352 = vld [vmem:[%s7 + $0x28c] sm:$0xf]
        %v4353 = vld [vmem:[%s7 + $0x290] sm:$0xf]
        %v4354 = vld [vmem:[%s7 + $0x294] sm:$0xf]
        %v4355 = vld [vmem:[%s7 + $0x298] sm:$0xf]
        %v4356 = vld [vmem:[%s7 + $0x29c] sm:$0xf]
        %v4357 = vld [vmem:[%s7 + $0x2a0] sm:$0xf]
        %v4358 = vld [vmem:[%s7 + $0x2a4] sm:$0xf]
        %v4359 = vld [vmem:[%s7 + $0x2a8] sm:$0xf]
        %v4360 = vld [vmem:[%s7 + $0x2ac] sm:$0xf]
        %v4361 = vld [vmem:[%s7 + $0x2b0] sm:$0xf]
        %v4362 = vld [vmem:[%s7 + $0x2b4] sm:$0xf]
        %v4363 = vld [vmem:[%s7 + $0x2b8] sm:$0xf]
        %v4364 = vld [vmem:[%s7 + $0x2bc] sm:$0xf]
        %v4365 = vld [vmem:[%s7 + $0x2c0] sm:$0xf]
        %v4366 = vld [vmem:[%s7 + $0x2c4] sm:$0xf]
        %v4367 = vld [vmem:[%s7 + $0x2c8] sm:$0xf]
        %v4368 = vld [vmem:[%s7 + $0x2cc] sm:$0xf]
        %v4369 = vld [vmem:[%s7 + $0x2d0] sm:$0xf]
        %v4370 = vld [vmem:[%s7 + $0x2d4] sm:$0xf]
        %v4371 = vld [vmem:[%s7 + $0x2d8] sm:$0xf]
        %v4372 = vld [vmem:[%s7 + $0x2dc] sm:$0xf]
        %v4373 = vld [vmem:[%s7 + $0x2e0] sm:$0xf]
        %v4374 = vld [vmem:[%s7 + $0x2e4] sm:$0xf]
        %v4375 = vld [vmem:[%s7 + $0x2e8] sm:$0xf]
        %v4376 = vld [vmem:[%s7 + $0x2ec] sm:$0xf]
        %v4377 = vld [vmem:[%s7 + $0x2f0] sm:$0xf]
        %v4378 = vld [vmem:[%s7 + $0x2f4] sm:$0xf]
        %v4379 = vld [vmem:[%s7 + $0x2f8] sm:$0xf]
        %v4380 = vld [vmem:[%s7 + $0x2fc] sm:$0xf]
        %v4381 = vld [vmem:[%s7 + $0x300] sm:$0xf]
        %v4382 = vld [vmem:[%s7 + $0x304] sm:$0xf]
        %v4383 = vld [vmem:[%s7 + $0x308] sm:$0xf]
        %v4384 = vld [vmem:[%s7 + $0x30c] sm:$0xf]
        %v4385 = vld [vmem:[%s7 + $0x310] sm:$0xf]
        %v4386 = vld [vmem:[%s7 + $0x314] sm:$0xf]
        %v4387 = vld [vmem:[%s7 + $0x318] sm:$0xf]
        %v4388 = vld [vmem:[%s7 + $0x31c] sm:$0xf]
        %v4389 = vld [vmem:[%s7 + $0x320] sm:$0xf]
        %v4390 = vld [vmem:[%s7 + $0x324] sm:$0xf]
        %v4391 = vld [vmem:[%s7 + $0x328] sm:$0xf]
        %v4392 = vld [vmem:[%s7 + $0x32c] sm:$0xf]
        %v4393 = vld [vmem:[%s7 + $0x330] sm:$0xf]
        %v4394 = vld [vmem:[%s7 + $0x334] sm:$0xf]
        %v4395 = vld [vmem:[%s7 + $0x338] sm:$0xf]
        %v4396 = vld [vmem:[%s7 + $0x33c] sm:$0xf]
        %v4397 = vld [vmem:[%s7 + $0x340] sm:$0xf]
        %v4398 = vld [vmem:[%s7 + $0x344] sm:$0xf]
        %v4399 = vld [vmem:[%s7 + $0x348] sm:$0xf]
        %v4400 = vld [vmem:[%s7 + $0x34c] sm:$0xf]
        %v4401 = vld [vmem:[%s7 + $0x350] sm:$0xf]
        %v4402 = vld [vmem:[%s7 + $0x354] sm:$0xf]
        %v4403 = vld [vmem:[%s7 + $0x358] sm:$0xf]
        %v4404 = vld [vmem:[%s7 + $0x35c] sm:$0xf]
        %v4405 = vld [vmem:[%s7 + $0x360] sm:$0xf]
        %v4406 = vld [vmem:[%s7 + $0x364] sm:$0xf]
        %v4407 = vld [vmem:[%s7 + $0x368] sm:$0xf]
        %v4408 = vld [vmem:[%s7 + $0x36c] sm:$0xf]
        %v4409 = vld [vmem:[%s7 + $0x370] sm:$0xf]
        %v4410 = vld [vmem:[%s7 + $0x374] sm:$0xf]
        %v4411 = vld [vmem:[%s7 + $0x378] sm:$0xf]
        %v4412 = vld [vmem:[%s7 + $0x37c] sm:$0xf]
        %v4413 = vld [vmem:[%s7 + $0x380] sm:$0xf]
        %v4414 = vld [vmem:[%s7 + $0x384] sm:$0xf]
        %v4415 = vld [vmem:[%s7 + $0x388] sm:$0xf]
        %v4416 = vld [vmem:[%s7 + $0x38c] sm:$0xf]
        %v4417 = vld [vmem:[%s7 + $0x390] sm:$0xf]
        %v4418 = vld [vmem:[%s7 + $0x394] sm:$0xf]
        %v4419 = vld [vmem:[%s7 + $0x398] sm:$0xf]
        %v4420 = vld [vmem:[%s7 + $0x39c] sm:$0xf]
        %v4421 = vld [vmem:[%s7 + $0x3a0] sm:$0xf]
        %v4422 = vld [vmem:[%s7 + $0x3a4] sm:$0xf]
        %v4423 = vld [vmem:[%s7 + $0x3a8] sm:$0xf]
        %v4424 = vld [vmem:[%s7 + $0x3ac] sm:$0xf]
        %v4425 = vld [vmem:[%s7 + $0x3b0] sm:$0xf]
        %v4426 = vld [vmem:[%s7 + $0x3b4] sm:$0xf]
        %v4427 = vld [vmem:[%s7 + $0x3b8] sm:$0xf]
        %v4428 = vld [vmem:[%s7 + $0x3bc] sm:$0xf]
        %v4429 = vld [vmem:[%s7 + $0x3c0] sm:$0xf]
        %v4430 = vld [vmem:[%s7 + $0x3c4] sm:$0xf]
        %v4431 = vld [vmem:[%s7 + $0x3c8] sm:$0xf]
        %v4432 = vld [vmem:[%s7 + $0x3cc] sm:$0xf]
        %v4433 = vld [vmem:[%s7 + $0x3d0] sm:$0xf]
        %v4434 = vld [vmem:[%s7 + $0x3d4] sm:$0xf]
        %v4435 = vld [vmem:[%s7 + $0x3d8] sm:$0xf]
        %v4436 = vld [vmem:[%s7 + $0x3dc] sm:$0xf]
        %v4437 = vld [vmem:[%s7 + $0x3e0] sm:$0xf]
        %v4438 = vld [vmem:[%s7 + $0x3e4] sm:$0xf]
        %v4439 = vld [vmem:[%s7 + $0x3e8] sm:$0xf]
        %v4440 = vld [vmem:[%s7 + $0x3ec] sm:$0xf]
        %v4441 = vld [vmem:[%s7 + $0x3f0] sm:$0xf]
        %v4442 = vld [vmem:[%s7 + $0x3f4] sm:$0xf]
        %v4443 = vld [vmem:[%s7 + $0x3f8] sm:$0xf]
        %v4444 = vld [vmem:[%s7 + $0x3fc] sm:$0xf]
        %v4445 = vld [vmem:[%s8] sm:$0x1]
        %v4447 = vlaneseq
        %v4448 = vshrl.u32 %v4447, 7
        %v4449 = vsub.s32 0, %v4448
        %v4450 = vrot.slane %v4445, %v4449
        %v4708 = vunpack.c.l.b16 %v4189
        %v4709 = vunpack.c.l.b16 %v4190
        %v4710 = vunpack.c.l.b16 %v4191
        %v4711 = vunpack.c.l.b16 %v4192
        %v4712 = vunpack.c.l.b16 %v4193
        %v4713 = vunpack.c.l.b16 %v4194
        %v4714 = vunpack.c.l.b16 %v4195
        %v4715 = vunpack.c.l.b16 %v4196
        %v4716 = vunpack.c.l.b16 %v4197
        %v4717 = vunpack.c.l.b16 %v4198
        %v4718 = vunpack.c.l.b16 %v4199
        %v4719 = vunpack.c.l.b16 %v4200
        %v4720 = vunpack.c.l.b16 %v4201
        %v4721 = vunpack.c.l.b16 %v4202
        %v4722 = vunpack.c.l.b16 %v4203
        %v4723 = vunpack.c.l.b16 %v4204
        %v4724 = vunpack.c.l.b16 %v4205
        %v4725 = vunpack.c.l.b16 %v4206
        %v4726 = vunpack.c.l.b16 %v4207
        %v4727 = vunpack.c.l.b16 %v4208
        %v4728 = vunpack.c.l.b16 %v4209
        %v4729 = vunpack.c.l.b16 %v4210
        %v4730 = vunpack.c.l.b16 %v4211
        %v4731 = vunpack.c.l.b16 %v4212
        %v4732 = vunpack.c.l.b16 %v4213
        %v4733 = vunpack.c.l.b16 %v4214
        %v4734 = vunpack.c.l.b16 %v4215
        %v4735 = vunpack.c.l.b16 %v4216
        %v4736 = vunpack.c.l.b16 %v4217
        %v4737 = vunpack.c.l.b16 %v4218
        %v4738 = vunpack.c.l.b16 %v4219
        %v4739 = vunpack.c.l.b16 %v4220
        %v4740 = vunpack.c.l.b16 %v4221
        %v4741 = vunpack.c.l.b16 %v4222
        %v4742 = vunpack.c.l.b16 %v4223
        %v4743 = vunpack.c.l.b16 %v4224
        %v4744 = vunpack.c.l.b16 %v4225
        %v4745 = vunpack.c.l.b16 %v4226
        %v4746 = vunpack.c.l.b16 %v4227
        %v4747 = vunpack.c.l.b16 %v4228
        %v4748 = vunpack.c.l.b16 %v4229
        %v4749 = vunpack.c.l.b16 %v4230
        %v4750 = vunpack.c.l.b16 %v4231
        %v4751 = vunpack.c.l.b16 %v4232
        %v4752 = vunpack.c.l.b16 %v4233
        %v4753 = vunpack.c.l.b16 %v4234
        %v4754 = vunpack.c.l.b16 %v4235
        %v4755 = vunpack.c.l.b16 %v4236
        %v4756 = vunpack.c.l.b16 %v4237
        %v4757 = vunpack.c.l.b16 %v4238
        %v4758 = vunpack.c.l.b16 %v4239
        %v4759 = vunpack.c.l.b16 %v4240
        %v4760 = vunpack.c.l.b16 %v4241
        %v4761 = vunpack.c.l.b16 %v4242
        %v4762 = vunpack.c.l.b16 %v4243
        %v4763 = vunpack.c.l.b16 %v4244
        %v4764 = vunpack.c.l.b16 %v4245
        %v4765 = vunpack.c.l.b16 %v4246
        %v4766 = vunpack.c.l.b16 %v4247
        %v4767 = vunpack.c.l.b16 %v4248
        %v4768 = vunpack.c.l.b16 %v4249
        %v4769 = vunpack.c.l.b16 %v4250
        %v4770 = vunpack.c.l.b16 %v4251
        %v4771 = vunpack.c.l.b16 %v4252
        %v4772 = vunpack.c.l.b16 %v4253
        %v4773 = vunpack.c.l.b16 %v4254
        %v4774 = vunpack.c.l.b16 %v4255
        %v4775 = vunpack.c.l.b16 %v4256
        %v4776 = vunpack.c.l.b16 %v4257
        %v4777 = vunpack.c.l.b16 %v4258
        %v4778 = vunpack.c.l.b16 %v4259
        %v4779 = vunpack.c.l.b16 %v4260
        %v4780 = vunpack.c.l.b16 %v4261
        %v4781 = vunpack.c.l.b16 %v4262
        %v4782 = vunpack.c.l.b16 %v4263
        %v4783 = vunpack.c.l.b16 %v4264
        %v4784 = vunpack.c.l.b16 %v4265
        %v4785 = vunpack.c.l.b16 %v4266
        %v4786 = vunpack.c.l.b16 %v4267
        %v4787 = vunpack.c.l.b16 %v4268
        %v4788 = vunpack.c.l.b16 %v4269
        %v4789 = vunpack.c.l.b16 %v4270
        %v4790 = vunpack.c.l.b16 %v4271
        %v4791 = vunpack.c.l.b16 %v4272
        %v4792 = vunpack.c.l.b16 %v4273
        %v4793 = vunpack.c.l.b16 %v4274
        %v4794 = vunpack.c.l.b16 %v4275
        %v4795 = vunpack.c.l.b16 %v4276
        %v4796 = vunpack.c.l.b16 %v4277
        %v4797 = vunpack.c.l.b16 %v4278
        %v4798 = vunpack.c.l.b16 %v4279
        %v4799 = vunpack.c.l.b16 %v4280
        %v4800 = vunpack.c.l.b16 %v4281
        %v4801 = vunpack.c.l.b16 %v4282
        %v4802 = vunpack.c.l.b16 %v4283
        %v4803 = vunpack.c.l.b16 %v4284
        %v4804 = vunpack.c.l.b16 %v4285
        %v4805 = vunpack.c.l.b16 %v4286
        %v4806 = vunpack.c.l.b16 %v4287
        %v4807 = vunpack.c.l.b16 %v4288
        %v4808 = vunpack.c.l.b16 %v4289
        %v4809 = vunpack.c.l.b16 %v4290
        %v4810 = vunpack.c.l.b16 %v4291
        %v4811 = vunpack.c.l.b16 %v4292
        %v4812 = vunpack.c.l.b16 %v4293
        %v4813 = vunpack.c.l.b16 %v4294
        %v4814 = vunpack.c.l.b16 %v4295
        %v4815 = vunpack.c.l.b16 %v4296
        %v4816 = vunpack.c.l.b16 %v4297
        %v4817 = vunpack.c.l.b16 %v4298
        %v4818 = vunpack.c.l.b16 %v4299
        %v4819 = vunpack.c.l.b16 %v4300
        %v4820 = vunpack.c.l.b16 %v4301
        %v4821 = vunpack.c.l.b16 %v4302
        %v4822 = vunpack.c.l.b16 %v4303
        %v4823 = vunpack.c.l.b16 %v4304
        %v4824 = vunpack.c.l.b16 %v4305
        %v4825 = vunpack.c.l.b16 %v4306
        %v4826 = vunpack.c.l.b16 %v4307
        %v4827 = vunpack.c.l.b16 %v4308
        %v4828 = vunpack.c.l.b16 %v4309
        %v4829 = vunpack.c.l.b16 %v4310
        %v4830 = vunpack.c.l.b16 %v4311
        %v4831 = vunpack.c.l.b16 %v4312
        %v4832 = vunpack.c.l.b16 %v4313
        %v4833 = vunpack.c.l.b16 %v4314
        %v4834 = vunpack.c.l.b16 %v4315
        %v4835 = vunpack.c.l.b16 %v4316
        %v4836 = vunpack.c.l.b16 %v4317
        %v4837 = vunpack.c.l.b16 %v4318
        %v4838 = vunpack.c.l.b16 %v4319
        %v4839 = vunpack.c.l.b16 %v4320
        %v4840 = vunpack.c.l.b16 %v4321
        %v4841 = vunpack.c.l.b16 %v4322
        %v4842 = vunpack.c.l.b16 %v4323
        %v4843 = vunpack.c.l.b16 %v4324
        %v4844 = vunpack.c.l.b16 %v4325
        %v4845 = vunpack.c.l.b16 %v4326
        %v4846 = vunpack.c.l.b16 %v4327
        %v4847 = vunpack.c.l.b16 %v4328
        %v4848 = vunpack.c.l.b16 %v4329
        %v4849 = vunpack.c.l.b16 %v4330
        %v4850 = vunpack.c.l.b16 %v4331
        %v4851 = vunpack.c.l.b16 %v4332
        %v4852 = vunpack.c.l.b16 %v4333
        %v4853 = vunpack.c.l.b16 %v4334
        %v4854 = vunpack.c.l.b16 %v4335
        %v4855 = vunpack.c.l.b16 %v4336
        %v4856 = vunpack.c.l.b16 %v4337
        %v4857 = vunpack.c.l.b16 %v4338
        %v4858 = vunpack.c.l.b16 %v4339
        %v4859 = vunpack.c.l.b16 %v4340
        %v4860 = vunpack.c.l.b16 %v4341
        %v4861 = vunpack.c.l.b16 %v4342
        %v4862 = vunpack.c.l.b16 %v4343
        %v4863 = vunpack.c.l.b16 %v4344
        %v4864 = vunpack.c.l.b16 %v4345
        %v4865 = vunpack.c.l.b16 %v4346
        %v4866 = vunpack.c.l.b16 %v4347
        %v4867 = vunpack.c.l.b16 %v4348
        %v4868 = vunpack.c.l.b16 %v4349
        %v4869 = vunpack.c.l.b16 %v4350
        %v4870 = vunpack.c.l.b16 %v4351
        %v4871 = vunpack.c.l.b16 %v4352
        %v4872 = vunpack.c.l.b16 %v4353
        %v4873 = vunpack.c.l.b16 %v4354
        %v4874 = vunpack.c.l.b16 %v4355
        %v4875 = vunpack.c.l.b16 %v4356
        %v4876 = vunpack.c.l.b16 %v4357
        %v4877 = vunpack.c.l.b16 %v4358
        %v4878 = vunpack.c.l.b16 %v4359
        %v4879 = vunpack.c.l.b16 %v4360
        %v4880 = vunpack.c.l.b16 %v4361
        %v4881 = vunpack.c.l.b16 %v4362
        %v4882 = vunpack.c.l.b16 %v4363
        %v4883 = vunpack.c.l.b16 %v4364
        %v4884 = vunpack.c.l.b16 %v4365
        %v4885 = vunpack.c.l.b16 %v4366
        %v4886 = vunpack.c.l.b16 %v4367
        %v4887 = vunpack.c.l.b16 %v4368
        %v4888 = vunpack.c.l.b16 %v4369
        %v4889 = vunpack.c.l.b16 %v4370
        %v4890 = vunpack.c.l.b16 %v4371
        %v4891 = vunpack.c.l.b16 %v4372
        %v4892 = vunpack.c.l.b16 %v4373
        %v4893 = vunpack.c.l.b16 %v4374
        %v4894 = vunpack.c.l.b16 %v4375
        %v4895 = vunpack.c.l.b16 %v4376
        %v4896 = vunpack.c.l.b16 %v4377
        %v4897 = vunpack.c.l.b16 %v4378
        %v4898 = vunpack.c.l.b16 %v4379
        %v4899 = vunpack.c.l.b16 %v4380
        %v4900 = vunpack.c.l.b16 %v4381
        %v4901 = vunpack.c.l.b16 %v4382
        %v4902 = vunpack.c.l.b16 %v4383
        %v4903 = vunpack.c.l.b16 %v4384
        %v4904 = vunpack.c.l.b16 %v4385
        %v4905 = vunpack.c.l.b16 %v4386
        %v4906 = vunpack.c.l.b16 %v4387
        %v4907 = vunpack.c.l.b16 %v4388
        %v4908 = vunpack.c.l.b16 %v4389
        %v4909 = vunpack.c.l.b16 %v4390
        %v4910 = vunpack.c.l.b16 %v4391
        %v4911 = vunpack.c.l.b16 %v4392
        %v4912 = vunpack.c.l.b16 %v4393
        %v4913 = vunpack.c.l.b16 %v4394
        %v4914 = vunpack.c.l.b16 %v4395
        %v4915 = vunpack.c.l.b16 %v4396
        %v4916 = vunpack.c.l.b16 %v4397
        %v4917 = vunpack.c.l.b16 %v4398
        %v4918 = vunpack.c.l.b16 %v4399
        %v4919 = vunpack.c.l.b16 %v4400
        %v4920 = vunpack.c.l.b16 %v4401
        %v4921 = vunpack.c.l.b16 %v4402
        %v4922 = vunpack.c.l.b16 %v4403
        %v4923 = vunpack.c.l.b16 %v4404
        %v4924 = vunpack.c.l.b16 %v4405
        %v4925 = vunpack.c.l.b16 %v4406
        %v4926 = vunpack.c.l.b16 %v4407
        %v4927 = vunpack.c.l.b16 %v4408
        %v4928 = vunpack.c.l.b16 %v4409
        %v4929 = vunpack.c.l.b16 %v4410
        %v4930 = vunpack.c.l.b16 %v4411
        %v4931 = vunpack.c.l.b16 %v4412
        %v4932 = vunpack.c.l.b16 %v4413
        %v4933 = vunpack.c.l.b16 %v4414
        %v4934 = vunpack.c.l.b16 %v4415
        %v4935 = vunpack.c.l.b16 %v4416
        %v4936 = vunpack.c.l.b16 %v4417
        %v4937 = vunpack.c.l.b16 %v4418
        %v4938 = vunpack.c.l.b16 %v4419
        %v4939 = vunpack.c.l.b16 %v4420
        %v4940 = vunpack.c.l.b16 %v4421
        %v4941 = vunpack.c.l.b16 %v4422
        %v4942 = vunpack.c.l.b16 %v4423
        %v4943 = vunpack.c.l.b16 %v4424
        %v4944 = vunpack.c.l.b16 %v4425
        %v4945 = vunpack.c.l.b16 %v4426
        %v4946 = vunpack.c.l.b16 %v4427
        %v4947 = vunpack.c.l.b16 %v4428
        %v4948 = vunpack.c.l.b16 %v4429
        %v4949 = vunpack.c.l.b16 %v4430
        %v4950 = vunpack.c.l.b16 %v4431
        %v4951 = vunpack.c.l.b16 %v4432
        %v4952 = vunpack.c.l.b16 %v4433
        %v4953 = vunpack.c.l.b16 %v4434
        %v4954 = vunpack.c.l.b16 %v4435
        %v4955 = vunpack.c.l.b16 %v4436
        %v4956 = vunpack.c.l.b16 %v4437
        %v4957 = vunpack.c.l.b16 %v4438
        %v4958 = vunpack.c.l.b16 %v4439
        %v4959 = vunpack.c.l.b16 %v4440
        %v4960 = vunpack.c.l.b16 %v4441
        %v4961 = vunpack.c.l.b16 %v4442
        %v4962 = vunpack.c.l.b16 %v4443
        %v4963 = vunpack.c.l.b16 %v4444
        %v4964 = vpack.c.b16 %v4709, %v4708
        %v4965 = vpack.c.b16 %v4711, %v4710
        %v4966 = vpack.c.b16 %v4713, %v4712
        %v4967 = vpack.c.b16 %v4715, %v4714
        %v4968 = vpack.c.b16 %v4717, %v4716
        %v4969 = vpack.c.b16 %v4719, %v4718
        %v4970 = vpack.c.b16 %v4721, %v4720
        %v4971 = vpack.c.b16 %v4723, %v4722
        %v4972 = vpack.c.b16 %v4725, %v4724
        %v4973 = vpack.c.b16 %v4727, %v4726
        %v4974 = vpack.c.b16 %v4729, %v4728
        %v4975 = vpack.c.b16 %v4731, %v4730
        %v4976 = vpack.c.b16 %v4733, %v4732
        %v4977 = vpack.c.b16 %v4735, %v4734
        %v4978 = vpack.c.b16 %v4737, %v4736
        %v4979 = vpack.c.b16 %v4739, %v4738
        %v4980 = vpack.c.b16 %v4741, %v4740
        %v4981 = vpack.c.b16 %v4743, %v4742
        %v4982 = vpack.c.b16 %v4745, %v4744
        %v4983 = vpack.c.b16 %v4747, %v4746
        %v4984 = vpack.c.b16 %v4749, %v4748
        %v4985 = vpack.c.b16 %v4751, %v4750
        %v4986 = vpack.c.b16 %v4753, %v4752
        %v4987 = vpack.c.b16 %v4755, %v4754
        %v4988 = vpack.c.b16 %v4757, %v4756
        %v4989 = vpack.c.b16 %v4759, %v4758
        %v4990 = vpack.c.b16 %v4761, %v4760
        %v4991 = vpack.c.b16 %v4763, %v4762
        %v4992 = vpack.c.b16 %v4765, %v4764
        %v4993 = vpack.c.b16 %v4767, %v4766
        %v4994 = vpack.c.b16 %v4769, %v4768
        %v4995 = vpack.c.b16 %v4771, %v4770
        %v4996 = vpack.c.b16 %v4773, %v4772
        %v4997 = vpack.c.b16 %v4775, %v4774
        %v4998 = vpack.c.b16 %v4777, %v4776
        %v4999 = vpack.c.b16 %v4779, %v4778
        %v5000 = vpack.c.b16 %v4781, %v4780
        %v5001 = vpack.c.b16 %v4783, %v4782
        %v5002 = vpack.c.b16 %v4785, %v4784
        %v5003 = vpack.c.b16 %v4787, %v4786
        %v5004 = vpack.c.b16 %v4789, %v4788
        %v5005 = vpack.c.b16 %v4791, %v4790
        %v5006 = vpack.c.b16 %v4793, %v4792
        %v5007 = vpack.c.b16 %v4795, %v4794
        %v5008 = vpack.c.b16 %v4797, %v4796
        %v5009 = vpack.c.b16 %v4799, %v4798
        %v5010 = vpack.c.b16 %v4801, %v4800
        %v5011 = vpack.c.b16 %v4803, %v4802
        %v5012 = vpack.c.b16 %v4805, %v4804
        %v5013 = vpack.c.b16 %v4807, %v4806
        %v5014 = vpack.c.b16 %v4809, %v4808
        %v5015 = vpack.c.b16 %v4811, %v4810
        %v5016 = vpack.c.b16 %v4813, %v4812
        %v5017 = vpack.c.b16 %v4815, %v4814
        %v5018 = vpack.c.b16 %v4817, %v4816
        %v5019 = vpack.c.b16 %v4819, %v4818
        %v5020 = vpack.c.b16 %v4821, %v4820
        %v5021 = vpack.c.b16 %v4823, %v4822
        %v5022 = vpack.c.b16 %v4825, %v4824
        %v5023 = vpack.c.b16 %v4827, %v4826
        %v5024 = vpack.c.b16 %v4829, %v4828
        %v5025 = vpack.c.b16 %v4831, %v4830
        %v5026 = vpack.c.b16 %v4833, %v4832
        %v5027 = vpack.c.b16 %v4835, %v4834
        %v5028 = vpack.c.b16 %v4837, %v4836
        %v5029 = vpack.c.b16 %v4839, %v4838
        %v5030 = vpack.c.b16 %v4841, %v4840
        %v5031 = vpack.c.b16 %v4843, %v4842
        %v5032 = vpack.c.b16 %v4845, %v4844
        %v5033 = vpack.c.b16 %v4847, %v4846
        %v5034 = vpack.c.b16 %v4849, %v4848
        %v5035 = vpack.c.b16 %v4851, %v4850
        %v5036 = vpack.c.b16 %v4853, %v4852
        %v5037 = vpack.c.b16 %v4855, %v4854
        %v5038 = vpack.c.b16 %v4857, %v4856
        %v5039 = vpack.c.b16 %v4859, %v4858
        %v5040 = vpack.c.b16 %v4861, %v4860
        %v5041 = vpack.c.b16 %v4863, %v4862
        %v5042 = vpack.c.b16 %v4865, %v4864
        %v5043 = vpack.c.b16 %v4867, %v4866
        %v5044 = vpack.c.b16 %v4869, %v4868
        %v5045 = vpack.c.b16 %v4871, %v4870
        %v5046 = vpack.c.b16 %v4873, %v4872
        %v5047 = vpack.c.b16 %v4875, %v4874
        %v5048 = vpack.c.b16 %v4877, %v4876
        %v5049 = vpack.c.b16 %v4879, %v4878
        %v5050 = vpack.c.b16 %v4881, %v4880
        %v5051 = vpack.c.b16 %v4883, %v4882
        %v5052 = vpack.c.b16 %v4885, %v4884
        %v5053 = vpack.c.b16 %v4887, %v4886
        %v5054 = vpack.c.b16 %v4889, %v4888
        %v5055 = vpack.c.b16 %v4891, %v4890
        %v5056 = vpack.c.b16 %v4893, %v4892
        %v5057 = vpack.c.b16 %v4895, %v4894
        %v5058 = vpack.c.b16 %v4897, %v4896
        %v5059 = vpack.c.b16 %v4899, %v4898
        %v5060 = vpack.c.b16 %v4901, %v4900
        %v5061 = vpack.c.b16 %v4903, %v4902
        %v5062 = vpack.c.b16 %v4905, %v4904
        %v5063 = vpack.c.b16 %v4907, %v4906
        %v5064 = vpack.c.b16 %v4909, %v4908
        %v5065 = vpack.c.b16 %v4911, %v4910
        %v5066 = vpack.c.b16 %v4913, %v4912
        %v5067 = vpack.c.b16 %v4915, %v4914
        %v5068 = vpack.c.b16 %v4917, %v4916
        %v5069 = vpack.c.b16 %v4919, %v4918
        %v5070 = vpack.c.b16 %v4921, %v4920
        %v5071 = vpack.c.b16 %v4923, %v4922
        %v5072 = vpack.c.b16 %v4925, %v4924
        %v5073 = vpack.c.b16 %v4927, %v4926
        %v5074 = vpack.c.b16 %v4929, %v4928
        %v5075 = vpack.c.b16 %v4931, %v4930
        %v5076 = vpack.c.b16 %v4933, %v4932
        %v5077 = vpack.c.b16 %v4935, %v4934
        %v5078 = vpack.c.b16 %v4937, %v4936
        %v5079 = vpack.c.b16 %v4939, %v4938
        %v5080 = vpack.c.b16 %v4941, %v4940
        %v5081 = vpack.c.b16 %v4943, %v4942
        %v5082 = vpack.c.b16 %v4945, %v4944
        %v5083 = vpack.c.b16 %v4947, %v4946
        %v5084 = vpack.c.b16 %v4949, %v4948
        %v5085 = vpack.c.b16 %v4951, %v4950
        %v5086 = vpack.c.b16 %v4953, %v4952
        %v5087 = vpack.c.b16 %v4955, %v4954
        %v5088 = vpack.c.b16 %v4957, %v4956
        %v5089 = vpack.c.b16 %v4959, %v4958
        %v5090 = vpack.c.b16 %v4961, %v4960
        %v5091 = vpack.c.b16 %v4963, %v4962
        %5220 = vmatprep.subr.bf16.mxu0 0
        %5221 = vmatpush1.bf16.msra.mxu0 %v4964
        %5222 = vmatprep.subr.bf16.mxu0 0
        %5223 = vmatpush1.bf16.msra.mxu0 %v4965
        %5224 = vmatprep.subr.bf16.mxu0 0
        %5225 = vmatpush1.bf16.msra.mxu0 %v4966
        %5226 = vmatprep.subr.bf16.mxu0 0
        %5227 = vmatpush1.bf16.msra.mxu0 %v4967
        %5228 = vmatprep.subr.bf16.mxu0 0
        %5229 = vmatpush1.bf16.msra.mxu0 %v4968
        %5230 = vmatprep.subr.bf16.mxu0 0
        %5231 = vmatpush1.bf16.msra.mxu0 %v4969
        %5232 = vmatprep.subr.bf16.mxu0 0
        %5233 = vmatpush1.bf16.msra.mxu0 %v4970
        %5234 = vmatprep.subr.bf16.mxu0 0
        %5235 = vmatpush1.bf16.msra.mxu0 %v4971
        %5236 = vmatprep.subr.bf16.mxu0 0
        %5237 = vmatpush1.bf16.msra.mxu0 %v4972
        %5238 = vmatprep.subr.bf16.mxu0 0
        %5239 = vmatpush1.bf16.msra.mxu0 %v4973
        %5240 = vmatprep.subr.bf16.mxu0 0
        %5241 = vmatpush1.bf16.msra.mxu0 %v4974
        %5242 = vmatprep.subr.bf16.mxu0 0
        %5243 = vmatpush1.bf16.msra.mxu0 %v4975
        %5244 = vmatprep.subr.bf16.mxu0 0
        %5245 = vmatpush1.bf16.msra.mxu0 %v4976
        %5246 = vmatprep.subr.bf16.mxu0 0
        %5247 = vmatpush1.bf16.msra.mxu0 %v4977
        %5248 = vmatprep.subr.bf16.mxu0 0
        %5249 = vmatpush1.bf16.msra.mxu0 %v4978
        %5250 = vmatprep.subr.bf16.mxu0 0
        %5251 = vmatpush1.bf16.msra.mxu0 %v4979
        %5252 = vmatprep.mubr.bf16.mxu0 %v4158
        %5253 = vmatmul.mubr.bf16.gmra.mrb[0].mxu0 %v4157
        %v5254 = vpop.f32.mrb[0].mxu0
        %v5255 = vadd.f32 %v4450, %v5254
        %v5256 = vpop.f32.mrb[0].mxu0
        %v5257 = vpop.f32.mrb[0].mxu0
        %v5258 = vadd.f32 %v4450, %v5257
        %v5259 = vpop.f32.mrb[0].mxu0
        %5260 = vmatprep.mubr.bf16.mxu0 %v4174
        %5261 = vmatmul.mubr.bf16.gmra.mrb[0].mxu0 %v4173
        %v5262 = vpop.f32.mrb[0].mxu0
        %v5263 = vadd.f32 %v4450, %v5262
        %v5264 = vpop.f32.mrb[0].mxu0
        %v5265 = vpop.f32.mrb[0].mxu0
        %v5266 = vadd.f32 %v4450, %v5265
        %v5267 = vpop.f32.mrb[0].mxu0
        %5268 = vdwg.mxu0
        %5269 = vmatprep.subr.bf16.mxu0 0
        %5270 = vmatpush1.bf16.msra.mxu0 %v4980
        %5271 = vmatprep.subr.bf16.mxu0 0
        %5272 = vmatpush1.bf16.msra.mxu0 %v4981
        %5273 = vmatprep.subr.bf16.mxu0 0
        %5274 = vmatpush1.bf16.msra.mxu0 %v4982
        %5275 = vmatprep.subr.bf16.mxu0 0
        %5276 = vmatpush1.bf16.msra.mxu0 %v4983
        %5277 = vmatprep.subr.bf16.mxu0 0
        %5278 = vmatpush1.bf16.msra.mxu0 %v4984
        %5279 = vmatprep.subr.bf16.mxu0 0
        %5280 = vmatpush1.bf16.msra.mxu0 %v4985
        %5281 = vmatprep.subr.bf16.mxu0 0
        %5282 = vmatpush1.bf16.msra.mxu0 %v4986
        %5283 = vmatprep.subr.bf16.mxu0 0
        %5284 = vmatpush1.bf16.msra.mxu0 %v4987
        %5285 = vmatprep.subr.bf16.mxu0 0
        %5286 = vmatpush1.bf16.msra.mxu0 %v4988
        %5287 = vmatprep.subr.bf16.mxu0 0
        %5288 = vmatpush1.bf16.msra.mxu0 %v4989
        %5289 = vmatprep.subr.bf16.mxu0 0
        %5290 = vmatpush1.bf16.msra.mxu0 %v4990
        %5291 = vmatprep.subr.bf16.mxu0 0
        %5292 = vmatpush1.bf16.msra.mxu0 %v4991
        %5293 = vmatprep.subr.bf16.mxu0 0
        %5294 = vmatpush1.bf16.msra.mxu0 %v4992
        %5295 = vmatprep.subr.bf16.mxu0 0
        %5296 = vmatpush1.bf16.msra.mxu0 %v4993
        %5297 = vmatprep.subr.bf16.mxu0 0
        %5298 = vmatpush1.bf16.msra.mxu0 %v4994
        %5299 = vmatprep.subr.bf16.mxu0 0
        %5300 = vmatpush1.bf16.msra.mxu0 %v4995
        %5301 = vmatprep.mubr.bf16.mxu0 %v4160
        %5302 = vmatmul.mubr.bf16.gmra.mrb[0].mxu0 %v4159
        %v5303 = vpop.f32.mrb[0].mxu0
        %v5304 = vadd.f32 %v5255, %v5303
        %v5305 = vpop.f32.mrb[0].mxu0
        %v5306 = vpop.f32.mrb[0].mxu0
        %v5307 = vadd.f32 %v5258, %v5306
        %v5308 = vpop.f32.mrb[0].mxu0
        %5309 = vmatprep.mubr.bf16.mxu0 %v4176
        %5310 = vmatmul.mubr.bf16.gmra.mrb[0].mxu0 %v4175
        %v5311 = vpop.f32.mrb[0].mxu0
        %v5312 = vadd.f32 %v5263, %v5311
        %v5313 = vpop.f32.mrb[0].mxu0
        %v5314 = vpop.f32.mrb[0].mxu0
        %v5315 = vadd.f32 %v5266, %v5314
        %v5316 = vpop.f32.mrb[0].mxu0
        %5317 = vdwg.mxu0
        %5318 = vmatprep.subr.bf16.mxu0 0
        %5319 = vmatpush1.bf16.msra.mxu0 %v4996
        %5320 = vmatprep.subr.bf16.mxu0 0
        %5321 = vmatpush1.bf16.msra.mxu0 %v4997
        %5322 = vmatprep.subr.bf16.mxu0 0
        %5323 = vmatpush1.bf16.msra.mxu0 %v4998
        %5324 = vmatprep.subr.bf16.mxu0 0
        %5325 = vmatpush1.bf16.msra.mxu0 %v4999
        %5326 = vmatprep.subr.bf16.mxu0 0
        %5327 = vmatpush1.bf16.msra.mxu0 %v5000
        %5328 = vmatprep.subr.bf16.mxu0 0
        %5329 = vmatpush1.bf16.msra.mxu0 %v5001
        %5330 = vmatprep.subr.bf16.mxu0 0
        %5331 = vmatpush1.bf16.msra.mxu0 %v5002
        %5332 = vmatprep.subr.bf16.mxu0 0
        %5333 = vmatpush1.bf16.msra.mxu0 %v5003
        %5334 = vmatprep.subr.bf16.mxu0 0
        %5335 = vmatpush1.bf16.msra.mxu0 %v5004
        %5336 = vmatprep.subr.bf16.mxu0 0
        %5337 = vmatpush1.bf16.msra.mxu0 %v5005
        %5338 = vmatprep.subr.bf16.mxu0 0
        %5339 = vmatpush1.bf16.msra.mxu0 %v5006
        %5340 = vmatprep.subr.bf16.mxu0 0
        %5341 = vmatpush1.bf16.msra.mxu0 %v5007
        %5342 = vmatprep.subr.bf16.mxu0 0
        %5343 = vmatpush1.bf16.msra.mxu0 %v5008
        %5344 = vmatprep.subr.bf16.mxu0 0
        %5345 = vmatpush1.bf16.msra.mxu0 %v5009
        %5346 = vmatprep.subr.bf16.mxu0 0
        %5347 = vmatpush1.bf16.msra.mxu0 %v5010
        %5348 = vmatprep.subr.bf16.mxu0 0
        %5349 = vmatpush1.bf16.msra.mxu0 %v5011
        %5350 = vmatprep.mubr.bf16.mxu0 %v4162
        %5351 = vmatmul.mubr.bf16.gmra.mrb[0].mxu0 %v4161
        %v5352 = vpop.f32.mrb[0].mxu0
        %v5353 = vadd.f32 %v5304, %v5352
        %v5354 = vpop.f32.mrb[0].mxu0
        %v5355 = vpop.f32.mrb[0].mxu0
        %v5356 = vadd.f32 %v5307, %v5355
        %v5357 = vpop.f32.mrb[0].mxu0
        %5358 = vmatprep.mubr.bf16.mxu0 %v4178
        %5359 = vmatmul.mubr.bf16.gmra.mrb[0].mxu0 %v4177
        %v5360 = vpop.f32.mrb[0].mxu0
        %v5361 = vadd.f32 %v5312, %v5360
        %v5362 = vpop.f32.mrb[0].mxu0
        %v5363 = vpop.f32.mrb[0].mxu0
        %v5364 = vadd.f32 %v5315, %v5363
        %v5365 = vpop.f32.mrb[0].mxu0
        %5366 = vdwg.mxu0
        %5367 = vmatprep.subr.bf16.mxu0 0
        %5368 = vmatpush1.bf16.msra.mxu0 %v5012
        %5369 = vmatprep.subr.bf16.mxu0 0
        %5370 = vmatpush1.bf16.msra.mxu0 %v5013
        %5371 = vmatprep.subr.bf16.mxu0 0
        %5372 = vmatpush1.bf16.msra.mxu0 %v5014
        %5373 = vmatprep.subr.bf16.mxu0 0
        %5374 = vmatpush1.bf16.msra.mxu0 %v5015
        %5375 = vmatprep.subr.bf16.mxu0 0
        %5376 = vmatpush1.bf16.msra.mxu0 %v5016
        %5377 = vmatprep.subr.bf16.mxu0 0
        %5378 = vmatpush1.bf16.msra.mxu0 %v5017
        %5379 = vmatprep.subr.bf16.mxu0 0
        %5380 = vmatpush1.bf16.msra.mxu0 %v5018
        %5381 = vmatprep.subr.bf16.mxu0 0
        %5382 = vmatpush1.bf16.msra.mxu0 %v5019
        %5383 = vmatprep.subr.bf16.mxu0 0
        %5384 = vmatpush1.bf16.msra.mxu0 %v5020
        %5385 = vmatprep.subr.bf16.mxu0 0
        %5386 = vmatpush1.bf16.msra.mxu0 %v5021
        %5387 = vmatprep.subr.bf16.mxu0 0
        %5388 = vmatpush1.bf16.msra.mxu0 %v5022
        %5389 = vmatprep.subr.bf16.mxu0 0
        %5390 = vmatpush1.bf16.msra.mxu0 %v5023
        %5391 = vmatprep.subr.bf16.mxu0 0
        %5392 = vmatpush1.bf16.msra.mxu0 %v5024
        %5393 = vmatprep.subr.bf16.mxu0 0
        %5394 = vmatpush1.bf16.msra.mxu0 %v5025
        %5395 = vmatprep.subr.bf16.mxu0 0
        %5396 = vmatpush1.bf16.msra.mxu0 %v5026
        %5397 = vmatprep.subr.bf16.mxu0 0
        %5398 = vmatpush1.bf16.msra.mxu0 %v5027
        %5399 = vmatprep.mubr.bf16.mxu0 %v4164
        %5400 = vmatmul.mubr.bf16.gmra.mrb[0].mxu0 %v4163
        %v5401 = vpop.f32.mrb[0].mxu0
        %v5402 = vadd.f32 %v5353, %v5401
        %v5403 = vpop.f32.mrb[0].mxu0
        %v5404 = vpop.f32.mrb[0].mxu0
        %v5405 = vadd.f32 %v5356, %v5404
        %v5406 = vpop.f32.mrb[0].mxu0
        %5407 = vmatprep.mubr.bf16.mxu0 %v4180
        %5408 = vmatmul.mubr.bf16.gmra.mrb[0].mxu0 %v4179
        %v5409 = vpop.f32.mrb[0].mxu0
        %v5410 = vadd.f32 %v5361, %v5409
        %v5411 = vpop.f32.mrb[0].mxu0
        %v5412 = vpop.f32.mrb[0].mxu0
        %v5413 = vadd.f32 %v5364, %v5412
        %v5414 = vpop.f32.mrb[0].mxu0
        %5415 = vdwg.mxu0
        %5416 = vmatprep.subr.bf16.mxu0 0
        %5417 = vmatpush1.bf16.msra.mxu0 %v5028
        %5418 = vmatprep.subr.bf16.mxu0 0
        %5419 = vmatpush1.bf16.msra.mxu0 %v5029
        %5420 = vmatprep.subr.bf16.mxu0 0
        %5421 = vmatpush1.bf16.msra.mxu0 %v5030
        %5422 = vmatprep.subr.bf16.mxu0 0
        %5423 = vmatpush1.bf16.msra.mxu0 %v5031
        %5424 = vmatprep.subr.bf16.mxu0 0
        %5425 = vmatpush1.bf16.msra.mxu0 %v5032
        %5426 = vmatprep.subr.bf16.mxu0 0
        %5427 = vmatpush1.bf16.msra.mxu0 %v5033
        %5428 = vmatprep.subr.bf16.mxu0 0
        %5429 = vmatpush1.bf16.msra.mxu0 %v5034
        %5430 = vmatprep.subr.bf16.mxu0 0
        %5431 = vmatpush1.bf16.msra.mxu0 %v5035
        %5432 = vmatprep.subr.bf16.mxu0 0
        %5433 = vmatpush1.bf16.msra.mxu0 %v5036
        %5434 = vmatprep.subr.bf16.mxu0 0
        %5435 = vmatpush1.bf16.msra.mxu0 %v5037
        %5436 = vmatprep.subr.bf16.mxu0 0
        %5437 = vmatpush1.bf16.msra.mxu0 %v5038
        %5438 = vmatprep.subr.bf16.mxu0 0
        %5439 = vmatpush1.bf16.msra.mxu0 %v5039
        %5440 = vmatprep.subr.bf16.mxu0 0
        %5441 = vmatpush1.bf16.msra.mxu0 %v5040
        %5442 = vmatprep.subr.bf16.mxu0 0
        %5443 = vmatpush1.bf16.msra.mxu0 %v5041
        %5444 = vmatprep.subr.bf16.mxu0 0
        %5445 = vmatpush1.bf16.msra.mxu0 %v5042
        %5446 = vmatprep.subr.bf16.mxu0 0
        %5447 = vmatpush1.bf16.msra.mxu0 %v5043
        %5448 = vmatprep.mubr.bf16.mxu0 %v4166
        %5449 = vmatmul.mubr.bf16.gmra.mrb[0].mxu0 %v4165
        %v5450 = vpop.f32.mrb[0].mxu0
        %v5451 = vadd.f32 %v5402, %v5450
        %v5452 = vpop.f32.mrb[0].mxu0
        %v5453 = vpop.f32.mrb[0].mxu0
        %v5454 = vadd.f32 %v5405, %v5453
        %v5455 = vpop.f32.mrb[0].mxu0
        %5456 = vmatprep.mubr.bf16.mxu0 %v4182
        %5457 = vmatmul.mubr.bf16.gmra.mrb[0].mxu0 %v4181
        %v5458 = vpop.f32.mrb[0].mxu0
        %v5459 = vadd.f32 %v5410, %v5458
        %v5460 = vpop.f32.mrb[0].mxu0
        %v5461 = vpop.f32.mrb[0].mxu0
        %v5462 = vadd.f32 %v5413, %v5461
        %v5463 = vpop.f32.mrb[0].mxu0
        %5464 = vdwg.mxu0
        %5465 = vmatprep.subr.bf16.mxu0 0
        %5466 = vmatpush1.bf16.msra.mxu0 %v5044
        %5467 = vmatprep.subr.bf16.mxu0 0
        %5468 = vmatpush1.bf16.msra.mxu0 %v5045
        %5469 = vmatprep.subr.bf16.mxu0 0
        %5470 = vmatpush1.bf16.msra.mxu0 %v5046
        %5471 = vmatprep.subr.bf16.mxu0 0
        %5472 = vmatpush1.bf16.msra.mxu0 %v5047
        %5473 = vmatprep.subr.bf16.mxu0 0
        %5474 = vmatpush1.bf16.msra.mxu0 %v5048
        %5475 = vmatprep.subr.bf16.mxu0 0
        %5476 = vmatpush1.bf16.msra.mxu0 %v5049
        %5477 = vmatprep.subr.bf16.mxu0 0
        %5478 = vmatpush1.bf16.msra.mxu0 %v5050
        %5479 = vmatprep.subr.bf16.mxu0 0
        %5480 = vmatpush1.bf16.msra.mxu0 %v5051
        %5481 = vmatprep.subr.bf16.mxu0 0
        %5482 = vmatpush1.bf16.msra.mxu0 %v5052
        %5483 = vmatprep.subr.bf16.mxu0 0
        %5484 = vmatpush1.bf16.msra.mxu0 %v5053
        %5485 = vmatprep.subr.bf16.mxu0 0
        %5486 = vmatpush1.bf16.msra.mxu0 %v5054
        %5487 = vmatprep.subr.bf16.mxu0 0
        %5488 = vmatpush1.bf16.msra.mxu0 %v5055
        %5489 = vmatprep.subr.bf16.mxu0 0
        %5490 = vmatpush1.bf16.msra.mxu0 %v5056
        %5491 = vmatprep.subr.bf16.mxu0 0
        %5492 = vmatpush1.bf16.msra.mxu0 %v5057
        %5493 = vmatprep.subr.bf16.mxu0 0
        %5494 = vmatpush1.bf16.msra.mxu0 %v5058
        %5495 = vmatprep.subr.bf16.mxu0 0
        %5496 = vmatpush1.bf16.msra.mxu0 %v5059
        %5497 = vmatprep.mubr.bf16.mxu0 %v4168
        %5498 = vmatmul.mubr.bf16.gmra.mrb[0].mxu0 %v4167
        %v5499 = vpop.f32.mrb[0].mxu0
        %v5500 = vadd.f32 %v5451, %v5499
        %v5501 = vpop.f32.mrb[0].mxu0
        %v5502 = vpop.f32.mrb[0].mxu0
        %v5503 = vadd.f32 %v5454, %v5502
        %v5504 = vpop.f32.mrb[0].mxu0
        %5505 = vmatprep.mubr.bf16.mxu0 %v4184
        %5506 = vmatmul.mubr.bf16.gmra.mrb[0].mxu0 %v4183
        %v5507 = vpop.f32.mrb[0].mxu0
        %v5508 = vadd.f32 %v5459, %v5507
        %v5509 = vpop.f32.mrb[0].mxu0
        %v5510 = vpop.f32.mrb[0].mxu0
        %v5511 = vadd.f32 %v5462, %v5510
        %v5512 = vpop.f32.mrb[0].mxu0
        %5513 = vdwg.mxu0
        %5514 = vmatprep.subr.bf16.mxu0 0
        %5515 = vmatpush1.bf16.msra.mxu0 %v5060
        %5516 = vmatprep.subr.bf16.mxu0 0
        %5517 = vmatpush1.bf16.msra.mxu0 %v5061
        %5518 = vmatprep.subr.bf16.mxu0 0
        %5519 = vmatpush1.bf16.msra.mxu0 %v5062
        %5520 = vmatprep.subr.bf16.mxu0 0
        %5521 = vmatpush1.bf16.msra.mxu0 %v5063
        %5522 = vmatprep.subr.bf16.mxu0 0
        %5523 = vmatpush1.bf16.msra.mxu0 %v5064
        %5524 = vmatprep.subr.bf16.mxu0 0
        %5525 = vmatpush1.bf16.msra.mxu0 %v5065
        %5526 = vmatprep.subr.bf16.mxu0 0
        %5527 = vmatpush1.bf16.msra.mxu0 %v5066
        %5528 = vmatprep.subr.bf16.mxu0 0
        %5529 = vmatpush1.bf16.msra.mxu0 %v5067
        %5530 = vmatprep.subr.bf16.mxu0 0
        %5531 = vmatpush1.bf16.msra.mxu0 %v5068
        %5532 = vmatprep.subr.bf16.mxu0 0
        %5533 = vmatpush1.bf16.msra.mxu0 %v5069
        %5534 = vmatprep.subr.bf16.mxu0 0
        %5535 = vmatpush1.bf16.msra.mxu0 %v5070
        %5536 = vmatprep.subr.bf16.mxu0 0
        %5537 = vmatpush1.bf16.msra.mxu0 %v5071
        %5538 = vmatprep.subr.bf16.mxu0 0
        %5539 = vmatpush1.bf16.msra.mxu0 %v5072
        %5540 = vmatprep.subr.bf16.mxu0 0
        %5541 = vmatpush1.bf16.msra.mxu0 %v5073
        %5542 = vmatprep.subr.bf16.mxu0 0
        %5543 = vmatpush1.bf16.msra.mxu0 %v5074
        %5544 = vmatprep.subr.bf16.mxu0 0
        %5545 = vmatpush1.bf16.msra.mxu0 %v5075
        %5546 = vmatprep.mubr.bf16.mxu0 %v4170
        %5547 = vmatmul.mubr.bf16.gmra.mrb[0].mxu0 %v4169
        %v5548 = vpop.f32.mrb[0].mxu0
        %v5549 = vadd.f32 %v5500, %v5548
        %v5550 = vpop.f32.mrb[0].mxu0
        %v5551 = vpop.f32.mrb[0].mxu0
        %v5552 = vadd.f32 %v5503, %v5551
        %v5553 = vpop.f32.mrb[0].mxu0
        %5554 = vmatprep.mubr.bf16.mxu0 %v4186
        %5555 = vmatmul.mubr.bf16.gmra.mrb[0].mxu0 %v4185
        %v5556 = vpop.f32.mrb[0].mxu0
        %v5557 = vadd.f32 %v5508, %v5556
        %v5558 = vpop.f32.mrb[0].mxu0
        %v5559 = vpop.f32.mrb[0].mxu0
        %v5560 = vadd.f32 %v5511, %v5559
        %v5561 = vpop.f32.mrb[0].mxu0
        %5562 = vdwg.mxu0
        %5563 = vmatprep.subr.bf16.mxu0 0
        %5564 = vmatpush1.bf16.msra.mxu0 %v5076
        %5565 = vmatprep.subr.bf16.mxu0 0
        %5566 = vmatpush1.bf16.msra.mxu0 %v5077
        %5567 = vmatprep.subr.bf16.mxu0 0
        %5568 = vmatpush1.bf16.msra.mxu0 %v5078
        %5569 = vmatprep.subr.bf16.mxu0 0
        %5570 = vmatpush1.bf16.msra.mxu0 %v5079
        %5571 = vmatprep.subr.bf16.mxu0 0
        %5572 = vmatpush1.bf16.msra.mxu0 %v5080
        %5573 = vmatprep.subr.bf16.mxu0 0
        %5574 = vmatpush1.bf16.msra.mxu0 %v5081
        %5575 = vmatprep.subr.bf16.mxu0 0
        %5576 = vmatpush1.bf16.msra.mxu0 %v5082
        %5577 = vmatprep.subr.bf16.mxu0 0
        %5578 = vmatpush1.bf16.msra.mxu0 %v5083
        %5579 = vmatprep.subr.bf16.mxu0 0
        %5580 = vmatpush1.bf16.msra.mxu0 %v5084
        %5581 = vmatprep.subr.bf16.mxu0 0
        %5582 = vmatpush1.bf16.msra.mxu0 %v5085
        %5583 = vmatprep.subr.bf16.mxu0 0
        %5584 = vmatpush1.bf16.msra.mxu0 %v5086
        %5585 = vmatprep.subr.bf16.mxu0 0
        %5586 = vmatpush1.bf16.msra.mxu0 %v5087
        %5587 = vmatprep.subr.bf16.mxu0 0
        %5588 = vmatpush1.bf16.msra.mxu0 %v5088
        %5589 = vmatprep.subr.bf16.mxu0 0
        %5590 = vmatpush1.bf16.msra.mxu0 %v5089
        %5591 = vmatprep.subr.bf16.mxu0 0
        %5592 = vmatpush1.bf16.msra.mxu0 %v5090
        %5593 = vmatprep.subr.bf16.mxu0 0
        %5594 = vmatpush1.bf16.msra.mxu0 %v5091
        %5595 = vmatprep.mubr.bf16.mxu0 %v4172
        %5596 = vmatmul.mubr.bf16.gmra.mrb[0].mxu0 %v4171
        %v5597 = vpop.f32.mrb[0].mxu0
        %v5598 = vadd.f32 %v5549, %v5597
        %v5599 = vpop.f32.mrb[0].mxu0
        %v5600 = vpop.f32.mrb[0].mxu0
        %v5601 = vadd.f32 %v5552, %v5600
        %v5602 = vpop.f32.mrb[0].mxu0
        %5603 = vmatprep.mubr.bf16.mxu0 %v4188
        %5604 = vmatmul.mubr.bf16.gmra.mrb[0].mxu0 %v4187
        %v5605 = vpop.f32.mrb[0].mxu0
        %v5606 = vadd.f32 %v5557, %v5605
        %v5607 = vpop.f32.mrb[0].mxu0
        %v5608 = vpop.f32.mrb[0].mxu0
        %v5609 = vadd.f32 %v5560, %v5608
        %v5610 = vpop.f32.mrb[0].mxu0
        %5611 = vdwg.mxu0
        %v5612 = vadd.f32 %v5598, %v3381
        %v5613 = vadd.f32 %v5601, %v3382
        %v5614 = vadd.f32 %v5606, %v3383
        %v5615 = vadd.f32 %v5609, %v3384
        %v5616 = vsel %vm471, %v5612, 0.0
        %5617 = vadd.xlane.f32.xlu0 %v5616
        %v5618 = vpop.xlane.xlu0 %5617
        %v5619 = vsel %vm471, %v5613, 0.0
        %5620 = vadd.xlane.f32.xlu0 %v5619
        %v5621 = vpop.xlane.xlu0 %5620
        %v5622 = vsel %vm471, %v5614, 0.0
        %5623 = vadd.xlane.f32.xlu0 %v5622
        %v5624 = vpop.xlane.xlu0 %5623
        %v5625 = vsel %vm471, %v5615, 0.0
        %5626 = vadd.xlane.f32.xlu0 %v5625
        %v5627 = vpop.xlane.xlu0 %5626
        %v5628 = vmul.f32 %v5618, %v3322
        %v5629 = vmul.f32 %v5621, %v3322
        %v5630 = vmul.f32 %v5624, %v3322
        %v5631 = vmul.f32 %v5627, %v3322
        %v5632 = vsub.f32 %v5612, %v5628
        %v5633 = vsub.f32 %v5613, %v5629
        %v5634 = vsub.f32 %v5614, %v5630
        %v5635 = vsub.f32 %v5615, %v5631
        %v5636 = vmul.f32 %v5632, %v5632
        %v5637 = vmul.f32 %v5633, %v5633
        %v5638 = vmul.f32 %v5634, %v5634
        %v5639 = vmul.f32 %v5635, %v5635
        %v5640 = vsel %vm471, %v5636, 0.0
        %5641 = vadd.xlane.f32.xlu0 %v5640
        %v5642 = vpop.xlane.xlu0 %5641
        %v5643 = vsel %vm471, %v5637, 0.0
        %5644 = vadd.xlane.f32.xlu0 %v5643
        %v5645 = vpop.xlane.xlu0 %5644
        %v5646 = vsel %vm471, %v5638, 0.0
        %5647 = vadd.xlane.f32.xlu0 %v5646
        %v5648 = vpop.xlane.xlu0 %5647
        %v5649 = vsel %vm471, %v5639, 0.0
        %5650 = vadd.xlane.f32.xlu0 %v5649
        %v5651 = vpop.xlane.xlu0 %5650
        %v5652 = vmul.f32 %v5642, %v3322
        %v5653 = vmul.f32 %v5645, %v3322
        %v5654 = vmul.f32 %v5648, %v3322
        %v5655 = vmul.f32 %v5651, %v3322
        %v5656 = vadd.f32 %v5652, 1e-05
        %v5657 = vadd.f32 %v5653, 1e-05
        %v5658 = vadd.f32 %v5654, 1e-05
        %v5659 = vadd.f32 %v5655, 1e-05
        %v5660 = vrsqrt.pop %v5656
        %v5661 = vrsqrt.pop %v5657
        %v5662 = vrsqrt.pop %v5658
        %v5663 = vrsqrt.pop %v5659
        %v5664 = vmul.f32 %v5632, %v5660
        %v5665 = vmul.f32 %v5633, %v5661
        %v5666 = vmul.f32 %v5634, %v5662
        %v5667 = vmul.f32 %v5635, %v5663
        %v5668 = vld [vmem:[%s11] sm:$0x1]
        %v5670 = vlaneseq
        %v5671 = vshrl.u32 %v5670, 7
        %v5672 = vsub.s32 0, %v5671
        %v5673 = vrot.slane %v5668, %v5672
        %v5675 = vmul.f32 %v5664, %v5673
        %v5676 = vmul.f32 %v5665, %v5673
        %v5677 = vmul.f32 %v5666, %v5673
        %v5678 = vmul.f32 %v5667, %v5673
        %v5679 = vld [vmem:[%s12] sm:$0x1]
        %v5681 = vlaneseq
        %v5682 = vshrl.u32 %v5681, 7
        %v5683 = vsub.s32 0, %v5682
        %v5684 = vrot.slane %v5679, %v5683
        %v5686 = vadd.f32 %v5675, %v5684
        %v5687 = vadd.f32 %v5676, %v5684
        %v5688 = vadd.f32 %v5677, %v5684
        %v5689 = vadd.f32 %v5678, %v5684
        %5691 = vrot.lane.b32.xlu0 %v5687, 32
        %v5692 = vpop.permute.xlu0 %5691
        %5695 = vrot.lane.b32.xlu0 %v5688, 64
        %v5696 = vpop.permute.xlu0 %5695
        %5699 = vrot.lane.b32.xlu0 %v5689, 96
        %v5700 = vpop.permute.xlu0 %5699
        %v5702 = vsel %vm471, %v5686, %v5692
        %vm5703 = vcmask 523264
        %v5704 = vsel %vm5703, %v5702, %v5696
        %vm5705 = vcmask 785408
        %v5706 = vsel %vm5705, %v5704, %v5700
        %5707 = vst [vmem:[%s434] sm:$0xff] %v5706
        %s5708 = sand.u32 %s313, 1
        %s5709 = scalar_lea.sflag [#allocation3], %s5708
        %s5710 = sand.u32 %s313, 1
        %s5711 = smul.addr %s5710, 8
        %s5712 = scalar_lea.vmem [#allocation2], %s5711
        // Predicated region
        $region73: #{tpu_custom_call.1} parent=71 // pred_check
          %p5713 = pneg %p323
        $region74: #{tpu_custom_call.1} parent=71 // pred_check_branch
          %5715 = sbr.rel (%p5713) target = $region76
        $region75: #{tpu_custom_call.1} parent=71 // pred_region
          %s5717 = ssub.s32 128, 128
          %5718 = vsyncadd %s5709, %s5717
          %s5719 = smul.addr %s27, 128
          %s5720 = scalar_lea.hbm %s13, %s5719
          %s5722 = sshll.u32 %s5712, 4
          %s5723 = int_to_ptr.vmem [resolvable:$true] %s5722
          %5725 = dma.vmem_to_hbm [thread:$0]  %s5723, 128, %s5720, %s5709
        $region76: #{tpu_custom_call.1} parent=71 // pred_fallthru
          _
      $region72: #{tpu_custom_call.1} parent=5 // pred_fallthru
        _
      %p5726 = scmp.le.s32.totalorder 2, %s22
      // Predicated region
      $region77: #{tpu_custom_call.1} parent=5 // pred_check
        %p5727 = pneg %p5726
      $region78: #{tpu_custom_call.1} parent=5 // pred_check_branch
        %5729 = sbr.rel (%p5727) target = $region80
      $region79: #{tpu_custom_call.1} parent=5 // pred_region
        %s5730 = ssub.s32 %s22, 2
        // Predicated region
        $region81: #{tpu_custom_call.1} parent=79 // pred_check
          %p5731 = pneg %p329
        $region82: #{tpu_custom_call.1} parent=79 // pred_check_branch
          %5733 = sbr.rel (%p5731) target = $region84
        $region83: #{tpu_custom_call.1} parent=79 // pred_region
          %s5734 = sand.u32 %s314, 1
          %s5735 = scalar_lea.sflag [#allocation3], %s5734
          %s5736 = sand.u32 %s314, 1
          %s5737 = smul.addr %s5736, 8
          %s5738 = scalar_lea.vmem [#allocation2], %s5737
          %5739 = dma.done %s5735, 128
        $region84: #{tpu_custom_call.1} parent=79 // pred_fallthru
          _
      $region80: #{tpu_custom_call.1} parent=5 // pred_fallthru
        _
    $region6: #{tpu_custom_call.1} parent=1 // loop_footer
      %s26 = sadd.s32 1, %s22
    $region7: #{tpu_custom_call.1} parent=1 // loop_footer_branch
      %21 = sbr.rel target = $region3
    $region8: #{tpu_custom_call.1} parent=1 // loop_exit
      _
    %5740 = vsyncpa [#allocation3], 1
    %s5741 = scalar_lea.sflag [#allocation3], 1
    %5742 = vsyncpa %s5741, 1

</llo_original>
